<compile_context>
chip_gen: v7x
topology: tpu7x:2x2x1
jax: 0.10.0
libtpu: 0.0.40
codegen_flags: <defaults>
</compile_context>

<pallas_src>
import jax
import jax.numpy as jnp
import numpy as np
from jax import lax
from jax.experimental import pallas as pl
from jax.experimental.pallas import tpu as pltpu


# ---------------------------------------------------------------------------
# Fused kernel: input projection + BiLSTM recurrence + dot-attention + FC head
# PyTorch LSTM gate order: i, f, g, o.
# ---------------------------------------------------------------------------
def bilstm_attn_kernel(x_ref, wih_ref, bih_ref, whh_f_ref, whh_b_ref, task_ref,
                       w1_ref, b1_ref, w2_ref, b2_ref,
                       out_ref,
                       gx_ref, lo_ref):
    T, Bp, H2 = lo_ref.shape
    H = H2 // 2
    G = 4 * H
    NE = task_ref.shape[1]

    # ---- hoisted input projection: one MXU matmul (T*Bp, E) @ (E, 8H) ------
    gx = (jnp.dot(x_ref[...], wih_ref[...], preferred_element_type=jnp.float32)
          + bih_ref[...])                                    # (T*Bp, 8H)
    gx_ref[...] = gx.reshape(T, Bp, 8 * H)                   # layout-preserving

    whh_f = whh_f_ref[...]                                   # (H, 4H)
    whh_b = whh_b_ref[...]                                   # (H, 4H)

    def gates_to_hc(gates, c):
        # One sigmoid over the whole (Bp, 4H) slab covers i/f/o in one EUP
        # pass; tanh only on the g columns.
        sg = jax.nn.sigmoid(gates)
        i = sg[:, 0 * H:1 * H]
        f = sg[:, 1 * H:2 * H]
        o = sg[:, 3 * H:4 * H]
        g = jnp.tanh(gates[:, 2 * H:3 * H])
        c_new = f * c + i * g
        h_new = o * jnp.tanh(c_new)
        return h_new, c_new

    def step(t, carry):
        h_f, c_f, h_b, c_b = carry
        rt = T - 1 - t
        gh_f = jnp.dot(h_f, whh_f, preferred_element_type=jnp.float32)  # (Bp,4H)
        gh_b = jnp.dot(h_b, whh_b, preferred_element_type=jnp.float32)  # (Bp,4H)
        gx_t = gx_ref[t]                                     # (Bp, 8H) aligned
        gx_r = gx_ref[rt]
        h_f, c_f = gates_to_hc(gx_t[:, :G] + gh_f, c_f)
        h_b, c_b = gates_to_hc(gx_r[:, G:] + gh_b, c_b)
        lo_ref[t, :, :H] = h_f                               # forward half
        lo_ref[rt, :, H:] = h_b                              # backward half (time-aligned)
        return h_f, c_f, h_b, c_b

    z0 = jnp.zeros((Bp, H), jnp.float32)
    lax.fori_loop(0, T, step, (z0, z0, z0, z0),
                  unroll=True if T <= 16 else 8)

    # ---- dot-attention over task vectors + FC head (batched over b) --------
    lo3 = lo_ref[...]                                        # (T, Bp, 2H)
    lo2 = lo3.reshape(T * Bp, H2)                            # layout-preserving
    scores = jnp.dot(lo2, task_ref[...],
                     preferred_element_type=jnp.float32)     # (T*Bp, NE)
    scores = scores.reshape(T, Bp, NE)
    scores = scores - jnp.max(scores, axis=0, keepdims=True)
    e = jnp.exp(scores)
    attn = e / jnp.sum(e, axis=0, keepdims=True)             # (T, Bp, NE) softmax over T

    # ctx[ne*Bp + b, :] = sum_t attn[t, b, ne] * lo[t, b, :]   (tiny VPU work)
    ctx = jnp.concatenate(
        [jnp.sum(attn[:, :, ne:ne + 1] * lo3, axis=0) for ne in range(NE)],
        axis=0)                                              # (NE*Bp, 2H)

    h1 = jnp.dot(ctx, w1_ref[...], preferred_element_type=jnp.float32) + b1_ref[...]
    y = jnp.dot(h1, w2_ref[...], preferred_element_type=jnp.float32) + b2_ref[...]
    y = y - jnp.max(y, axis=-1, keepdims=True)
    out_ref[...] = y - jnp.log(jnp.sum(jnp.exp(y), axis=-1, keepdims=True))


# ---------------------------------------------------------------------------
# Wrapper
# ---------------------------------------------------------------------------
def bilstm_sentiment_forward(sentence, params):
    emb = params['embedding'][sentence]              # (B, T, E) embedding glue
    x = jnp.transpose(emb, (1, 0, 2))                # (T, B, E) time-major
    T, B, E = x.shape
    H = params['whh_f'].shape[0]
    NE = params['task_vecs'].shape[0]
    L = params['fc2_w'].shape[1]

    # Pad the batch up to a full sublane group (8): the recurrence is
    # latency-bound, so padded rows cost nothing and keep tiles aligned.
    Bp = max(8, ((B + 7) // 8) * 8)
    if Bp != B:
        x = jnp.pad(x, ((0, 0), (0, Bp - B), (0, 0)))

    # Parameter packing (tiny, one-time glue).
    # NOTE: PyTorch nn.LSTM has both b_ih and b_hh; when porting trained
    # weights pass b_f = b_ih_f + b_hh_f (and likewise for backward).
    x2d = x.reshape(T * Bp, E)
    wih_all = jnp.concatenate([params['wih_f'], params['wih_b']], axis=1)   # (E, 8H)
    b_all = jnp.concatenate([params['b_f'], params['b_b']], axis=1)         # (1, 8H)
    task_t = params['task_vecs'].reshape(NE, 2 * H).T                       # (2H, NE)

    # Resident VMEM footprint (operands + scratch) with generous headroom.
    vmem_bytes = 4 * (T * Bp * (E + 8 * H + 2 * H)
                      + E * 8 * H + 8 * H + 2 * H * NE
                      + 2 * H * 4 * H + 2 * H * H + H + H * L + L
                      + Bp * NE * L) + (16 << 20)

    out2d = pl.pallas_call(
        bilstm_attn_kernel,
        out_shape=jax.ShapeDtypeStruct((NE * Bp, L), jnp.float32),
        scratch_shapes=[
            pltpu.VMEM((T, Bp, 8 * H), jnp.float32),   # hoisted input gates
            pltpu.VMEM((T, Bp, 2 * H), jnp.float32),   # fwd|bwd hidden states
        ],
        compiler_params=pltpu.CompilerParams(
            vmem_limit_bytes=min(vmem_bytes, 100 * 1024 * 1024)),
    )(x2d, wih_all, b_all, params['whh_f'], params['whh_b'], task_t,
      params['fc1_w'], params['fc1_b'], params['fc2_w'], params['fc2_b'])

    return out2d.reshape(NE, Bp, L)[:, :B, :]        # (NE, B, L)


# ---------------------------------------------------------------------------
# Pure-JAX reference (mirrors the PyTorch forward exactly, attn_method='dot')
# ---------------------------------------------------------------------------
def reference_forward(sentence, params):
    emb = params['embedding'][sentence]
    x = jnp.transpose(emb, (1, 0, 2))                # (T, B, E)
    T, B, E = x.shape
    H = params['whh_f'].shape[0]

    def cell(carry, x_t, wih, whh, b):
        h, c = carry
        gates = x_t @ wih + h @ whh + b
        i = jax.nn.sigmoid(gates[:, :H])
        f = jax.nn.sigmoid(gates[:, H:2 * H])
        g = jnp.tanh(gates[:, 2 * H:3 * H])
        o = jax.nn.sigmoid(gates[:, 3 * H:])
        c = f * c + i * g
        h = o * jnp.tanh(c)
        return (h, c), h

    init = (jnp.zeros((B, H), jnp.float32), jnp.zeros((B, H), jnp.float32))
    _, hs_f = lax.scan(
        lambda c_, xt: cell(c_, xt, params['wih_f'], params['whh_f'], params['b_f']),
        init, x)
    _, hs_b = lax.scan(
        lambda c_, xt: cell(c_, xt, params['wih_b'], params['whh_b'], params['b_b']),
        init, x[::-1])
    hs_b = hs_b[::-1]
    lstm_out = jnp.concatenate([hs_f, hs_b], axis=-1)          # (T, B, 2H)

    task = params['task_vecs']                                 # (NE, 1, 1, 2H)
    scores = jnp.sum(task * lstm_out[None], axis=-1)           # (NE, T, B)
    attnw = jax.nn.softmax(jnp.transpose(scores, (0, 2, 1)), axis=-1)  # (NE, B, T)
    ctx = jnp.einsum('ebt,tbd->ebd', attnw, lstm_out)          # (NE, B, 2H)
    h1 = ctx @ params['fc1_w'] + params['fc1_b']
    y = h1 @ params['fc2_w'] + params['fc2_b']
    return jax.nn.log_softmax(y, axis=-1)


if __name__ == "__main__":
    B, T, E, H, V, L, NE = 2, 8, 16, 32, 50, 3, 4
    key = jax.random.PRNGKey(0)
    ks = jax.random.split(key, 13)
    s = 0.1
    params = {
        'embedding': jax.random.normal(ks[0], (V, E), jnp.float32) * s,
        'wih_f': jax.random.normal(ks[1], (E, 4 * H), jnp.float32) * s,
        'whh_f': jax.random.normal(ks[2], (H, 4 * H), jnp.float32) * s,
        'b_f':   jax.random.normal(ks[3], (1, 4 * H), jnp.float32) * s,
        'wih_b': jax.random.normal(ks[4], (E, 4 * H), jnp.float32) * s,
        'whh_b': jax.random.normal(ks[5], (H, 4 * H), jnp.float32) * s,
        'b_b':   jax.random.normal(ks[6], (1, 4 * H), jnp.float32) * s,
        'task_vecs': jax.random.normal(ks[7], (NE, 1, 1, 2 * H), jnp.float32),
        'fc1_w': jax.random.normal(ks[8], (2 * H, H), jnp.float32) * s,
        'fc1_b': jax.random.normal(ks[9], (1, H), jnp.float32) * s,
        'fc2_w': jax.random.normal(ks[10], (H, L), jnp.float32) * s,
        'fc2_b': jax.random.normal(ks[11], (1, L), jnp.float32) * s,
    }
    sentence = jax.random.randint(ks[12], (B, T), 0, V)

    out = bilstm_sentiment_forward(sentence, params)
    out = jax.block_until_ready(out)

    ref = reference_forward(sentence, params)
    np.testing.assert_allclose(np.asarray(out), np.asarray(ref), rtol=2e-2, atol=2e-2)
    print("KERNEL_OK")
</pallas_src>

<mosaic_0001>
module attributes {stable_mosaic.version = 11 : i64} {
  func.func @bilstm_attn_kernel(%arg0: memref<64x16xf32, #tpu.memory_space<vmem>>, %arg1: memref<16x256xf32, #tpu.memory_space<vmem>>, %arg2: memref<1x256xf32, #tpu.memory_space<vmem>>, %arg3: memref<32x128xf32, #tpu.memory_space<vmem>>, %arg4: memref<32x128xf32, #tpu.memory_space<vmem>>, %arg5: memref<64x4xf32, #tpu.memory_space<vmem>>, %arg6: memref<64x32xf32, #tpu.memory_space<vmem>>, %arg7: memref<1x32xf32, #tpu.memory_space<vmem>>, %arg8: memref<32x3xf32, #tpu.memory_space<vmem>>, %arg9: memref<1x3xf32, #tpu.memory_space<vmem>>, %arg10: memref<32x3xf32, #tpu.memory_space<vmem>>, %arg11: memref<8x8x256xf32, #tpu.memory_space<vmem>>, %arg12: memref<8x8x64xf32, #tpu.memory_space<vmem>>) attributes {dimension_semantics = [], scalar_prefetch = 0 : i64, scratch_operands = 2 : i64, tpu.core_type = #tpu.core_type<tc>} {
    %c0 = arith.constant 0 : index
    %c0_0 = arith.constant 0 : index
    %0 = vector.load %arg0[%c0, %c0_0] : memref<64x16xf32, #tpu.memory_space<vmem>>, vector<64x16xf32>
    %c0_1 = arith.constant 0 : index
    %c0_2 = arith.constant 0 : index
    %1 = vector.load %arg1[%c0_1, %c0_2] : memref<16x256xf32, #tpu.memory_space<vmem>>, vector<16x256xf32>
    %cst = arith.constant dense<0.000000e+00> : vector<64x256xf32>
    %2 = tpu.matmul %0, %1, %cst {dimension_numbers = #tpu.dot_dimension_numbers<[1], [0], [0], [1], [0, 0, 1, 1], [], []>} : vector<64x16xf32>, vector<16x256xf32>, vector<64x256xf32> -> vector<64x256xf32>
    %c0_3 = arith.constant 0 : index
    %c0_4 = arith.constant 0 : index
    %3 = vector.load %arg2[%c0_3, %c0_4] : memref<1x256xf32, #tpu.memory_space<vmem>>, vector<1x256xf32>
    %4 = vector.broadcast %3 : vector<1x256xf32> to vector<64x256xf32>
    %5 = arith.addf %2, %4 : vector<64x256xf32>
    %6 = vector.shape_cast %5 : vector<64x256xf32> to vector<8x8x256xf32>
    %c0_5 = arith.constant 0 : index
    %c0_6 = arith.constant 0 : index
    %c0_7 = arith.constant 0 : index
    %7 = vector.load %arg11[%c0_5, %c0_6, %c0_7] : memref<8x8x256xf32, #tpu.memory_space<vmem>>, vector<8x8x256xf32>
    tpu.vector_store %arg11[%c0_5, %c0_6, %c0_7], %6 {strides = array<i32>} : memref<8x8x256xf32, #tpu.memory_space<vmem>>, vector<8x8x256xf32>,
    %c0_8 = arith.constant 0 : index
    %c0_9 = arith.constant 0 : index
    %8 = vector.load %arg3[%c0_8, %c0_9] : memref<32x128xf32, #tpu.memory_space<vmem>>, vector<32x128xf32>
    %c0_10 = arith.constant 0 : index
    %c0_11 = arith.constant 0 : index
    %9 = vector.load %arg4[%c0_10, %c0_11] : memref<32x128xf32, #tpu.memory_space<vmem>>, vector<32x128xf32>
    %cst_12 = arith.constant 0.000000e+00 : f32
    %10 = vector.broadcast %cst_12 : f32 to vector<8x32xf32>
    %c0_i32 = arith.constant 0 : i32
    %c7_i32 = arith.constant 7 : i32
    %11 = arith.subi %c7_i32, %c0_i32 : i32
    %cst_13 = arith.constant dense<0.000000e+00> : vector<8x128xf32>
    %12 = tpu.matmul %10, %8, %cst_13 {dimension_numbers = #tpu.dot_dimension_numbers<[1], [0], [0], [1], [0, 0, 1, 1], [], []>} : vector<8x32xf32>, vector<32x128xf32>, vector<8x128xf32> -> vector<8x128xf32>
    %cst_14 = arith.constant dense<0.000000e+00> : vector<8x128xf32>
    %13 = tpu.matmul %10, %9, %cst_14 {dimension_numbers = #tpu.dot_dimension_numbers<[1], [0], [0], [1], [0, 0, 1, 1], [], []>} : vector<8x32xf32>, vector<32x128xf32>, vector<8x128xf32> -> vector<8x128xf32>
    %14 = arith.index_cast %c0_i32 : i32 to index
    %c0_15 = arith.constant 0 : index
    %c0_16 = arith.constant 0 : index
    %15 = vector.load %arg11[%14, %c0_15, %c0_16] : memref<8x8x256xf32, #tpu.memory_space<vmem>>, vector<1x8x256xf32>
    %16 = vector.shape_cast %15 : vector<1x8x256xf32> to vector<8x256xf32>
    %17 = arith.index_cast %11 : i32 to index
    %c0_17 = arith.constant 0 : index
    %c0_18 = arith.constant 0 : index
    %18 = vector.load %arg11[%17, %c0_17, %c0_18] : memref<8x8x256xf32, #tpu.memory_space<vmem>>, vector<1x8x256xf32>
    %19 = vector.shape_cast %18 : vector<1x8x256xf32> to vector<8x256xf32>
    %20 = vector.extract_strided_slice %16 {offsets = [0, 0], sizes = [8, 128], strides = [1, 1]} : vector<8x256xf32> to vector<8x128xf32>
    %21 = arith.addf %20, %12 : vector<8x128xf32>
    %22 = arith.negf %21 : vector<8x128xf32>
    %23 = math.exp %22 : vector<8x128xf32>
    %cst_19 = arith.constant 1.000000e+00 : f32
    %24 = vector.broadcast %cst_19 : f32 to vector<8x128xf32>
    %25 = arith.addf %24, %23 : vector<8x128xf32>
    %26 = arith.divf %24, %25 : vector<8x128xf32>
    %27 = vector.extract_strided_slice %26 {offsets = [0, 0], sizes = [8, 32], strides = [1, 1]} : vector<8x128xf32> to vector<8x32xf32>
    %28 = vector.extract_strided_slice %26 {offsets = [0, 32], sizes = [8, 32], strides = [1, 1]} : vector<8x128xf32> to vector<8x32xf32>
    %29 = vector.extract_strided_slice %26 {offsets = [0, 96], sizes = [8, 32], strides = [1, 1]} : vector<8x128xf32> to vector<8x32xf32>
    %30 = vector.extract_strided_slice %21 {offsets = [0, 64], sizes = [8, 32], strides = [1, 1]} : vector<8x128xf32> to vector<8x32xf32>
    %31 = math.tanh %30 : vector<8x32xf32>
    %32 = arith.mulf %28, %10 : vector<8x32xf32>
    %33 = arith.mulf %27, %31 : vector<8x32xf32>
    %34 = arith.addf %32, %33 : vector<8x32xf32>
    %35 = math.tanh %34 : vector<8x32xf32>
    %36 = arith.mulf %29, %35 : vector<8x32xf32>
    %37 = vector.extract_strided_slice %19 {offsets = [0, 128], sizes = [8, 128], strides = [1, 1]} : vector<8x256xf32> to vector<8x128xf32>
    %38 = arith.addf %37, %13 : vector<8x128xf32>
    %39 = arith.negf %38 : vector<8x128xf32>
    %40 = math.exp %39 : vector<8x128xf32>
    %cst_20 = arith.constant 1.000000e+00 : f32
    %41 = vector.broadcast %cst_20 : f32 to vector<8x128xf32>
    %42 = arith.addf %41, %40 : vector<8x128xf32>
    %43 = arith.divf %41, %42 : vector<8x128xf32>
    %44 = vector.extract_strided_slice %43 {offsets = [0, 0], sizes = [8, 32], strides = [1, 1]} : vector<8x128xf32> to vector<8x32xf32>
    %45 = vector.extract_strided_slice %43 {offsets = [0, 32], sizes = [8, 32], strides = [1, 1]} : vector<8x128xf32> to vector<8x32xf32>
    %46 = vector.extract_strided_slice %43 {offsets = [0, 96], sizes = [8, 32], strides = [1, 1]} : vector<8x128xf32> to vector<8x32xf32>
    %47 = vector.extract_strided_slice %38 {offsets = [0, 64], sizes = [8, 32], strides = [1, 1]} : vector<8x128xf32> to vector<8x32xf32>
    %48 = math.tanh %47 : vector<8x32xf32>
    %49 = arith.mulf %45, %10 : vector<8x32xf32>
    %50 = arith.mulf %44, %48 : vector<8x32xf32>
    %51 = arith.addf %49, %50 : vector<8x32xf32>
    %52 = math.tanh %51 : vector<8x32xf32>
    %53 = arith.mulf %46, %52 : vector<8x32xf32>
    %54 = arith.index_cast %c0_i32 : i32 to index
    %c0_21 = arith.constant 0 : index
    %c0_22 = arith.constant 0 : index
    %55 = vector.load %arg12[%54, %c0_21, %c0_22] : memref<8x8x64xf32, #tpu.memory_space<vmem>>, vector<1x8x32xf32>
    %56 = vector.shape_cast %55 : vector<1x8x32xf32> to vector<8x32xf32>
    %57 = vector.shape_cast %36 : vector<8x32xf32> to vector<1x8x32xf32>
    tpu.vector_store %arg12[%54, %c0_21, %c0_22], %57 {strides = array<i32>} : memref<8x8x64xf32, #tpu.memory_space<vmem>>, vector<1x8x32xf32>,
    %58 = arith.index_cast %11 : i32 to index
    %c0_23 = arith.constant 0 : index
    %c32 = arith.constant 32 : index
    %59 = vector.load %arg12[%58, %c0_23, %c32] : memref<8x8x64xf32, #tpu.memory_space<vmem>>, vector<1x8x32xf32>
    %60 = vector.shape_cast %59 : vector<1x8x32xf32> to vector<8x32xf32>
    %61 = vector.shape_cast %53 : vector<8x32xf32> to vector<1x8x32xf32>
    tpu.vector_store %arg12[%58, %c0_23, %c32], %61 {strides = array<i32>} : memref<8x8x64xf32, #tpu.memory_space<vmem>>, vector<1x8x32xf32>,
    %c1_i32 = arith.constant 1 : i32
    %c7_i32_24 = arith.constant 7 : i32
    %62 = arith.subi %c7_i32_24, %c1_i32 : i32
    %cst_25 = arith.constant dense<0.000000e+00> : vector<8x128xf32>
    %63 = tpu.matmul %36, %8, %cst_25 {dimension_numbers = #tpu.dot_dimension_numbers<[1], [0], [0], [1], [0, 0, 1, 1], [], []>} : vector<8x32xf32>, vector<32x128xf32>, vector<8x128xf32> -> vector<8x128xf32>
    %cst_26 = arith.constant dense<0.000000e+00> : vector<8x128xf32>
    %64 = tpu.matmul %53, %9, %cst_26 {dimension_numbers = #tpu.dot_dimension_numbers<[1], [0], [0], [1], [0, 0, 1, 1], [], []>} : vector<8x32xf32>, vector<32x128xf32>, vector<8x128xf32> -> vector<8x128xf32>
    %65 = arith.index_cast %c1_i32 : i32 to index
    %c0_27 = arith.constant 0 : index
    %c0_28 = arith.constant 0 : index
    %66 = vector.load %arg11[%65, %c0_27, %c0_28] : memref<8x8x256xf32, #tpu.memory_space<vmem>>, vector<1x8x256xf32>
    %67 = vector.shape_cast %66 : vector<1x8x256xf32> to vector<8x256xf32>
    %68 = arith.index_cast %62 : i32 to index
    %c0_29 = arith.constant 0 : index
    %c0_30 = arith.constant 0 : index
    %69 = vector.load %arg11[%68, %c0_29, %c0_30] : memref<8x8x256xf32, #tpu.memory_space<vmem>>, vector<1x8x256xf32>
    %70 = vector.shape_cast %69 : vector<1x8x256xf32> to vector<8x256xf32>
    %71 = vector.extract_strided_slice %67 {offsets = [0, 0], sizes = [8, 128], strides = [1, 1]} : vector<8x256xf32> to vector<8x128xf32>
    %72 = arith.addf %71, %63 : vector<8x128xf32>
    %73 = arith.negf %72 : vector<8x128xf32>
    %74 = math.exp %73 : vector<8x128xf32>
    %cst_31 = arith.constant 1.000000e+00 : f32
    %75 = vector.broadcast %cst_31 : f32 to vector<8x128xf32>
    %76 = arith.addf %75, %74 : vector<8x128xf32>
    %77 = arith.divf %75, %76 : vector<8x128xf32>
    %78 = vector.extract_strided_slice %77 {offsets = [0, 0], sizes = [8, 32], strides = [1, 1]} : vector<8x128xf32> to vector<8x32xf32>
    %79 = vector.extract_strided_slice %77 {offsets = [0, 32], sizes = [8, 32], strides = [1, 1]} : vector<8x128xf32> to vector<8x32xf32>
    %80 = vector.extract_strided_slice %77 {offsets = [0, 96], sizes = [8, 32], strides = [1, 1]} : vector<8x128xf32> to vector<8x32xf32>
    %81 = vector.extract_strided_slice %72 {offsets = [0, 64], sizes = [8, 32], strides = [1, 1]} : vector<8x128xf32> to vector<8x32xf32>
    %82 = math.tanh %81 : vector<8x32xf32>
    %83 = arith.mulf %79, %34 : vector<8x32xf32>
    %84 = arith.mulf %78, %82 : vector<8x32xf32>
    %85 = arith.addf %83, %84 : vector<8x32xf32>
    %86 = math.tanh %85 : vector<8x32xf32>
    %87 = arith.mulf %80, %86 : vector<8x32xf32>
    %88 = vector.extract_strided_slice %70 {offsets = [0, 128], sizes = [8, 128], strides = [1, 1]} : vector<8x256xf32> to vector<8x128xf32>
    %89 = arith.addf %88, %64 : vector<8x128xf32>
    %90 = arith.negf %89 : vector<8x128xf32>
    %91 = math.exp %90 : vector<8x128xf32>
    %cst_32 = arith.constant 1.000000e+00 : f32
    %92 = vector.broadcast %cst_32 : f32 to vector<8x128xf32>
    %93 = arith.addf %92, %91 : vector<8x128xf32>
    %94 = arith.divf %92, %93 : vector<8x128xf32>
    %95 = vector.extract_strided_slice %94 {offsets = [0, 0], sizes = [8, 32], strides = [1, 1]} : vector<8x128xf32> to vector<8x32xf32>
    %96 = vector.extract_strided_slice %94 {offsets = [0, 32], sizes = [8, 32], strides = [1, 1]} : vector<8x128xf32> to vector<8x32xf32>
    %97 = vector.extract_strided_slice %94 {offsets = [0, 96], sizes = [8, 32], strides = [1, 1]} : vector<8x128xf32> to vector<8x32xf32>
    %98 = vector.extract_strided_slice %89 {offsets = [0, 64], sizes = [8, 32], strides = [1, 1]} : vector<8x128xf32> to vector<8x32xf32>
    %99 = math.tanh %98 : vector<8x32xf32>
    %100 = arith.mulf %96, %51 : vector<8x32xf32>
    %101 = arith.mulf %95, %99 : vector<8x32xf32>
    %102 = arith.addf %100, %101 : vector<8x32xf32>
    %103 = math.tanh %102 : vector<8x32xf32>
    %104 = arith.mulf %97, %103 : vector<8x32xf32>
    %105 = arith.index_cast %c1_i32 : i32 to index
    %c0_33 = arith.constant 0 : index
    %c0_34 = arith.constant 0 : index
    %106 = vector.load %arg12[%105, %c0_33, %c0_34] : memref<8x8x64xf32, #tpu.memory_space<vmem>>, vector<1x8x32xf32>
    %107 = vector.shape_cast %106 : vector<1x8x32xf32> to vector<8x32xf32>
    %108 = vector.shape_cast %87 : vector<8x32xf32> to vector<1x8x32xf32>
    tpu.vector_store %arg12[%105, %c0_33, %c0_34], %108 {strides = array<i32>} : memref<8x8x64xf32, #tpu.memory_space<vmem>>, vector<1x8x32xf32>,
    %109 = arith.index_cast %62 : i32 to index
    %c0_35 = arith.constant 0 : index
    %c32_36 = arith.constant 32 : index
    %110 = vector.load %arg12[%109, %c0_35, %c32_36] : memref<8x8x64xf32, #tpu.memory_space<vmem>>, vector<1x8x32xf32>
    %111 = vector.shape_cast %110 : vector<1x8x32xf32> to vector<8x32xf32>
    %112 = vector.shape_cast %104 : vector<8x32xf32> to vector<1x8x32xf32>
    tpu.vector_store %arg12[%109, %c0_35, %c32_36], %112 {strides = array<i32>} : memref<8x8x64xf32, #tpu.memory_space<vmem>>, vector<1x8x32xf32>,
    %c2_i32 = arith.constant 2 : i32
    %c7_i32_37 = arith.constant 7 : i32
    %113 = arith.subi %c7_i32_37, %c2_i32 : i32
    %cst_38 = arith.constant dense<0.000000e+00> : vector<8x128xf32>
    %114 = tpu.matmul %87, %8, %cst_38 {dimension_numbers = #tpu.dot_dimension_numbers<[1], [0], [0], [1], [0, 0, 1, 1], [], []>} : vector<8x32xf32>, vector<32x128xf32>, vector<8x128xf32> -> vector<8x128xf32>
    %cst_39 = arith.constant dense<0.000000e+00> : vector<8x128xf32>
    %115 = tpu.matmul %104, %9, %cst_39 {dimension_numbers = #tpu.dot_dimension_numbers<[1], [0], [0], [1], [0, 0, 1, 1], [], []>} : vector<8x32xf32>, vector<32x128xf32>, vector<8x128xf32> -> vector<8x128xf32>
    %116 = arith.index_cast %c2_i32 : i32 to index
    %c0_40 = arith.constant 0 : index
    %c0_41 = arith.constant 0 : index
    %117 = vector.load %arg11[%116, %c0_40, %c0_41] : memref<8x8x256xf32, #tpu.memory_space<vmem>>, vector<1x8x256xf32>
    %118 = vector.shape_cast %117 : vector<1x8x256xf32> to vector<8x256xf32>
    %119 = arith.index_cast %113 : i32 to index
    %c0_42 = arith.constant 0 : index
    %c0_43 = arith.constant 0 : index
    %120 = vector.load %arg11[%119, %c0_42, %c0_43] : memref<8x8x256xf32, #tpu.memory_space<vmem>>, vector<1x8x256xf32>
    %121 = vector.shape_cast %120 : vector<1x8x256xf32> to vector<8x256xf32>
    %122 = vector.extract_strided_slice %118 {offsets = [0, 0], sizes = [8, 128], strides = [1, 1]} : vector<8x256xf32> to vector<8x128xf32>
    %123 = arith.addf %122, %114 : vector<8x128xf32>
    %124 = arith.negf %123 : vector<8x128xf32>
    %125 = math.exp %124 : vector<8x128xf32>
    %cst_44 = arith.constant 1.000000e+00 : f32
    %126 = vector.broadcast %cst_44 : f32 to vector<8x128xf32>
    %127 = arith.addf %126, %125 : vector<8x128xf32>
    %128 = arith.divf %126, %127 : vector<8x128xf32>
    %129 = vector.extract_strided_slice %128 {offsets = [0, 0], sizes = [8, 32], strides = [1, 1]} : vector<8x128xf32> to vector<8x32xf32>
    %130 = vector.extract_strided_slice %128 {offsets = [0, 32], sizes = [8, 32], strides = [1, 1]} : vector<8x128xf32> to vector<8x32xf32>
    %131 = vector.extract_strided_slice %128 {offsets = [0, 96], sizes = [8, 32], strides = [1, 1]} : vector<8x128xf32> to vector<8x32xf32>
    %132 = vector.extract_strided_slice %123 {offsets = [0, 64], sizes = [8, 32], strides = [1, 1]} : vector<8x128xf32> to vector<8x32xf32>
    %133 = math.tanh %132 : vector<8x32xf32>
    %134 = arith.mulf %130, %85 : vector<8x32xf32>
    %135 = arith.mulf %129, %133 : vector<8x32xf32>
    %136 = arith.addf %134, %135 : vector<8x32xf32>
    %137 = math.tanh %136 : vector<8x32xf32>
    %138 = arith.mulf %131, %137 : vector<8x32xf32>
    %139 = vector.extract_strided_slice %121 {offsets = [0, 128], sizes = [8, 128], strides = [1, 1]} : vector<8x256xf32> to vector<8x128xf32>
    %140 = arith.addf %139, %115 : vector<8x128xf32>
    %141 = arith.negf %140 : vector<8x128xf32>
    %142 = math.exp %141 : vector<8x128xf32>
    %cst_45 = arith.constant 1.000000e+00 : f32
    %143 = vector.broadcast %cst_45 : f32 to vector<8x128xf32>
    %144 = arith.addf %143, %142 : vector<8x128xf32>
    %145 = arith.divf %143, %144 : vector<8x128xf32>
    %146 = vector.extract_strided_slice %145 {offsets = [0, 0], sizes = [8, 32], strides = [1, 1]} : vector<8x128xf32> to vector<8x32xf32>
    %147 = vector.extract_strided_slice %145 {offsets = [0, 32], sizes = [8, 32], strides = [1, 1]} : vector<8x128xf32> to vector<8x32xf32>
    %148 = vector.extract_strided_slice %145 {offsets = [0, 96], sizes = [8, 32], strides = [1, 1]} : vector<8x128xf32> to vector<8x32xf32>
    %149 = vector.extract_strided_slice %140 {offsets = [0, 64], sizes = [8, 32], strides = [1, 1]} : vector<8x128xf32> to vector<8x32xf32>
    %150 = math.tanh %149 : vector<8x32xf32>
    %151 = arith.mulf %147, %102 : vector<8x32xf32>
    %152 = arith.mulf %146, %150 : vector<8x32xf32>
    %153 = arith.addf %151, %152 : vector<8x32xf32>
    %154 = math.tanh %153 : vector<8x32xf32>
    %155 = arith.mulf %148, %154 : vector<8x32xf32>
    %156 = arith.index_cast %c2_i32 : i32 to index
    %c0_46 = arith.constant 0 : index
    %c0_47 = arith.constant 0 : index
    %157 = vector.load %arg12[%156, %c0_46, %c0_47] : memref<8x8x64xf32, #tpu.memory_space<vmem>>, vector<1x8x32xf32>
    %158 = vector.shape_cast %157 : vector<1x8x32xf32> to vector<8x32xf32>
    %159 = vector.shape_cast %138 : vector<8x32xf32> to vector<1x8x32xf32>
    tpu.vector_store %arg12[%156, %c0_46, %c0_47], %159 {strides = array<i32>} : memref<8x8x64xf32, #tpu.memory_space<vmem>>, vector<1x8x32xf32>,
    %160 = arith.index_cast %113 : i32 to index
    %c0_48 = arith.constant 0 : index
    %c32_49 = arith.constant 32 : index
    %161 = vector.load %arg12[%160, %c0_48, %c32_49] : memref<8x8x64xf32, #tpu.memory_space<vmem>>, vector<1x8x32xf32>
    %162 = vector.shape_cast %161 : vector<1x8x32xf32> to vector<8x32xf32>
    %163 = vector.shape_cast %155 : vector<8x32xf32> to vector<1x8x32xf32>
    tpu.vector_store %arg12[%160, %c0_48, %c32_49], %163 {strides = array<i32>} : memref<8x8x64xf32, #tpu.memory_space<vmem>>, vector<1x8x32xf32>,
    %c3_i32 = arith.constant 3 : i32
    %c7_i32_50 = arith.constant 7 : i32
    %164 = arith.subi %c7_i32_50, %c3_i32 : i32
    %cst_51 = arith.constant dense<0.000000e+00> : vector<8x128xf32>
    %165 = tpu.matmul %138, %8, %cst_51 {dimension_numbers = #tpu.dot_dimension_numbers<[1], [0], [0], [1], [0, 0, 1, 1], [], []>} : vector<8x32xf32>, vector<32x128xf32>, vector<8x128xf32> -> vector<8x128xf32>
    %cst_52 = arith.constant dense<0.000000e+00> : vector<8x128xf32>
    %166 = tpu.matmul %155, %9, %cst_52 {dimension_numbers = #tpu.dot_dimension_numbers<[1], [0], [0], [1], [0, 0, 1, 1], [], []>} : vector<8x32xf32>, vector<32x128xf32>, vector<8x128xf32> -> vector<8x128xf32>
    %167 = arith.index_cast %c3_i32 : i32 to index
    %c0_53 = arith.constant 0 : index
    %c0_54 = arith.constant 0 : index
    %168 = vector.load %arg11[%167, %c0_53, %c0_54] : memref<8x8x256xf32, #tpu.memory_space<vmem>>, vector<1x8x256xf32>
    %169 = vector.shape_cast %168 : vector<1x8x256xf32> to vector<8x256xf32>
    %170 = arith.index_cast %164 : i32 to index
    %c0_55 = arith.constant 0 : index
    %c0_56 = arith.constant 0 : index
    %171 = vector.load %arg11[%170, %c0_55, %c0_56] : memref<8x8x256xf32, #tpu.memory_space<vmem>>, vector<1x8x256xf32>
    %172 = vector.shape_cast %171 : vector<1x8x256xf32> to vector<8x256xf32>
    %173 = vector.extract_strided_slice %169 {offsets = [0, 0], sizes = [8, 128], strides = [1, 1]} : vector<8x256xf32> to vector<8x128xf32>
    %174 = arith.addf %173, %165 : vector<8x128xf32>
    %175 = arith.negf %174 : vector<8x128xf32>
    %176 = math.exp %175 : vector<8x128xf32>
    %cst_57 = arith.constant 1.000000e+00 : f32
    %177 = vector.broadcast %cst_57 : f32 to vector<8x128xf32>
    %178 = arith.addf %177, %176 : vector<8x128xf32>
    %179 = arith.divf %177, %178 : vector<8x128xf32>
    %180 = vector.extract_strided_slice %179 {offsets = [0, 0], sizes = [8, 32], strides = [1, 1]} : vector<8x128xf32> to vector<8x32xf32>
    %181 = vector.extract_strided_slice %179 {offsets = [0, 32], sizes = [8, 32], strides = [1, 1]} : vector<8x128xf32> to vector<8x32xf32>
    %182 = vector.extract_strided_slice %179 {offsets = [0, 96], sizes = [8, 32], strides = [1, 1]} : vector<8x128xf32> to vector<8x32xf32>
    %183 = vector.extract_strided_slice %174 {offsets = [0, 64], sizes = [8, 32], strides = [1, 1]} : vector<8x128xf32> to vector<8x32xf32>
    %184 = math.tanh %183 : vector<8x32xf32>
    %185 = arith.mulf %181, %136 : vector<8x32xf32>
    %186 = arith.mulf %180, %184 : vector<8x32xf32>
    %187 = arith.addf %185, %186 : vector<8x32xf32>
    %188 = math.tanh %187 : vector<8x32xf32>
    %189 = arith.mulf %182, %188 : vector<8x32xf32>
    %190 = vector.extract_strided_slice %172 {offsets = [0, 128], sizes = [8, 128], strides = [1, 1]} : vector<8x256xf32> to vector<8x128xf32>
    %191 = arith.addf %190, %166 : vector<8x128xf32>
    %192 = arith.negf %191 : vector<8x128xf32>
    %193 = math.exp %192 : vector<8x128xf32>
    %cst_58 = arith.constant 1.000000e+00 : f32
    %194 = vector.broadcast %cst_58 : f32 to vector<8x128xf32>
    %195 = arith.addf %194, %193 : vector<8x128xf32>
    %196 = arith.divf %194, %195 : vector<8x128xf32>
    %197 = vector.extract_strided_slice %196 {offsets = [0, 0], sizes = [8, 32], strides = [1, 1]} : vector<8x128xf32> to vector<8x32xf32>
    %198 = vector.extract_strided_slice %196 {offsets = [0, 32], sizes = [8, 32], strides = [1, 1]} : vector<8x128xf32> to vector<8x32xf32>
    %199 = vector.extract_strided_slice %196 {offsets = [0, 96], sizes = [8, 32], strides = [1, 1]} : vector<8x128xf32> to vector<8x32xf32>
    %200 = vector.extract_strided_slice %191 {offsets = [0, 64], sizes = [8, 32], strides = [1, 1]} : vector<8x128xf32> to vector<8x32xf32>
    %201 = math.tanh %200 : vector<8x32xf32>
    %202 = arith.mulf %198, %153 : vector<8x32xf32>
    %203 = arith.mulf %197, %201 : vector<8x32xf32>
    %204 = arith.addf %202, %203 : vector<8x32xf32>
    %205 = math.tanh %204 : vector<8x32xf32>
    %206 = arith.mulf %199, %205 : vector<8x32xf32>
    %207 = arith.index_cast %c3_i32 : i32 to index
    %c0_59 = arith.constant 0 : index
    %c0_60 = arith.constant 0 : index
    %208 = vector.load %arg12[%207, %c0_59, %c0_60] : memref<8x8x64xf32, #tpu.memory_space<vmem>>, vector<1x8x32xf32>
    %209 = vector.shape_cast %208 : vector<1x8x32xf32> to vector<8x32xf32>
    %210 = vector.shape_cast %189 : vector<8x32xf32> to vector<1x8x32xf32>
    tpu.vector_store %arg12[%207, %c0_59, %c0_60], %210 {strides = array<i32>} : memref<8x8x64xf32, #tpu.memory_space<vmem>>, vector<1x8x32xf32>,
    %211 = arith.index_cast %164 : i32 to index
    %c0_61 = arith.constant 0 : index
    %c32_62 = arith.constant 32 : index
    %212 = vector.load %arg12[%211, %c0_61, %c32_62] : memref<8x8x64xf32, #tpu.memory_space<vmem>>, vector<1x8x32xf32>
    %213 = vector.shape_cast %212 : vector<1x8x32xf32> to vector<8x32xf32>
    %214 = vector.shape_cast %206 : vector<8x32xf32> to vector<1x8x32xf32>
    tpu.vector_store %arg12[%211, %c0_61, %c32_62], %214 {strides = array<i32>} : memref<8x8x64xf32, #tpu.memory_space<vmem>>, vector<1x8x32xf32>,
    %c4_i32 = arith.constant 4 : i32
    %c7_i32_63 = arith.constant 7 : i32
    %215 = arith.subi %c7_i32_63, %c4_i32 : i32
    %cst_64 = arith.constant dense<0.000000e+00> : vector<8x128xf32>
    %216 = tpu.matmul %189, %8, %cst_64 {dimension_numbers = #tpu.dot_dimension_numbers<[1], [0], [0], [1], [0, 0, 1, 1], [], []>} : vector<8x32xf32>, vector<32x128xf32>, vector<8x128xf32> -> vector<8x128xf32>
    %cst_65 = arith.constant dense<0.000000e+00> : vector<8x128xf32>
    %217 = tpu.matmul %206, %9, %cst_65 {dimension_numbers = #tpu.dot_dimension_numbers<[1], [0], [0], [1], [0, 0, 1, 1], [], []>} : vector<8x32xf32>, vector<32x128xf32>, vector<8x128xf32> -> vector<8x128xf32>
    %218 = arith.index_cast %c4_i32 : i32 to index
    %c0_66 = arith.constant 0 : index
    %c0_67 = arith.constant 0 : index
    %219 = vector.load %arg11[%218, %c0_66, %c0_67] : memref<8x8x256xf32, #tpu.memory_space<vmem>>, vector<1x8x256xf32>
    %220 = vector.shape_cast %219 : vector<1x8x256xf32> to vector<8x256xf32>
    %221 = arith.index_cast %215 : i32 to index
    %c0_68 = arith.constant 0 : index
    %c0_69 = arith.constant 0 : index
    %222 = vector.load %arg11[%221, %c0_68, %c0_69] : memref<8x8x256xf32, #tpu.memory_space<vmem>>, vector<1x8x256xf32>
    %223 = vector.shape_cast %222 : vector<1x8x256xf32> to vector<8x256xf32>
    %224 = vector.extract_strided_slice %220 {offsets = [0, 0], sizes = [8, 128], strides = [1, 1]} : vector<8x256xf32> to vector<8x128xf32>
    %225 = arith.addf %224, %216 : vector<8x128xf32>
    %226 = arith.negf %225 : vector<8x128xf32>
    %227 = math.exp %226 : vector<8x128xf32>
    %cst_70 = arith.constant 1.000000e+00 : f32
    %228 = vector.broadcast %cst_70 : f32 to vector<8x128xf32>
    %229 = arith.addf %228, %227 : vector<8x128xf32>
    %230 = arith.divf %228, %229 : vector<8x128xf32>
    %231 = vector.extract_strided_slice %230 {offsets = [0, 0], sizes = [8, 32], strides = [1, 1]} : vector<8x128xf32> to vector<8x32xf32>
    %232 = vector.extract_strided_slice %230 {offsets = [0, 32], sizes = [8, 32], strides = [1, 1]} : vector<8x128xf32> to vector<8x32xf32>
    %233 = vector.extract_strided_slice %230 {offsets = [0, 96], sizes = [8, 32], strides = [1, 1]} : vector<8x128xf32> to vector<8x32xf32>
    %234 = vector.extract_strided_slice %225 {offsets = [0, 64], sizes = [8, 32], strides = [1, 1]} : vector<8x128xf32> to vector<8x32xf32>
    %235 = math.tanh %234 : vector<8x32xf32>
    %236 = arith.mulf %232, %187 : vector<8x32xf32>
    %237 = arith.mulf %231, %235 : vector<8x32xf32>
    %238 = arith.addf %236, %237 : vector<8x32xf32>
    %239 = math.tanh %238 : vector<8x32xf32>
    %240 = arith.mulf %233, %239 : vector<8x32xf32>
    %241 = vector.extract_strided_slice %223 {offsets = [0, 128], sizes = [8, 128], strides = [1, 1]} : vector<8x256xf32> to vector<8x128xf32>
    %242 = arith.addf %241, %217 : vector<8x128xf32>
    %243 = arith.negf %242 : vector<8x128xf32>
    %244 = math.exp %243 : vector<8x128xf32>
    %cst_71 = arith.constant 1.000000e+00 : f32
    %245 = vector.broadcast %cst_71 : f32 to vector<8x128xf32>
    %246 = arith.addf %245, %244 : vector<8x128xf32>
    %247 = arith.divf %245, %246 : vector<8x128xf32>
    %248 = vector.extract_strided_slice %247 {offsets = [0, 0], sizes = [8, 32], strides = [1, 1]} : vector<8x128xf32> to vector<8x32xf32>
    %249 = vector.extract_strided_slice %247 {offsets = [0, 32], sizes = [8, 32], strides = [1, 1]} : vector<8x128xf32> to vector<8x32xf32>
    %250 = vector.extract_strided_slice %247 {offsets = [0, 96], sizes = [8, 32], strides = [1, 1]} : vector<8x128xf32> to vector<8x32xf32>
    %251 = vector.extract_strided_slice %242 {offsets = [0, 64], sizes = [8, 32], strides = [1, 1]} : vector<8x128xf32> to vector<8x32xf32>
    %252 = math.tanh %251 : vector<8x32xf32>
    %253 = arith.mulf %249, %204 : vector<8x32xf32>
    %254 = arith.mulf %248, %252 : vector<8x32xf32>
    %255 = arith.addf %253, %254 : vector<8x32xf32>
    %256 = math.tanh %255 : vector<8x32xf32>
    %257 = arith.mulf %250, %256 : vector<8x32xf32>
    %258 = arith.index_cast %c4_i32 : i32 to index
    %c0_72 = arith.constant 0 : index
    %c0_73 = arith.constant 0 : index
    %259 = vector.load %arg12[%258, %c0_72, %c0_73] : memref<8x8x64xf32, #tpu.memory_space<vmem>>, vector<1x8x32xf32>
    %260 = vector.shape_cast %259 : vector<1x8x32xf32> to vector<8x32xf32>
    %261 = vector.shape_cast %240 : vector<8x32xf32> to vector<1x8x32xf32>
    tpu.vector_store %arg12[%258, %c0_72, %c0_73], %261 {strides = array<i32>} : memref<8x8x64xf32, #tpu.memory_space<vmem>>, vector<1x8x32xf32>,
    %262 = arith.index_cast %215 : i32 to index
    %c0_74 = arith.constant 0 : index
    %c32_75 = arith.constant 32 : index
    %263 = vector.load %arg12[%262, %c0_74, %c32_75] : memref<8x8x64xf32, #tpu.memory_space<vmem>>, vector<1x8x32xf32>
    %264 = vector.shape_cast %263 : vector<1x8x32xf32> to vector<8x32xf32>
    %265 = vector.shape_cast %257 : vector<8x32xf32> to vector<1x8x32xf32>
    tpu.vector_store %arg12[%262, %c0_74, %c32_75], %265 {strides = array<i32>} : memref<8x8x64xf32, #tpu.memory_space<vmem>>, vector<1x8x32xf32>,
    %c5_i32 = arith.constant 5 : i32
    %c7_i32_76 = arith.constant 7 : i32
    %266 = arith.subi %c7_i32_76, %c5_i32 : i32
    %cst_77 = arith.constant dense<0.000000e+00> : vector<8x128xf32>
    %267 = tpu.matmul %240, %8, %cst_77 {dimension_numbers = #tpu.dot_dimension_numbers<[1], [0], [0], [1], [0, 0, 1, 1], [], []>} : vector<8x32xf32>, vector<32x128xf32>, vector<8x128xf32> -> vector<8x128xf32>
    %cst_78 = arith.constant dense<0.000000e+00> : vector<8x128xf32>
    %268 = tpu.matmul %257, %9, %cst_78 {dimension_numbers = #tpu.dot_dimension_numbers<[1], [0], [0], [1], [0, 0, 1, 1], [], []>} : vector<8x32xf32>, vector<32x128xf32>, vector<8x128xf32> -> vector<8x128xf32>
    %269 = arith.index_cast %c5_i32 : i32 to index
    %c0_79 = arith.constant 0 : index
    %c0_80 = arith.constant 0 : index
    %270 = vector.load %arg11[%269, %c0_79, %c0_80] : memref<8x8x256xf32, #tpu.memory_space<vmem>>, vector<1x8x256xf32>
    %271 = vector.shape_cast %270 : vector<1x8x256xf32> to vector<8x256xf32>
    %272 = arith.index_cast %266 : i32 to index
    %c0_81 = arith.constant 0 : index
    %c0_82 = arith.constant 0 : index
    %273 = vector.load %arg11[%272, %c0_81, %c0_82] : memref<8x8x256xf32, #tpu.memory_space<vmem>>, vector<1x8x256xf32>
    %274 = vector.shape_cast %273 : vector<1x8x256xf32> to vector<8x256xf32>
    %275 = vector.extract_strided_slice %271 {offsets = [0, 0], sizes = [8, 128], strides = [1, 1]} : vector<8x256xf32> to vector<8x128xf32>
    %276 = arith.addf %275, %267 : vector<8x128xf32>
    %277 = arith.negf %276 : vector<8x128xf32>
    %278 = math.exp %277 : vector<8x128xf32>
    %cst_83 = arith.constant 1.000000e+00 : f32
    %279 = vector.broadcast %cst_83 : f32 to vector<8x128xf32>
    %280 = arith.addf %279, %278 : vector<8x128xf32>
    %281 = arith.divf %279, %280 : vector<8x128xf32>
    %282 = vector.extract_strided_slice %281 {offsets = [0, 0], sizes = [8, 32], strides = [1, 1]} : vector<8x128xf32> to vector<8x32xf32>
    %283 = vector.extract_strided_slice %281 {offsets = [0, 32], sizes = [8, 32], strides = [1, 1]} : vector<8x128xf32> to vector<8x32xf32>
    %284 = vector.extract_strided_slice %281 {offsets = [0, 96], sizes = [8, 32], strides = [1, 1]} : vector<8x128xf32> to vector<8x32xf32>
    %285 = vector.extract_strided_slice %276 {offsets = [0, 64], sizes = [8, 32], strides = [1, 1]} : vector<8x128xf32> to vector<8x32xf32>
    %286 = math.tanh %285 : vector<8x32xf32>
    %287 = arith.mulf %283, %238 : vector<8x32xf32>
    %288 = arith.mulf %282, %286 : vector<8x32xf32>
    %289 = arith.addf %287, %288 : vector<8x32xf32>
    %290 = math.tanh %289 : vector<8x32xf32>
    %291 = arith.mulf %284, %290 : vector<8x32xf32>
    %292 = vector.extract_strided_slice %274 {offsets = [0, 128], sizes = [8, 128], strides = [1, 1]} : vector<8x256xf32> to vector<8x128xf32>
    %293 = arith.addf %292, %268 : vector<8x128xf32>
    %294 = arith.negf %293 : vector<8x128xf32>
    %295 = math.exp %294 : vector<8x128xf32>
    %cst_84 = arith.constant 1.000000e+00 : f32
    %296 = vector.broadcast %cst_84 : f32 to vector<8x128xf32>
    %297 = arith.addf %296, %295 : vector<8x128xf32>
    %298 = arith.divf %296, %297 : vector<8x128xf32>
    %299 = vector.extract_strided_slice %298 {offsets = [0, 0], sizes = [8, 32], strides = [1, 1]} : vector<8x128xf32> to vector<8x32xf32>
    %300 = vector.extract_strided_slice %298 {offsets = [0, 32], sizes = [8, 32], strides = [1, 1]} : vector<8x128xf32> to vector<8x32xf32>
    %301 = vector.extract_strided_slice %298 {offsets = [0, 96], sizes = [8, 32], strides = [1, 1]} : vector<8x128xf32> to vector<8x32xf32>
    %302 = vector.extract_strided_slice %293 {offsets = [0, 64], sizes = [8, 32], strides = [1, 1]} : vector<8x128xf32> to vector<8x32xf32>
    %303 = math.tanh %302 : vector<8x32xf32>
    %304 = arith.mulf %300, %255 : vector<8x32xf32>
    %305 = arith.mulf %299, %303 : vector<8x32xf32>
    %306 = arith.addf %304, %305 : vector<8x32xf32>
    %307 = math.tanh %306 : vector<8x32xf32>
    %308 = arith.mulf %301, %307 : vector<8x32xf32>
    %309 = arith.index_cast %c5_i32 : i32 to index
    %c0_85 = arith.constant 0 : index
    %c0_86 = arith.constant 0 : index
    %310 = vector.load %arg12[%309, %c0_85, %c0_86] : memref<8x8x64xf32, #tpu.memory_space<vmem>>, vector<1x8x32xf32>
    %311 = vector.shape_cast %310 : vector<1x8x32xf32> to vector<8x32xf32>
    %312 = vector.shape_cast %291 : vector<8x32xf32> to vector<1x8x32xf32>
    tpu.vector_store %arg12[%309, %c0_85, %c0_86], %312 {strides = array<i32>} : memref<8x8x64xf32, #tpu.memory_space<vmem>>, vector<1x8x32xf32>,
    %313 = arith.index_cast %266 : i32 to index
    %c0_87 = arith.constant 0 : index
    %c32_88 = arith.constant 32 : index
    %314 = vector.load %arg12[%313, %c0_87, %c32_88] : memref<8x8x64xf32, #tpu.memory_space<vmem>>, vector<1x8x32xf32>
    %315 = vector.shape_cast %314 : vector<1x8x32xf32> to vector<8x32xf32>
    %316 = vector.shape_cast %308 : vector<8x32xf32> to vector<1x8x32xf32>
    tpu.vector_store %arg12[%313, %c0_87, %c32_88], %316 {strides = array<i32>} : memref<8x8x64xf32, #tpu.memory_space<vmem>>, vector<1x8x32xf32>,
    %c6_i32 = arith.constant 6 : i32
    %c7_i32_89 = arith.constant 7 : i32
    %317 = arith.subi %c7_i32_89, %c6_i32 : i32
    %cst_90 = arith.constant dense<0.000000e+00> : vector<8x128xf32>
    %318 = tpu.matmul %291, %8, %cst_90 {dimension_numbers = #tpu.dot_dimension_numbers<[1], [0], [0], [1], [0, 0, 1, 1], [], []>} : vector<8x32xf32>, vector<32x128xf32>, vector<8x128xf32> -> vector<8x128xf32>
    %cst_91 = arith.constant dense<0.000000e+00> : vector<8x128xf32>
    %319 = tpu.matmul %308, %9, %cst_91 {dimension_numbers = #tpu.dot_dimension_numbers<[1], [0], [0], [1], [0, 0, 1, 1], [], []>} : vector<8x32xf32>, vector<32x128xf32>, vector<8x128xf32> -> vector<8x128xf32>
    %320 = arith.index_cast %c6_i32 : i32 to index
    %c0_92 = arith.constant 0 : index
    %c0_93 = arith.constant 0 : index
    %321 = vector.load %arg11[%320, %c0_92, %c0_93] : memref<8x8x256xf32, #tpu.memory_space<vmem>>, vector<1x8x256xf32>
    %322 = vector.shape_cast %321 : vector<1x8x256xf32> to vector<8x256xf32>
    %323 = arith.index_cast %317 : i32 to index
    %c0_94 = arith.constant 0 : index
    %c0_95 = arith.constant 0 : index
    %324 = vector.load %arg11[%323, %c0_94, %c0_95] : memref<8x8x256xf32, #tpu.memory_space<vmem>>, vector<1x8x256xf32>
    %325 = vector.shape_cast %324 : vector<1x8x256xf32> to vector<8x256xf32>
    %326 = vector.extract_strided_slice %322 {offsets = [0, 0], sizes = [8, 128], strides = [1, 1]} : vector<8x256xf32> to vector<8x128xf32>
    %327 = arith.addf %326, %318 : vector<8x128xf32>
    %328 = arith.negf %327 : vector<8x128xf32>
    %329 = math.exp %328 : vector<8x128xf32>
    %cst_96 = arith.constant 1.000000e+00 : f32
    %330 = vector.broadcast %cst_96 : f32 to vector<8x128xf32>
    %331 = arith.addf %330, %329 : vector<8x128xf32>
    %332 = arith.divf %330, %331 : vector<8x128xf32>
    %333 = vector.extract_strided_slice %332 {offsets = [0, 0], sizes = [8, 32], strides = [1, 1]} : vector<8x128xf32> to vector<8x32xf32>
    %334 = vector.extract_strided_slice %332 {offsets = [0, 32], sizes = [8, 32], strides = [1, 1]} : vector<8x128xf32> to vector<8x32xf32>
    %335 = vector.extract_strided_slice %332 {offsets = [0, 96], sizes = [8, 32], strides = [1, 1]} : vector<8x128xf32> to vector<8x32xf32>
    %336 = vector.extract_strided_slice %327 {offsets = [0, 64], sizes = [8, 32], strides = [1, 1]} : vector<8x128xf32> to vector<8x32xf32>
    %337 = math.tanh %336 : vector<8x32xf32>
    %338 = arith.mulf %334, %289 : vector<8x32xf32>
    %339 = arith.mulf %333, %337 : vector<8x32xf32>
    %340 = arith.addf %338, %339 : vector<8x32xf32>
    %341 = math.tanh %340 : vector<8x32xf32>
    %342 = arith.mulf %335, %341 : vector<8x32xf32>
    %343 = vector.extract_strided_slice %325 {offsets = [0, 128], sizes = [8, 128], strides = [1, 1]} : vector<8x256xf32> to vector<8x128xf32>
    %344 = arith.addf %343, %319 : vector<8x128xf32>
    %345 = arith.negf %344 : vector<8x128xf32>
    %346 = math.exp %345 : vector<8x128xf32>
    %cst_97 = arith.constant 1.000000e+00 : f32
    %347 = vector.broadcast %cst_97 : f32 to vector<8x128xf32>
    %348 = arith.addf %347, %346 : vector<8x128xf32>
    %349 = arith.divf %347, %348 : vector<8x128xf32>
    %350 = vector.extract_strided_slice %349 {offsets = [0, 0], sizes = [8, 32], strides = [1, 1]} : vector<8x128xf32> to vector<8x32xf32>
    %351 = vector.extract_strided_slice %349 {offsets = [0, 32], sizes = [8, 32], strides = [1, 1]} : vector<8x128xf32> to vector<8x32xf32>
    %352 = vector.extract_strided_slice %349 {offsets = [0, 96], sizes = [8, 32], strides = [1, 1]} : vector<8x128xf32> to vector<8x32xf32>
    %353 = vector.extract_strided_slice %344 {offsets = [0, 64], sizes = [8, 32], strides = [1, 1]} : vector<8x128xf32> to vector<8x32xf32>
    %354 = math.tanh %353 : vector<8x32xf32>
    %355 = arith.mulf %351, %306 : vector<8x32xf32>
    %356 = arith.mulf %350, %354 : vector<8x32xf32>
    %357 = arith.addf %355, %356 : vector<8x32xf32>
    %358 = math.tanh %357 : vector<8x32xf32>
    %359 = arith.mulf %352, %358 : vector<8x32xf32>
    %360 = arith.index_cast %c6_i32 : i32 to index
    %c0_98 = arith.constant 0 : index
    %c0_99 = arith.constant 0 : index
    %361 = vector.load %arg12[%360, %c0_98, %c0_99] : memref<8x8x64xf32, #tpu.memory_space<vmem>>, vector<1x8x32xf32>
    %362 = vector.shape_cast %361 : vector<1x8x32xf32> to vector<8x32xf32>
    %363 = vector.shape_cast %342 : vector<8x32xf32> to vector<1x8x32xf32>
    tpu.vector_store %arg12[%360, %c0_98, %c0_99], %363 {strides = array<i32>} : memref<8x8x64xf32, #tpu.memory_space<vmem>>, vector<1x8x32xf32>,
    %364 = arith.index_cast %317 : i32 to index
    %c0_100 = arith.constant 0 : index
    %c32_101 = arith.constant 32 : index
    %365 = vector.load %arg12[%364, %c0_100, %c32_101] : memref<8x8x64xf32, #tpu.memory_space<vmem>>, vector<1x8x32xf32>
    %366 = vector.shape_cast %365 : vector<1x8x32xf32> to vector<8x32xf32>
    %367 = vector.shape_cast %359 : vector<8x32xf32> to vector<1x8x32xf32>
    tpu.vector_store %arg12[%364, %c0_100, %c32_101], %367 {strides = array<i32>} : memref<8x8x64xf32, #tpu.memory_space<vmem>>, vector<1x8x32xf32>,
    %c7_i32_102 = arith.constant 7 : i32
    %c7_i32_103 = arith.constant 7 : i32
    %368 = arith.subi %c7_i32_103, %c7_i32_102 : i32
    %cst_104 = arith.constant dense<0.000000e+00> : vector<8x128xf32>
    %369 = tpu.matmul %342, %8, %cst_104 {dimension_numbers = #tpu.dot_dimension_numbers<[1], [0], [0], [1], [0, 0, 1, 1], [], []>} : vector<8x32xf32>, vector<32x128xf32>, vector<8x128xf32> -> vector<8x128xf32>
    %cst_105 = arith.constant dense<0.000000e+00> : vector<8x128xf32>
    %370 = tpu.matmul %359, %9, %cst_105 {dimension_numbers = #tpu.dot_dimension_numbers<[1], [0], [0], [1], [0, 0, 1, 1], [], []>} : vector<8x32xf32>, vector<32x128xf32>, vector<8x128xf32> -> vector<8x128xf32>
    %371 = arith.index_cast %c7_i32_102 : i32 to index
    %c0_106 = arith.constant 0 : index
    %c0_107 = arith.constant 0 : index
    %372 = vector.load %arg11[%371, %c0_106, %c0_107] : memref<8x8x256xf32, #tpu.memory_space<vmem>>, vector<1x8x256xf32>
    %373 = vector.shape_cast %372 : vector<1x8x256xf32> to vector<8x256xf32>
    %374 = arith.index_cast %368 : i32 to index
    %c0_108 = arith.constant 0 : index
    %c0_109 = arith.constant 0 : index
    %375 = vector.load %arg11[%374, %c0_108, %c0_109] : memref<8x8x256xf32, #tpu.memory_space<vmem>>, vector<1x8x256xf32>
    %376 = vector.shape_cast %375 : vector<1x8x256xf32> to vector<8x256xf32>
    %377 = vector.extract_strided_slice %373 {offsets = [0, 0], sizes = [8, 128], strides = [1, 1]} : vector<8x256xf32> to vector<8x128xf32>
    %378 = arith.addf %377, %369 : vector<8x128xf32>
    %379 = arith.negf %378 : vector<8x128xf32>
    %380 = math.exp %379 : vector<8x128xf32>
    %cst_110 = arith.constant 1.000000e+00 : f32
    %381 = vector.broadcast %cst_110 : f32 to vector<8x128xf32>
    %382 = arith.addf %381, %380 : vector<8x128xf32>
    %383 = arith.divf %381, %382 : vector<8x128xf32>
    %384 = vector.extract_strided_slice %383 {offsets = [0, 0], sizes = [8, 32], strides = [1, 1]} : vector<8x128xf32> to vector<8x32xf32>
    %385 = vector.extract_strided_slice %383 {offsets = [0, 32], sizes = [8, 32], strides = [1, 1]} : vector<8x128xf32> to vector<8x32xf32>
    %386 = vector.extract_strided_slice %383 {offsets = [0, 96], sizes = [8, 32], strides = [1, 1]} : vector<8x128xf32> to vector<8x32xf32>
    %387 = vector.extract_strided_slice %378 {offsets = [0, 64], sizes = [8, 32], strides = [1, 1]} : vector<8x128xf32> to vector<8x32xf32>
    %388 = math.tanh %387 : vector<8x32xf32>
    %389 = arith.mulf %385, %340 : vector<8x32xf32>
    %390 = arith.mulf %384, %388 : vector<8x32xf32>
    %391 = arith.addf %389, %390 : vector<8x32xf32>
    %392 = math.tanh %391 : vector<8x32xf32>
    %393 = arith.mulf %386, %392 : vector<8x32xf32>
    %394 = vector.extract_strided_slice %376 {offsets = [0, 128], sizes = [8, 128], strides = [1, 1]} : vector<8x256xf32> to vector<8x128xf32>
    %395 = arith.addf %394, %370 : vector<8x128xf32>
    %396 = arith.negf %395 : vector<8x128xf32>
    %397 = math.exp %396 : vector<8x128xf32>
    %cst_111 = arith.constant 1.000000e+00 : f32
    %398 = vector.broadcast %cst_111 : f32 to vector<8x128xf32>
    %399 = arith.addf %398, %397 : vector<8x128xf32>
    %400 = arith.divf %398, %399 : vector<8x128xf32>
    %401 = vector.extract_strided_slice %400 {offsets = [0, 0], sizes = [8, 32], strides = [1, 1]} : vector<8x128xf32> to vector<8x32xf32>
    %402 = vector.extract_strided_slice %400 {offsets = [0, 32], sizes = [8, 32], strides = [1, 1]} : vector<8x128xf32> to vector<8x32xf32>
    %403 = vector.extract_strided_slice %400 {offsets = [0, 96], sizes = [8, 32], strides = [1, 1]} : vector<8x128xf32> to vector<8x32xf32>
    %404 = vector.extract_strided_slice %395 {offsets = [0, 64], sizes = [8, 32], strides = [1, 1]} : vector<8x128xf32> to vector<8x32xf32>
    %405 = math.tanh %404 : vector<8x32xf32>
    %406 = arith.mulf %402, %357 : vector<8x32xf32>
    %407 = arith.mulf %401, %405 : vector<8x32xf32>
    %408 = arith.addf %406, %407 : vector<8x32xf32>
    %409 = math.tanh %408 : vector<8x32xf32>
    %410 = arith.mulf %403, %409 : vector<8x32xf32>
    %411 = arith.index_cast %c7_i32_102 : i32 to index
    %c0_112 = arith.constant 0 : index
    %c0_113 = arith.constant 0 : index
    %412 = vector.load %arg12[%411, %c0_112, %c0_113] : memref<8x8x64xf32, #tpu.memory_space<vmem>>, vector<1x8x32xf32>
    %413 = vector.shape_cast %412 : vector<1x8x32xf32> to vector<8x32xf32>
    %414 = vector.shape_cast %393 : vector<8x32xf32> to vector<1x8x32xf32>
    tpu.vector_store %arg12[%411, %c0_112, %c0_113], %414 {strides = array<i32>} : memref<8x8x64xf32, #tpu.memory_space<vmem>>, vector<1x8x32xf32>,
    %415 = arith.index_cast %368 : i32 to index
    %c0_114 = arith.constant 0 : index
    %c32_115 = arith.constant 32 : index
    %416 = vector.load %arg12[%415, %c0_114, %c32_115] : memref<8x8x64xf32, #tpu.memory_space<vmem>>, vector<1x8x32xf32>
    %417 = vector.shape_cast %416 : vector<1x8x32xf32> to vector<8x32xf32>
    %418 = vector.shape_cast %410 : vector<8x32xf32> to vector<1x8x32xf32>
    tpu.vector_store %arg12[%415, %c0_114, %c32_115], %418 {strides = array<i32>} : memref<8x8x64xf32, #tpu.memory_space<vmem>>, vector<1x8x32xf32>,
    %c8_i32 = arith.constant 8 : i32
    %c0_116 = arith.constant 0 : index
    %c0_117 = arith.constant 0 : index
    %c0_118 = arith.constant 0 : index
    %419 = vector.load %arg12[%c0_116, %c0_117, %c0_118] : memref<8x8x64xf32, #tpu.memory_space<vmem>>, vector<8x8x64xf32>
    %420 = vector.shape_cast %419 : vector<8x8x64xf32> to vector<64x64xf32>
    %c0_119 = arith.constant 0 : index
    %c0_120 = arith.constant 0 : index
    %421 = vector.load %arg5[%c0_119, %c0_120] : memref<64x4xf32, #tpu.memory_space<vmem>>, vector<64x4xf32>
    %cst_121 = arith.constant dense<0.000000e+00> : vector<64x4xf32>
    %422 = tpu.matmul %420, %421, %cst_121 {dimension_numbers = #tpu.dot_dimension_numbers<[1], [0], [0], [1], [0, 0, 1, 1], [], []>} : vector<64x64xf32>, vector<64x4xf32>, vector<64x4xf32> -> vector<64x4xf32>
    %423 = vector.shape_cast %422 : vector<64x4xf32> to vector<8x8x4xf32>
    %cst_122 = arith.constant dense<0xFF800000> : vector<8x4xf32>
    %424 = vector.multi_reduction <maximumf>, %423, %cst_122 [0] : vector<8x8x4xf32> to vector<8x4xf32>
    %425 = vector.shape_cast %424 : vector<8x4xf32> to vector<1x8x4xf32>
    %426 = vector.broadcast %425 : vector<1x8x4xf32> to vector<8x8x4xf32>
    %427 = arith.subf %423, %426 : vector<8x8x4xf32>
    %428 = math.exp %427 : vector<8x8x4xf32>
    %cst_123 = arith.constant dense<0.000000e+00> : vector<8x4xf32>
    %429 = vector.multi_reduction <add>, %428, %cst_123 [0] : vector<8x8x4xf32> to vector<8x4xf32>
    %430 = vector.shape_cast %429 : vector<8x4xf32> to vector<1x8x4xf32>
    %431 = vector.broadcast %430 : vector<1x8x4xf32> to vector<8x8x4xf32>
    %432 = arith.divf %428, %431 : vector<8x8x4xf32>
    %433 = vector.extract_strided_slice %432 {offsets = [0, 0, 0], sizes = [8, 8, 1], strides = [1, 1, 1]} : vector<8x8x4xf32> to vector<8x8x1xf32>
    %434 = vector.broadcast %433 : vector<8x8x1xf32> to vector<8x8x64xf32>
    %435 = arith.mulf %434, %419 : vector<8x8x64xf32>
    %cst_124 = arith.constant dense<0.000000e+00> : vector<8x64xf32>
    %436 = vector.multi_reduction <add>, %435, %cst_124 [0] : vector<8x8x64xf32> to vector<8x64xf32>
    %437 = vector.extract_strided_slice %432 {offsets = [0, 0, 1], sizes = [8, 8, 1], strides = [1, 1, 1]} : vector<8x8x4xf32> to vector<8x8x1xf32>
    %438 = vector.broadcast %437 : vector<8x8x1xf32> to vector<8x8x64xf32>
    %439 = arith.mulf %438, %419 : vector<8x8x64xf32>
    %cst_125 = arith.constant dense<0.000000e+00> : vector<8x64xf32>
    %440 = vector.multi_reduction <add>, %439, %cst_125 [0] : vector<8x8x64xf32> to vector<8x64xf32>
    %441 = vector.extract_strided_slice %432 {offsets = [0, 0, 2], sizes = [8, 8, 1], strides = [1, 1, 1]} : vector<8x8x4xf32> to vector<8x8x1xf32>
    %442 = vector.broadcast %441 : vector<8x8x1xf32> to vector<8x8x64xf32>
    %443 = arith.mulf %442, %419 : vector<8x8x64xf32>
    %cst_126 = arith.constant dense<0.000000e+00> : vector<8x64xf32>
    %444 = vector.multi_reduction <add>, %443, %cst_126 [0] : vector<8x8x64xf32> to vector<8x64xf32>
    %445 = vector.extract_strided_slice %432 {offsets = [0, 0, 3], sizes = [8, 8, 1], strides = [1, 1, 1]} : vector<8x8x4xf32> to vector<8x8x1xf32>
    %446 = vector.broadcast %445 : vector<8x8x1xf32> to vector<8x8x64xf32>
    %447 = arith.mulf %446, %419 : vector<8x8x64xf32>
    %cst_127 = arith.constant dense<0.000000e+00> : vector<8x64xf32>
    %448 = vector.multi_reduction <add>, %447, %cst_127 [0] : vector<8x8x64xf32> to vector<8x64xf32>
    %449 = tpu.concatenate %436, %440, %444, %448 in 0 : vector<8x64xf32>, vector<8x64xf32>, vector<8x64xf32>, vector<8x64xf32> -> vector<32x64xf32>
    %c0_128 = arith.constant 0 : index
    %c0_129 = arith.constant 0 : index
    %450 = vector.load %arg6[%c0_128, %c0_129] : memref<64x32xf32, #tpu.memory_space<vmem>>, vector<64x32xf32>
    %cst_130 = arith.constant dense<0.000000e+00> : vector<32x32xf32>
    %451 = tpu.matmul %449, %450, %cst_130 {dimension_numbers = #tpu.dot_dimension_numbers<[1], [0], [0], [1], [0, 0, 1, 1], [], []>} : vector<32x64xf32>, vector<64x32xf32>, vector<32x32xf32> -> vector<32x32xf32>
    %c0_131 = arith.constant 0 : index
    %c0_132 = arith.constant 0 : index
    %452 = vector.load %arg7[%c0_131, %c0_132] : memref<1x32xf32, #tpu.memory_space<vmem>>, vector<1x32xf32>
    %453 = vector.broadcast %452 : vector<1x32xf32> to vector<32x32xf32>
    %454 = arith.addf %451, %453 : vector<32x32xf32>
    %c0_133 = arith.constant 0 : index
    %c0_134 = arith.constant 0 : index
    %455 = vector.load %arg8[%c0_133, %c0_134] : memref<32x3xf32, #tpu.memory_space<vmem>>, vector<32x3xf32>
    %cst_135 = arith.constant dense<0.000000e+00> : vector<32x3xf32>
    %456 = tpu.matmul %454, %455, %cst_135 {dimension_numbers = #tpu.dot_dimension_numbers<[1], [0], [0], [1], [0, 0, 1, 1], [], []>} : vector<32x32xf32>, vector<32x3xf32>, vector<32x3xf32> -> vector<32x3xf32>
    %c0_136 = arith.constant 0 : index
    %c0_137 = arith.constant 0 : index
    %457 = vector.load %arg9[%c0_136, %c0_137] : memref<1x3xf32, #tpu.memory_space<vmem>>, vector<1x3xf32>
    %458 = vector.broadcast %457 : vector<1x3xf32> to vector<32x3xf32>
    %459 = arith.addf %456, %458 : vector<32x3xf32>
    %cst_138 = arith.constant dense<0xFF800000> : vector<32xf32>
    %460 = vector.multi_reduction <maximumf>, %459, %cst_138 [1] : vector<32x3xf32> to vector<32xf32>
    %461 = vector.shape_cast %460 : vector<32xf32> to vector<32x1xf32>
    %462 = vector.broadcast %461 : vector<32x1xf32> to vector<32x3xf32>
    %463 = arith.subf %459, %462 : vector<32x3xf32>
    %464 = math.exp %463 : vector<32x3xf32>
    %cst_139 = arith.constant dense<0.000000e+00> : vector<32xf32>
    %465 = vector.multi_reduction <add>, %464, %cst_139 [1] : vector<32x3xf32> to vector<32xf32>
    %466 = vector.shape_cast %465 : vector<32xf32> to vector<32x1xf32>
    %467 = math.log %466 : vector<32x1xf32>
    %468 = vector.broadcast %467 : vector<32x1xf32> to vector<32x3xf32>
    %469 = arith.subf %463, %468 : vector<32x3xf32>
    %c0_140 = arith.constant 0 : index
    %c0_141 = arith.constant 0 : index
    %470 = vector.load %arg10[%c0_140, %c0_141] : memref<32x3xf32, #tpu.memory_space<vmem>>, vector<32x3xf32>
    tpu.vector_store %arg10[%c0_140, %c0_141], %469 {strides = array<i32>} : memref<32x3xf32, #tpu.memory_space<vmem>>, vector<32x3xf32>,
    return
  }
}

</mosaic_0001>

<llo_original>
// kernel: tpu_custom_call.1
$region0: #{tpu_custom_call.1}
  #allocation0 [shape = 'u32[]', space=smem, size = 0x4, offset = 0x4, fixed_abs, tag = 'smem constant byte address 0x4 - core index']
  #allocation1 [shape = 'u32[144,128]{1,0:T(1,128)}', space=vmem, size = 0x12000, scoped, tag = 'internal scratch']
  #allocation2 [shape = 'f32[8,8,256]{2,1,0:T(8,128)}', space=vmem, size = 0x10000, scoped, tag = 'scratch operand']
  #allocation3 [shape = 'f32[8,8,64]{2,1,0:T(8,128)}', space=vmem, size = 0x8000, scoped, tag = 'scratch operand']
  %s0 = inlined_call_operand.vmem [shape: f32[64,16], index: 0, kind: input, shape index: {}]
  %s1 = inlined_call_operand.vmem [shape: f32[16,256], index: 1, kind: input, shape index: {}]
  %s2 = inlined_call_operand.vmem [shape: f32[1,256], index: 2, kind: input, shape index: {}]
  %s3 = inlined_call_operand.vmem [shape: f32[32,128], index: 3, kind: input, shape index: {}]
  %s4 = inlined_call_operand.vmem [shape: f32[32,128], index: 4, kind: input, shape index: {}]
  %s5 = inlined_call_operand.vmem [shape: f32[64,4], index: 5, kind: input, shape index: {}]
  %s6 = inlined_call_operand.vmem [shape: f32[64,32], index: 6, kind: input, shape index: {}]
  %s7 = inlined_call_operand.vmem [shape: f32[1,32], index: 7, kind: input, shape index: {}]
  %s8 = inlined_call_operand.vmem [shape: f32[32,3], index: 8, kind: input, shape index: {}]
  %s9 = inlined_call_operand.vmem [shape: f32[1,3], index: 9, kind: input, shape index: {}]
  %s10 = inlined_call_operand.vmem [shape: f32[32,3], index: 10, kind: output, shape index: {}]
  %s11 = sld [smem:[#allocation0]]
  $region50: #{tpu_custom_call.1} parent=0
    _
  %s13 = ssub.s32 1, %s11
  %s14 = scalar_select 0, %s13, %s11
  // Predicated region
  $region2: #{tpu_custom_call.1} parent=0 // pred_check
    _
  $region3: #{tpu_custom_call.1} parent=0 // pred_check_branch
    %16 = sbr.rel (0) target = $region5
  $region4: #{tpu_custom_call.1} parent=0 // pred_region
    _
  $region5: #{tpu_custom_call.1} parent=0 // pred_fallthru
    _
  // Predicated region
  $region6: #{tpu_custom_call.1} parent=0 // pred_check
    _
  $region7: #{tpu_custom_call.1} parent=0 // pred_check_branch
    %18 = sbr.rel (0) target = $region9
  $region8: #{tpu_custom_call.1} parent=0 // pred_region
    _
  $region9: #{tpu_custom_call.1} parent=0 // pred_fallthru
    _
  // Predicated region
  $region10: #{tpu_custom_call.1} parent=0 // pred_check
    _
  $region11: #{tpu_custom_call.1} parent=0 // pred_check_branch
    %20 = sbr.rel (0) target = $region13
  $region12: #{tpu_custom_call.1} parent=0 // pred_region
    _
  $region13: #{tpu_custom_call.1} parent=0 // pred_fallthru
    _
  // Predicated region
  $region14: #{tpu_custom_call.1} parent=0 // pred_check
    _
  $region15: #{tpu_custom_call.1} parent=0 // pred_check_branch
    %22 = sbr.rel (0) target = $region17
  $region16: #{tpu_custom_call.1} parent=0 // pred_region
    _
  $region17: #{tpu_custom_call.1} parent=0 // pred_fallthru
    _
  // Predicated region
  $region18: #{tpu_custom_call.1} parent=0 // pred_check
    _
  $region19: #{tpu_custom_call.1} parent=0 // pred_check_branch
    %24 = sbr.rel (0) target = $region21
  $region20: #{tpu_custom_call.1} parent=0 // pred_region
    _
  $region21: #{tpu_custom_call.1} parent=0 // pred_fallthru
    _
  // Predicated region
  $region22: #{tpu_custom_call.1} parent=0 // pred_check
    _
  $region23: #{tpu_custom_call.1} parent=0 // pred_check_branch
    %26 = sbr.rel (0) target = $region25
  $region24: #{tpu_custom_call.1} parent=0 // pred_region
    _
  $region25: #{tpu_custom_call.1} parent=0 // pred_fallthru
    _
  // Predicated region
  $region26: #{tpu_custom_call.1} parent=0 // pred_check
    _
  $region27: #{tpu_custom_call.1} parent=0 // pred_check_branch
    %28 = sbr.rel (0) target = $region29
  $region28: #{tpu_custom_call.1} parent=0 // pred_region
    _
  $region29: #{tpu_custom_call.1} parent=0 // pred_fallthru
    _
  // Predicated region
  $region30: #{tpu_custom_call.1} parent=0 // pred_check
    _
  $region31: #{tpu_custom_call.1} parent=0 // pred_check_branch
    %30 = sbr.rel (0) target = $region33
  $region32: #{tpu_custom_call.1} parent=0 // pred_region
    _
  $region33: #{tpu_custom_call.1} parent=0 // pred_fallthru
    _
  // Predicated region
  $region34: #{tpu_custom_call.1} parent=0 // pred_check
    _
  $region35: #{tpu_custom_call.1} parent=0 // pred_check_branch
    %32 = sbr.rel (0) target = $region37
  $region36: #{tpu_custom_call.1} parent=0 // pred_region
    _
  $region37: #{tpu_custom_call.1} parent=0 // pred_fallthru
    _
  // Predicated region
  $region38: #{tpu_custom_call.1} parent=0 // pred_check
    _
  $region39: #{tpu_custom_call.1} parent=0 // pred_check_branch
    %34 = sbr.rel (0) target = $region41
  $region40: #{tpu_custom_call.1} parent=0 // pred_region
    _
  $region41: #{tpu_custom_call.1} parent=0 // pred_fallthru
    _
  %v35 = vld [vmem:[%s0] sm:$0xff]
  %v36 = vld [vmem:[%s0 + $0x8] sm:$0xff]
  %v37 = vld [vmem:[%s0 + $0x10] sm:$0xff]
  %v38 = vld [vmem:[%s0 + $0x18] sm:$0xff]
  %v39 = vld [vmem:[%s0 + $0x20] sm:$0xff]
  %v40 = vld [vmem:[%s0 + $0x28] sm:$0xff]
  %v41 = vld [vmem:[%s0 + $0x30] sm:$0xff]
  %v42 = vld [vmem:[%s0 + $0x38] sm:$0xff]
  %v43 = vld [vmem:[%s1] sm:$0xff]
  %v44 = vld [vmem:[%s1 + $0x8] sm:$0xff]
  %v45 = vld [vmem:[%s1 + $0x10] sm:$0xff]
  %v46 = vld [vmem:[%s1 + $0x18] sm:$0xff]
  %v47 = vld [vmem:[%s2] sm:$0x3]
  %v49 = vlaneseq
  %v50 = vshrl.u32 %v49, 7
  %v51 = vsub.s32 0, %v50
  %v52 = vrot.slane %v47, %v51
  %v53 = vlaneseq
  %v54 = vshrl.u32 %v53, 7
  %v55 = vsub.s32 1, %v54
  %v56 = vrot.slane %v47, %v55
  %vm59 = vcmask 130048
  %v61 = vsel %vm59, %v35, 0
  %v64 = vsel %vm59, %v36, 0
  %v67 = vsel %vm59, %v37, 0
  %v70 = vsel %vm59, %v38, 0
  %v73 = vsel %vm59, %v39, 0
  %v76 = vsel %vm59, %v40, 0
  %v79 = vsel %vm59, %v41, 0
  %v82 = vsel %vm59, %v42, 0
  %84 = vmatprep.subr.mxu0 %v44
  %85 = vmatpush1.msra.mxu0 %v43
  %86 = vmatprep.subr.mxu0 %v46
  %87 = vmatpush1.msra.mxu0 %v45
  %88 = vmatprep.subr.mxu0 0.0
  %89 = vmatpush1.msra.mxu0 0.0
  %90 = vmatprep.subr.mxu0 0.0
  %91 = vmatpush1.msra.mxu0 0.0
  %92 = vmatprep.subr.mxu0 0.0
  %93 = vmatpush1.msra.mxu0 0.0
  %94 = vmatprep.subr.mxu0 0.0
  %95 = vmatpush1.msra.mxu0 0.0
  %96 = vmatprep.subr.mxu0 0.0
  %97 = vmatpush1.msra.mxu0 0.0
  %98 = vmatprep.subr.mxu0 0.0
  %99 = vmatpush1.msra.mxu0 0.0
  %100 = vmatprep.subr.mxu0 0.0
  %101 = vmatpush1.msra.mxu0 0.0
  %102 = vmatprep.subr.mxu0 0.0
  %103 = vmatpush1.msra.mxu0 0.0
  %104 = vmatprep.subr.mxu0 0.0
  %105 = vmatpush1.msra.mxu0 0.0
  %106 = vmatprep.subr.mxu0 0.0
  %107 = vmatpush1.msra.mxu0 0.0
  %108 = vmatprep.subr.mxu0 0.0
  %109 = vmatpush1.msra.mxu0 0.0
  %110 = vmatprep.subr.mxu0 0.0
  %111 = vmatpush1.msra.mxu0 0.0
  %112 = vmatprep.subr.mxu0 0.0
  %113 = vmatpush1.msra.mxu0 0.0
  %114 = vmatprep.subr.mxu0 0.0
  %115 = vmatpush1.msra.mxu0 0.0
  %116 = vmatprep.subr.mxu0 0.0
  %117 = vmatpush1.msra.mxu0 0.0
  %118 = vmatprep.subr.mxu0 0.0
  %119 = vmatpush1.msra.mxu0 0.0
  %120 = vmatprep.subr.mxu0 0.0
  %121 = vmatpush1.msra.mxu0 0.0
  %122 = vmatprep.subr.mxu0 0.0
  %123 = vmatpush1.msra.mxu0 0.0
  %124 = vmatprep.subr.mxu0 0.0
  %125 = vmatpush1.msra.mxu0 0.0
  %126 = vmatprep.subr.mxu0 0.0
  %127 = vmatpush1.msra.mxu0 0.0
  %128 = vmatprep.subr.mxu0 0.0
  %129 = vmatpush1.msra.mxu0 0.0
  %130 = vmatprep.subr.mxu0 0.0
  %131 = vmatpush1.msra.mxu0 0.0
  %132 = vmatprep.subr.mxu0 0.0
  %133 = vmatpush1.msra.mxu0 0.0
  %134 = vmatprep.subr.mxu0 0.0
  %135 = vmatpush1.msra.mxu0 0.0
  %136 = vmatprep.subr.mxu0 0.0
  %137 = vmatpush1.msra.mxu0 0.0
  %138 = vmatprep.subr.mxu0 0.0
  %139 = vmatpush1.msra.mxu0 0.0
  %140 = vmatprep.subr.mxu0 0.0
  %141 = vmatpush1.msra.mxu0 0.0
  %142 = vmatprep.subr.mxu0 0.0
  %143 = vmatpush1.msra.mxu0 0.0
  %144 = vmatprep.subr.mxu0 0.0
  %145 = vmatpush1.msra.mxu0 0.0
  %146 = vmatprep.subr.mxu0 0.0
  %147 = vmatpush1.msra.mxu0 0.0
  %148 = vmatprep.mubr.f32.mxu0 0.0
  %149 = vmatmul.mubr.f32.gmra.mrb[0].mxu0 %v61
  %v150 = vpop.f32.mrb[0].mxu0
  %v151 = vadd.f32 %v52, %v150
  %v152 = vpop.f32.mrb[0].mxu0
  %v153 = vadd.f32 %v56, %v152
  %154 = vmatprep.mubr.f32.mxu0 0.0
  %155 = vmatmul.mubr.f32.gmra.mrb[0].mxu0 %v64
  %v156 = vpop.f32.mrb[0].mxu0
  %v157 = vadd.f32 %v52, %v156
  %v158 = vpop.f32.mrb[0].mxu0
  %v159 = vadd.f32 %v56, %v158
  %160 = vmatprep.mubr.f32.mxu0 0.0
  %161 = vmatmul.mubr.f32.gmra.mrb[0].mxu0 %v67
  %v162 = vpop.f32.mrb[0].mxu0
  %v163 = vadd.f32 %v52, %v162
  %v164 = vpop.f32.mrb[0].mxu0
  %v165 = vadd.f32 %v56, %v164
  %166 = vmatprep.mubr.f32.mxu0 0.0
  %167 = vmatmul.mubr.f32.gmra.mrb[0].mxu0 %v70
  %v168 = vpop.f32.mrb[0].mxu0
  %v169 = vadd.f32 %v52, %v168
  %v170 = vpop.f32.mrb[0].mxu0
  %v171 = vadd.f32 %v56, %v170
  %172 = vmatprep.mubr.f32.mxu0 0.0
  %173 = vmatmul.mubr.f32.gmra.mrb[0].mxu0 %v73
  %v174 = vpop.f32.mrb[0].mxu0
  %v175 = vadd.f32 %v52, %v174
  %v176 = vpop.f32.mrb[0].mxu0
  %v177 = vadd.f32 %v56, %v176
  %178 = vmatprep.mubr.f32.mxu0 0.0
  %179 = vmatmul.mubr.f32.gmra.mrb[0].mxu0 %v76
  %v180 = vpop.f32.mrb[0].mxu0
  %v181 = vadd.f32 %v52, %v180
  %v182 = vpop.f32.mrb[0].mxu0
  %v183 = vadd.f32 %v56, %v182
  %184 = vmatprep.mubr.f32.mxu0 0.0
  %185 = vmatmul.mubr.f32.gmra.mrb[0].mxu0 %v79
  %v186 = vpop.f32.mrb[0].mxu0
  %v187 = vadd.f32 %v52, %v186
  %v188 = vpop.f32.mrb[0].mxu0
  %v189 = vadd.f32 %v56, %v188
  %190 = vmatprep.mubr.f32.mxu0 0.0
  %191 = vmatmul.mubr.f32.gmra.mrb[0].mxu0 %v82
  %v192 = vpop.f32.mrb[0].mxu0
  %v193 = vadd.f32 %v52, %v192
  %v194 = vpop.f32.mrb[0].mxu0
  %v195 = vadd.f32 %v56, %v194
  %196 = vdwg.mxu0
  %197 = vst [vmem:[#allocation2] sm:$0xff] %v151
  %198 = vst [vmem:[#allocation2 + $0x8] sm:$0xff] %v153
  %199 = vst [vmem:[#allocation2 + $0x10] sm:$0xff] %v157
  %200 = vst [vmem:[#allocation2 + $0x18] sm:$0xff] %v159
  %201 = vst [vmem:[#allocation2 + $0x20] sm:$0xff] %v163
  %202 = vst [vmem:[#allocation2 + $0x28] sm:$0xff] %v165
  %203 = vst [vmem:[#allocation2 + $0x30] sm:$0xff] %v169
  %204 = vst [vmem:[#allocation2 + $0x38] sm:$0xff] %v171
  %205 = vst [vmem:[#allocation2 + $0x40] sm:$0xff] %v175
  %206 = vst [vmem:[#allocation2 + $0x48] sm:$0xff] %v177
  %207 = vst [vmem:[#allocation2 + $0x50] sm:$0xff] %v181
  %208 = vst [vmem:[#allocation2 + $0x58] sm:$0xff] %v183
  %209 = vst [vmem:[#allocation2 + $0x60] sm:$0xff] %v187
  %210 = vst [vmem:[#allocation2 + $0x68] sm:$0xff] %v189
  %211 = vst [vmem:[#allocation2 + $0x70] sm:$0xff] %v193
  %212 = vst [vmem:[#allocation2 + $0x78] sm:$0xff] %v195
  %v213 = vld [vmem:[%s3] sm:$0xff]
  %v214 = vld [vmem:[%s3 + $0x8] sm:$0xff]
  %v215 = vld [vmem:[%s3 + $0x10] sm:$0xff]
  %v216 = vld [vmem:[%s3 + $0x18] sm:$0xff]
  %v217 = vld [vmem:[%s4] sm:$0xff]
  %v218 = vld [vmem:[%s4 + $0x8] sm:$0xff]
  %v219 = vld [vmem:[%s4 + $0x10] sm:$0xff]
  %v220 = vld [vmem:[%s4 + $0x18] sm:$0xff]
  %vm221 = vcmask 261120
  %v223 = vsel %vm221, 0.0, 0
  %225 = vmatprep.subr.mxu0 0.0
  %226 = vmatpush1.msra.mxu0 %v213
  %227 = vmatprep.subr.mxu0 0.0
  %228 = vmatpush1.msra.mxu0 %v214
  %229 = vmatprep.subr.mxu0 0.0
  %230 = vmatpush1.msra.mxu0 %v215
  %231 = vmatprep.subr.mxu0 0.0
  %232 = vmatpush1.msra.mxu0 %v216
  %233 = vmatprep.subr.mxu0 0.0
  %234 = vmatpush1.msra.mxu0 0.0
  %235 = vmatprep.subr.mxu0 0.0
  %236 = vmatpush1.msra.mxu0 0.0
  %237 = vmatprep.subr.mxu0 0.0
  %238 = vmatpush1.msra.mxu0 0.0
  %239 = vmatprep.subr.mxu0 0.0
  %240 = vmatpush1.msra.mxu0 0.0
  %241 = vmatprep.subr.mxu0 0.0
  %242 = vmatpush1.msra.mxu0 0.0
  %243 = vmatprep.subr.mxu0 0.0
  %244 = vmatpush1.msra.mxu0 0.0
  %245 = vmatprep.subr.mxu0 0.0
  %246 = vmatpush1.msra.mxu0 0.0
  %247 = vmatprep.subr.mxu0 0.0
  %248 = vmatpush1.msra.mxu0 0.0
  %249 = vmatprep.subr.mxu0 0.0
  %250 = vmatpush1.msra.mxu0 0.0
  %251 = vmatprep.subr.mxu0 0.0
  %252 = vmatpush1.msra.mxu0 0.0
  %253 = vmatprep.subr.mxu0 0.0
  %254 = vmatpush1.msra.mxu0 0.0
  %255 = vmatprep.subr.mxu0 0.0
  %256 = vmatpush1.msra.mxu0 0.0
  %257 = vmatprep.subr.mxu0 0.0
  %258 = vmatpush1.msra.mxu0 0.0
  %259 = vmatprep.subr.mxu0 0.0
  %260 = vmatpush1.msra.mxu0 0.0
  %261 = vmatprep.subr.mxu0 0.0
  %262 = vmatpush1.msra.mxu0 0.0
  %263 = vmatprep.subr.mxu0 0.0
  %264 = vmatpush1.msra.mxu0 0.0
  %265 = vmatprep.subr.mxu0 0.0
  %266 = vmatpush1.msra.mxu0 0.0
  %267 = vmatprep.subr.mxu0 0.0
  %268 = vmatpush1.msra.mxu0 0.0
  %269 = vmatprep.subr.mxu0 0.0
  %270 = vmatpush1.msra.mxu0 0.0
  %271 = vmatprep.subr.mxu0 0.0
  %272 = vmatpush1.msra.mxu0 0.0
  %273 = vmatprep.subr.mxu0 0.0
  %274 = vmatpush1.msra.mxu0 0.0
  %275 = vmatprep.subr.mxu0 0.0
  %276 = vmatpush1.msra.mxu0 0.0
  %277 = vmatprep.subr.mxu0 0.0
  %278 = vmatpush1.msra.mxu0 0.0
  %279 = vmatprep.subr.mxu0 0.0
  %280 = vmatpush1.msra.mxu0 0.0
  %281 = vmatprep.subr.mxu0 0.0
  %282 = vmatpush1.msra.mxu0 0.0
  %283 = vmatprep.subr.mxu0 0.0
  %284 = vmatpush1.msra.mxu0 0.0
  %285 = vmatprep.subr.mxu0 0.0
  %286 = vmatpush1.msra.mxu0 0.0
  %287 = vmatprep.subr.mxu0 0.0
  %288 = vmatpush1.msra.mxu0 0.0
  %289 = vmatprep.mubr.f32.mxu0 0.0
  %290 = vmatmul.mubr.f32.gmra.mrb[0].mxu0 %v223
  %v291 = vpop.f32.mrb[0].mxu0
  %v292 = vadd.f32 0.0, %v291
  %v293 = vpop.f32.mrb[0].mxu0
  %294 = vdwg.mxu0
  %295 = vmatprep.subr.mxu0 0.0
  %296 = vmatpush1.msra.mxu0 %v217
  %297 = vmatprep.subr.mxu0 0.0
  %298 = vmatpush1.msra.mxu0 %v218
  %299 = vmatprep.subr.mxu0 0.0
  %300 = vmatpush1.msra.mxu0 %v219
  %301 = vmatprep.subr.mxu0 0.0
  %302 = vmatpush1.msra.mxu0 %v220
  %303 = vmatprep.subr.mxu0 0.0
  %304 = vmatpush1.msra.mxu0 0.0
  %305 = vmatprep.subr.mxu0 0.0
  %306 = vmatpush1.msra.mxu0 0.0
  %307 = vmatprep.subr.mxu0 0.0
  %308 = vmatpush1.msra.mxu0 0.0
  %309 = vmatprep.subr.mxu0 0.0
  %310 = vmatpush1.msra.mxu0 0.0
  %311 = vmatprep.subr.mxu0 0.0
  %312 = vmatpush1.msra.mxu0 0.0
  %313 = vmatprep.subr.mxu0 0.0
  %314 = vmatpush1.msra.mxu0 0.0
  %315 = vmatprep.subr.mxu0 0.0
  %316 = vmatpush1.msra.mxu0 0.0
  %317 = vmatprep.subr.mxu0 0.0
  %318 = vmatpush1.msra.mxu0 0.0
  %319 = vmatprep.subr.mxu0 0.0
  %320 = vmatpush1.msra.mxu0 0.0
  %321 = vmatprep.subr.mxu0 0.0
  %322 = vmatpush1.msra.mxu0 0.0
  %323 = vmatprep.subr.mxu0 0.0
  %324 = vmatpush1.msra.mxu0 0.0
  %325 = vmatprep.subr.mxu0 0.0
  %326 = vmatpush1.msra.mxu0 0.0
  %327 = vmatprep.subr.mxu0 0.0
  %328 = vmatpush1.msra.mxu0 0.0
  %329 = vmatprep.subr.mxu0 0.0
  %330 = vmatpush1.msra.mxu0 0.0
  %331 = vmatprep.subr.mxu0 0.0
  %332 = vmatpush1.msra.mxu0 0.0
  %333 = vmatprep.subr.mxu0 0.0
  %334 = vmatpush1.msra.mxu0 0.0
  %335 = vmatprep.subr.mxu0 0.0
  %336 = vmatpush1.msra.mxu0 0.0
  %337 = vmatprep.subr.mxu0 0.0
  %338 = vmatpush1.msra.mxu0 0.0
  %339 = vmatprep.subr.mxu0 0.0
  %340 = vmatpush1.msra.mxu0 0.0
  %341 = vmatprep.subr.mxu0 0.0
  %342 = vmatpush1.msra.mxu0 0.0
  %343 = vmatprep.subr.mxu0 0.0
  %344 = vmatpush1.msra.mxu0 0.0
  %345 = vmatprep.subr.mxu0 0.0
  %346 = vmatpush1.msra.mxu0 0.0
  %347 = vmatprep.subr.mxu0 0.0
  %348 = vmatpush1.msra.mxu0 0.0
  %349 = vmatprep.subr.mxu0 0.0
  %350 = vmatpush1.msra.mxu0 0.0
  %351 = vmatprep.subr.mxu0 0.0
  %352 = vmatpush1.msra.mxu0 0.0
  %353 = vmatprep.subr.mxu0 0.0
  %354 = vmatpush1.msra.mxu0 0.0
  %355 = vmatprep.subr.mxu0 0.0
  %356 = vmatpush1.msra.mxu0 0.0
  %357 = vmatprep.subr.mxu0 0.0
  %358 = vmatpush1.msra.mxu0 0.0
  %359 = vmatprep.mubr.f32.mxu0 0.0
  %360 = vmatmul.mubr.f32.gmra.mrb[0].mxu0 %v223
  %v361 = vpop.f32.mrb[0].mxu0
  %v362 = vadd.f32 0.0, %v361
  %v363 = vpop.f32.mrb[0].mxu0
  %364 = vdwg.mxu0
  %v365 = vld [vmem:[#allocation2] sm:$0xff]
  %s366 = scalar_lea.vmem [#allocation2], 112
  %v367 = vld [vmem:[%s366 + $0x8] sm:$0xff]
  %v368 = vadd.f32 %v365, %v292
  %v369 = vxor.u32 %v368, 2147483648
  %v370 = vmul.f32 %v369, 1.442695
  %v371 = vpow.pop %v370
  %v372 = vadd.f32 %v371, 1.0
  %v373 = vrcp.pop %v372
  %v374 = vmul.f32 1.0, %v373
  %v375 = vtanh.pop %v368
  %v376 = vmul.f32 %v374, 0.0
  %378 = vrot.lane.b32.xlu0 %v375, 64
  %v379 = vpop.permute.xlu0 %378
  %v381 = vmul.f32 %v374, %v379
  %383 = vrot.lane.b32.xlu0 %v381, 32
  %v384 = vpop.permute.xlu0 %383
  %v386 = vadd.f32 %v376, %v384
  %v387 = vtanh.pop %v386
  %389 = vrot.lane.b32.xlu0 %v387, 64
  %v390 = vpop.permute.xlu0 %389
  %v392 = vmul.f32 %v374, %v390
  %v393 = vadd.f32 %v367, %v362
  %v394 = vxor.u32 %v393, 2147483648
  %v395 = vmul.f32 %v394, 1.442695
  %v396 = vpow.pop %v395
  %v397 = vadd.f32 %v396, 1.0
  %v398 = vrcp.pop %v397
  %v399 = vmul.f32 1.0, %v398
  %v400 = vtanh.pop %v393
  %v401 = vmul.f32 %v399, 0.0
  %403 = vrot.lane.b32.xlu0 %v400, 64
  %v404 = vpop.permute.xlu0 %403
  %v406 = vmul.f32 %v399, %v404
  %408 = vrot.lane.b32.xlu0 %v406, 32
  %v409 = vpop.permute.xlu0 %408
  %v411 = vadd.f32 %v401, %v409
  %v412 = vtanh.pop %v411
  %414 = vrot.lane.b32.xlu0 %v412, 64
  %v415 = vpop.permute.xlu0 %414
  %v417 = vmul.f32 %v399, %v415
  %419 = vrot.lane.b32.xlu0 %v392, 32
  %v420 = vpop.permute.xlu0 %419
  %422 = vst.msk [vmem:[#allocation3] sm:$0xff] %vm221, %v420
  %424 = vrot.lane.b32.xlu0 %v417, 64
  %v425 = vpop.permute.xlu0 %424
  %s427 = scalar_lea.vmem [#allocation3], 56
  %vm428 = vcmask 523520
  %429 = vst.msk [vmem:[%s427] sm:$0xff] %vm428, %v425
  %v430 = vsel %vm221, %v420, 0
  %432 = vmatprep.subr.mxu0 0.0
  %433 = vmatpush1.msra.mxu0 %v213
  %434 = vmatprep.subr.mxu0 0.0
  %435 = vmatpush1.msra.mxu0 %v214
  %436 = vmatprep.subr.mxu0 0.0
  %437 = vmatpush1.msra.mxu0 %v215
  %438 = vmatprep.subr.mxu0 0.0
  %439 = vmatpush1.msra.mxu0 %v216
  %440 = vmatprep.subr.mxu0 0.0
  %441 = vmatpush1.msra.mxu0 0.0
  %442 = vmatprep.subr.mxu0 0.0
  %443 = vmatpush1.msra.mxu0 0.0
  %444 = vmatprep.subr.mxu0 0.0
  %445 = vmatpush1.msra.mxu0 0.0
  %446 = vmatprep.subr.mxu0 0.0
  %447 = vmatpush1.msra.mxu0 0.0
  %448 = vmatprep.subr.mxu0 0.0
  %449 = vmatpush1.msra.mxu0 0.0
  %450 = vmatprep.subr.mxu0 0.0
  %451 = vmatpush1.msra.mxu0 0.0
  %452 = vmatprep.subr.mxu0 0.0
  %453 = vmatpush1.msra.mxu0 0.0
  %454 = vmatprep.subr.mxu0 0.0
  %455 = vmatpush1.msra.mxu0 0.0
  %456 = vmatprep.subr.mxu0 0.0
  %457 = vmatpush1.msra.mxu0 0.0
  %458 = vmatprep.subr.mxu0 0.0
  %459 = vmatpush1.msra.mxu0 0.0
  %460 = vmatprep.subr.mxu0 0.0
  %461 = vmatpush1.msra.mxu0 0.0
  %462 = vmatprep.subr.mxu0 0.0
  %463 = vmatpush1.msra.mxu0 0.0
  %464 = vmatprep.subr.mxu0 0.0
  %465 = vmatpush1.msra.mxu0 0.0
  %466 = vmatprep.subr.mxu0 0.0
  %467 = vmatpush1.msra.mxu0 0.0
  %468 = vmatprep.subr.mxu0 0.0
  %469 = vmatpush1.msra.mxu0 0.0
  %470 = vmatprep.subr.mxu0 0.0
  %471 = vmatpush1.msra.mxu0 0.0
  %472 = vmatprep.subr.mxu0 0.0
  %473 = vmatpush1.msra.mxu0 0.0
  %474 = vmatprep.subr.mxu0 0.0
  %475 = vmatpush1.msra.mxu0 0.0
  %476 = vmatprep.subr.mxu0 0.0
  %477 = vmatpush1.msra.mxu0 0.0
  %478 = vmatprep.subr.mxu0 0.0
  %479 = vmatpush1.msra.mxu0 0.0
  %480 = vmatprep.subr.mxu0 0.0
  %481 = vmatpush1.msra.mxu0 0.0
  %482 = vmatprep.subr.mxu0 0.0
  %483 = vmatpush1.msra.mxu0 0.0
  %484 = vmatprep.subr.mxu0 0.0
  %485 = vmatpush1.msra.mxu0 0.0
  %486 = vmatprep.subr.mxu0 0.0
  %487 = vmatpush1.msra.mxu0 0.0
  %488 = vmatprep.subr.mxu0 0.0
  %489 = vmatpush1.msra.mxu0 0.0
  %490 = vmatprep.subr.mxu0 0.0
  %491 = vmatpush1.msra.mxu0 0.0
  %492 = vmatprep.subr.mxu0 0.0
  %493 = vmatpush1.msra.mxu0 0.0
  %494 = vmatprep.subr.mxu0 0.0
  %495 = vmatpush1.msra.mxu0 0.0
  %496 = vmatprep.mubr.f32.mxu0 0.0
  %497 = vmatmul.mubr.f32.gmra.mrb[0].mxu0 %v430
  %v498 = vpop.f32.mrb[0].mxu0
  %v499 = vadd.f32 0.0, %v498
  %v500 = vpop.f32.mrb[0].mxu0
  %501 = vdwg.mxu0
  %502 = vrot.lane.b32.xlu0 %v417, 32
  %v503 = vpop.permute.xlu0 %502
  %v504 = vsel %vm221, %v503, 0
  %506 = vmatprep.subr.mxu0 0.0
  %507 = vmatpush1.msra.mxu0 %v217
  %508 = vmatprep.subr.mxu0 0.0
  %509 = vmatpush1.msra.mxu0 %v218
  %510 = vmatprep.subr.mxu0 0.0
  %511 = vmatpush1.msra.mxu0 %v219
  %512 = vmatprep.subr.mxu0 0.0
  %513 = vmatpush1.msra.mxu0 %v220
  %514 = vmatprep.subr.mxu0 0.0
  %515 = vmatpush1.msra.mxu0 0.0
  %516 = vmatprep.subr.mxu0 0.0
  %517 = vmatpush1.msra.mxu0 0.0
  %518 = vmatprep.subr.mxu0 0.0
  %519 = vmatpush1.msra.mxu0 0.0
  %520 = vmatprep.subr.mxu0 0.0
  %521 = vmatpush1.msra.mxu0 0.0
  %522 = vmatprep.subr.mxu0 0.0
  %523 = vmatpush1.msra.mxu0 0.0
  %524 = vmatprep.subr.mxu0 0.0
  %525 = vmatpush1.msra.mxu0 0.0
  %526 = vmatprep.subr.mxu0 0.0
  %527 = vmatpush1.msra.mxu0 0.0
  %528 = vmatprep.subr.mxu0 0.0
  %529 = vmatpush1.msra.mxu0 0.0
  %530 = vmatprep.subr.mxu0 0.0
  %531 = vmatpush1.msra.mxu0 0.0
  %532 = vmatprep.subr.mxu0 0.0
  %533 = vmatpush1.msra.mxu0 0.0
  %534 = vmatprep.subr.mxu0 0.0
  %535 = vmatpush1.msra.mxu0 0.0
  %536 = vmatprep.subr.mxu0 0.0
  %537 = vmatpush1.msra.mxu0 0.0
  %538 = vmatprep.subr.mxu0 0.0
  %539 = vmatpush1.msra.mxu0 0.0
  %540 = vmatprep.subr.mxu0 0.0
  %541 = vmatpush1.msra.mxu0 0.0
  %542 = vmatprep.subr.mxu0 0.0
  %543 = vmatpush1.msra.mxu0 0.0
  %544 = vmatprep.subr.mxu0 0.0
  %545 = vmatpush1.msra.mxu0 0.0
  %546 = vmatprep.subr.mxu0 0.0
  %547 = vmatpush1.msra.mxu0 0.0
  %548 = vmatprep.subr.mxu0 0.0
  %549 = vmatpush1.msra.mxu0 0.0
  %550 = vmatprep.subr.mxu0 0.0
  %551 = vmatpush1.msra.mxu0 0.0
  %552 = vmatprep.subr.mxu0 0.0
  %553 = vmatpush1.msra.mxu0 0.0
  %554 = vmatprep.subr.mxu0 0.0
  %555 = vmatpush1.msra.mxu0 0.0
  %556 = vmatprep.subr.mxu0 0.0
  %557 = vmatpush1.msra.mxu0 0.0
  %558 = vmatprep.subr.mxu0 0.0
  %559 = vmatpush1.msra.mxu0 0.0
  %560 = vmatprep.subr.mxu0 0.0
  %561 = vmatpush1.msra.mxu0 0.0
  %562 = vmatprep.subr.mxu0 0.0
  %563 = vmatpush1.msra.mxu0 0.0
  %564 = vmatprep.subr.mxu0 0.0
  %565 = vmatpush1.msra.mxu0 0.0
  %566 = vmatprep.subr.mxu0 0.0
  %567 = vmatpush1.msra.mxu0 0.0
  %568 = vmatprep.subr.mxu0 0.0
  %569 = vmatpush1.msra.mxu0 0.0
  %570 = vmatprep.mubr.f32.mxu0 0.0
  %571 = vmatmul.mubr.f32.gmra.mrb[0].mxu0 %v504
  %v572 = vpop.f32.mrb[0].mxu0
  %v573 = vadd.f32 0.0, %v572
  %v574 = vpop.f32.mrb[0].mxu0
  %575 = vdwg.mxu0
  %s576 = scalar_lea.vmem [#allocation2], 16
  %v577 = vld [vmem:[%s576] sm:$0xff]
  %s578 = scalar_lea.vmem [#allocation2], 96
  %v579 = vld [vmem:[%s578 + $0x8] sm:$0xff]
  %v580 = vadd.f32 %v577, %v499
  %v581 = vxor.u32 %v580, 2147483648
  %v582 = vmul.f32 %v581, 1.442695
  %v583 = vpow.pop %v582
  %v584 = vadd.f32 %v583, 1.0
  %v585 = vrcp.pop %v584
  %v586 = vmul.f32 1.0, %v585
  %v587 = vtanh.pop %v580
  %v588 = vmul.f32 %v586, %v386
  %590 = vrot.lane.b32.xlu0 %v587, 64
  %v591 = vpop.permute.xlu0 %590
  %v593 = vmul.f32 %v586, %v591
  %595 = vrot.lane.b32.xlu0 %v593, 32
  %v596 = vpop.permute.xlu0 %595
  %v598 = vadd.f32 %v588, %v596
  %v599 = vtanh.pop %v598
  %601 = vrot.lane.b32.xlu0 %v599, 64
  %v602 = vpop.permute.xlu0 %601
  %v604 = vmul.f32 %v586, %v602
  %v605 = vadd.f32 %v579, %v573
  %v606 = vxor.u32 %v605, 2147483648
  %v607 = vmul.f32 %v606, 1.442695
  %v608 = vpow.pop %v607
  %v609 = vadd.f32 %v608, 1.0
  %v610 = vrcp.pop %v609
  %v611 = vmul.f32 1.0, %v610
  %v612 = vtanh.pop %v605
  %v613 = vmul.f32 %v611, %v411
  %615 = vrot.lane.b32.xlu0 %v612, 64
  %v616 = vpop.permute.xlu0 %615
  %v618 = vmul.f32 %v611, %v616
  %620 = vrot.lane.b32.xlu0 %v618, 32
  %v621 = vpop.permute.xlu0 %620
  %v623 = vadd.f32 %v613, %v621
  %v624 = vtanh.pop %v623
  %626 = vrot.lane.b32.xlu0 %v624, 64
  %v627 = vpop.permute.xlu0 %626
  %v629 = vmul.f32 %v611, %v627
  %631 = vrot.lane.b32.xlu0 %v604, 32
  %v632 = vpop.permute.xlu0 %631
  %s634 = scalar_lea.vmem [#allocation3], 8
  %635 = vst.msk [vmem:[%s634] sm:$0xff] %vm221, %v632
  %637 = vrot.lane.b32.xlu0 %v629, 64
  %v638 = vpop.permute.xlu0 %637
  %s640 = scalar_lea.vmem [#allocation3], 48
  %641 = vst.msk [vmem:[%s640] sm:$0xff] %vm428, %v638
  %v642 = vsel %vm221, %v632, 0
  %644 = vmatprep.subr.mxu0 0.0
  %645 = vmatpush1.msra.mxu0 %v213
  %646 = vmatprep.subr.mxu0 0.0
  %647 = vmatpush1.msra.mxu0 %v214
  %648 = vmatprep.subr.mxu0 0.0
  %649 = vmatpush1.msra.mxu0 %v215
  %650 = vmatprep.subr.mxu0 0.0
  %651 = vmatpush1.msra.mxu0 %v216
  %652 = vmatprep.subr.mxu0 0.0
  %653 = vmatpush1.msra.mxu0 0.0
  %654 = vmatprep.subr.mxu0 0.0
  %655 = vmatpush1.msra.mxu0 0.0
  %656 = vmatprep.subr.mxu0 0.0
  %657 = vmatpush1.msra.mxu0 0.0
  %658 = vmatprep.subr.mxu0 0.0
  %659 = vmatpush1.msra.mxu0 0.0
  %660 = vmatprep.subr.mxu0 0.0
  %661 = vmatpush1.msra.mxu0 0.0
  %662 = vmatprep.subr.mxu0 0.0
  %663 = vmatpush1.msra.mxu0 0.0
  %664 = vmatprep.subr.mxu0 0.0
  %665 = vmatpush1.msra.mxu0 0.0
  %666 = vmatprep.subr.mxu0 0.0
  %667 = vmatpush1.msra.mxu0 0.0
  %668 = vmatprep.subr.mxu0 0.0
  %669 = vmatpush1.msra.mxu0 0.0
  %670 = vmatprep.subr.mxu0 0.0
  %671 = vmatpush1.msra.mxu0 0.0
  %672 = vmatprep.subr.mxu0 0.0
  %673 = vmatpush1.msra.mxu0 0.0
  %674 = vmatprep.subr.mxu0 0.0
  %675 = vmatpush1.msra.mxu0 0.0
  %676 = vmatprep.subr.mxu0 0.0
  %677 = vmatpush1.msra.mxu0 0.0
  %678 = vmatprep.subr.mxu0 0.0
  %679 = vmatpush1.msra.mxu0 0.0
  %680 = vmatprep.subr.mxu0 0.0
  %681 = vmatpush1.msra.mxu0 0.0
  %682 = vmatprep.subr.mxu0 0.0
  %683 = vmatpush1.msra.mxu0 0.0
  %684 = vmatprep.subr.mxu0 0.0
  %685 = vmatpush1.msra.mxu0 0.0
  %686 = vmatprep.subr.mxu0 0.0
  %687 = vmatpush1.msra.mxu0 0.0
  %688 = vmatprep.subr.mxu0 0.0
  %689 = vmatpush1.msra.mxu0 0.0
  %690 = vmatprep.subr.mxu0 0.0
  %691 = vmatpush1.msra.mxu0 0.0
  %692 = vmatprep.subr.mxu0 0.0
  %693 = vmatpush1.msra.mxu0 0.0
  %694 = vmatprep.subr.mxu0 0.0
  %695 = vmatpush1.msra.mxu0 0.0
  %696 = vmatprep.subr.mxu0 0.0
  %697 = vmatpush1.msra.mxu0 0.0
  %698 = vmatprep.subr.mxu0 0.0
  %699 = vmatpush1.msra.mxu0 0.0
  %700 = vmatprep.subr.mxu0 0.0
  %701 = vmatpush1.msra.mxu0 0.0
  %702 = vmatprep.subr.mxu0 0.0
  %703 = vmatpush1.msra.mxu0 0.0
  %704 = vmatprep.subr.mxu0 0.0
  %705 = vmatpush1.msra.mxu0 0.0
  %706 = vmatprep.subr.mxu0 0.0
  %707 = vmatpush1.msra.mxu0 0.0
  %708 = vmatprep.mubr.f32.mxu0 0.0
  %709 = vmatmul.mubr.f32.gmra.mrb[0].mxu0 %v642
  %v710 = vpop.f32.mrb[0].mxu0
  %v711 = vadd.f32 0.0, %v710
  %v712 = vpop.f32.mrb[0].mxu0
  %713 = vdwg.mxu0
  %714 = vrot.lane.b32.xlu0 %v629, 32
  %v715 = vpop.permute.xlu0 %714
  %v716 = vsel %vm221, %v715, 0
  %718 = vmatprep.subr.mxu0 0.0
  %719 = vmatpush1.msra.mxu0 %v217
  %720 = vmatprep.subr.mxu0 0.0
  %721 = vmatpush1.msra.mxu0 %v218
  %722 = vmatprep.subr.mxu0 0.0
  %723 = vmatpush1.msra.mxu0 %v219
  %724 = vmatprep.subr.mxu0 0.0
  %725 = vmatpush1.msra.mxu0 %v220
  %726 = vmatprep.subr.mxu0 0.0
  %727 = vmatpush1.msra.mxu0 0.0
  %728 = vmatprep.subr.mxu0 0.0
  %729 = vmatpush1.msra.mxu0 0.0
  %730 = vmatprep.subr.mxu0 0.0
  %731 = vmatpush1.msra.mxu0 0.0
  %732 = vmatprep.subr.mxu0 0.0
  %733 = vmatpush1.msra.mxu0 0.0
  %734 = vmatprep.subr.mxu0 0.0
  %735 = vmatpush1.msra.mxu0 0.0
  %736 = vmatprep.subr.mxu0 0.0
  %737 = vmatpush1.msra.mxu0 0.0
  %738 = vmatprep.subr.mxu0 0.0
  %739 = vmatpush1.msra.mxu0 0.0
  %740 = vmatprep.subr.mxu0 0.0
  %741 = vmatpush1.msra.mxu0 0.0
  %742 = vmatprep.subr.mxu0 0.0
  %743 = vmatpush1.msra.mxu0 0.0
  %744 = vmatprep.subr.mxu0 0.0
  %745 = vmatpush1.msra.mxu0 0.0
  %746 = vmatprep.subr.mxu0 0.0
  %747 = vmatpush1.msra.mxu0 0.0
  %748 = vmatprep.subr.mxu0 0.0
  %749 = vmatpush1.msra.mxu0 0.0
  %750 = vmatprep.subr.mxu0 0.0
  %751 = vmatpush1.msra.mxu0 0.0
  %752 = vmatprep.subr.mxu0 0.0
  %753 = vmatpush1.msra.mxu0 0.0
  %754 = vmatprep.subr.mxu0 0.0
  %755 = vmatpush1.msra.mxu0 0.0
  %756 = vmatprep.subr.mxu0 0.0
  %757 = vmatpush1.msra.mxu0 0.0
  %758 = vmatprep.subr.mxu0 0.0
  %759 = vmatpush1.msra.mxu0 0.0
  %760 = vmatprep.subr.mxu0 0.0
  %761 = vmatpush1.msra.mxu0 0.0
  %762 = vmatprep.subr.mxu0 0.0
  %763 = vmatpush1.msra.mxu0 0.0
  %764 = vmatprep.subr.mxu0 0.0
  %765 = vmatpush1.msra.mxu0 0.0
  %766 = vmatprep.subr.mxu0 0.0
  %767 = vmatpush1.msra.mxu0 0.0
  %768 = vmatprep.subr.mxu0 0.0
  %769 = vmatpush1.msra.mxu0 0.0
  %770 = vmatprep.subr.mxu0 0.0
  %771 = vmatpush1.msra.mxu0 0.0
  %772 = vmatprep.subr.mxu0 0.0
  %773 = vmatpush1.msra.mxu0 0.0
  %774 = vmatprep.subr.mxu0 0.0
  %775 = vmatpush1.msra.mxu0 0.0
  %776 = vmatprep.subr.mxu0 0.0
  %777 = vmatpush1.msra.mxu0 0.0
  %778 = vmatprep.subr.mxu0 0.0
  %779 = vmatpush1.msra.mxu0 0.0
  %780 = vmatprep.subr.mxu0 0.0
  %781 = vmatpush1.msra.mxu0 0.0
  %782 = vmatprep.mubr.f32.mxu0 0.0
  %783 = vmatmul.mubr.f32.gmra.mrb[0].mxu0 %v716
  %v784 = vpop.f32.mrb[0].mxu0
  %v785 = vadd.f32 0.0, %v784
  %v786 = vpop.f32.mrb[0].mxu0
  %787 = vdwg.mxu0
  %s788 = scalar_lea.vmem [#allocation2], 32
  %v789 = vld [vmem:[%s788] sm:$0xff]
  %s790 = scalar_lea.vmem [#allocation2], 80
  %v791 = vld [vmem:[%s790 + $0x8] sm:$0xff]
  %v792 = vadd.f32 %v789, %v711
  %v793 = vxor.u32 %v792, 2147483648
  %v794 = vmul.f32 %v793, 1.442695
  %v795 = vpow.pop %v794
  %v796 = vadd.f32 %v795, 1.0
  %v797 = vrcp.pop %v796
  %v798 = vmul.f32 1.0, %v797
  %v799 = vtanh.pop %v792
  %v800 = vmul.f32 %v798, %v598
  %802 = vrot.lane.b32.xlu0 %v799, 64
  %v803 = vpop.permute.xlu0 %802
  %v805 = vmul.f32 %v798, %v803
  %807 = vrot.lane.b32.xlu0 %v805, 32
  %v808 = vpop.permute.xlu0 %807
  %v810 = vadd.f32 %v800, %v808
  %v811 = vtanh.pop %v810
  %813 = vrot.lane.b32.xlu0 %v811, 64
  %v814 = vpop.permute.xlu0 %813
  %v816 = vmul.f32 %v798, %v814
  %v817 = vadd.f32 %v791, %v785
  %v818 = vxor.u32 %v817, 2147483648
  %v819 = vmul.f32 %v818, 1.442695
  %v820 = vpow.pop %v819
  %v821 = vadd.f32 %v820, 1.0
  %v822 = vrcp.pop %v821
  %v823 = vmul.f32 1.0, %v822
  %v824 = vtanh.pop %v817
  %v825 = vmul.f32 %v823, %v623
  %827 = vrot.lane.b32.xlu0 %v824, 64
  %v828 = vpop.permute.xlu0 %827
  %v830 = vmul.f32 %v823, %v828
  %832 = vrot.lane.b32.xlu0 %v830, 32
  %v833 = vpop.permute.xlu0 %832
  %v835 = vadd.f32 %v825, %v833
  %v836 = vtanh.pop %v835
  %838 = vrot.lane.b32.xlu0 %v836, 64
  %v839 = vpop.permute.xlu0 %838
  %v841 = vmul.f32 %v823, %v839
  %843 = vrot.lane.b32.xlu0 %v816, 32
  %v844 = vpop.permute.xlu0 %843
  %s846 = scalar_lea.vmem [#allocation3], 16
  %847 = vst.msk [vmem:[%s846] sm:$0xff] %vm221, %v844
  %849 = vrot.lane.b32.xlu0 %v841, 64
  %v850 = vpop.permute.xlu0 %849
  %s852 = scalar_lea.vmem [#allocation3], 40
  %853 = vst.msk [vmem:[%s852] sm:$0xff] %vm428, %v850
  %v854 = vsel %vm221, %v844, 0
  %856 = vmatprep.subr.mxu0 0.0
  %857 = vmatpush1.msra.mxu0 %v213
  %858 = vmatprep.subr.mxu0 0.0
  %859 = vmatpush1.msra.mxu0 %v214
  %860 = vmatprep.subr.mxu0 0.0
  %861 = vmatpush1.msra.mxu0 %v215
  %862 = vmatprep.subr.mxu0 0.0
  %863 = vmatpush1.msra.mxu0 %v216
  %864 = vmatprep.subr.mxu0 0.0
  %865 = vmatpush1.msra.mxu0 0.0
  %866 = vmatprep.subr.mxu0 0.0
  %867 = vmatpush1.msra.mxu0 0.0
  %868 = vmatprep.subr.mxu0 0.0
  %869 = vmatpush1.msra.mxu0 0.0
  %870 = vmatprep.subr.mxu0 0.0
  %871 = vmatpush1.msra.mxu0 0.0
  %872 = vmatprep.subr.mxu0 0.0
  %873 = vmatpush1.msra.mxu0 0.0
  %874 = vmatprep.subr.mxu0 0.0
  %875 = vmatpush1.msra.mxu0 0.0
  %876 = vmatprep.subr.mxu0 0.0
  %877 = vmatpush1.msra.mxu0 0.0
  %878 = vmatprep.subr.mxu0 0.0
  %879 = vmatpush1.msra.mxu0 0.0
  %880 = vmatprep.subr.mxu0 0.0
  %881 = vmatpush1.msra.mxu0 0.0
  %882 = vmatprep.subr.mxu0 0.0
  %883 = vmatpush1.msra.mxu0 0.0
  %884 = vmatprep.subr.mxu0 0.0
  %885 = vmatpush1.msra.mxu0 0.0
  %886 = vmatprep.subr.mxu0 0.0
  %887 = vmatpush1.msra.mxu0 0.0
  %888 = vmatprep.subr.mxu0 0.0
  %889 = vmatpush1.msra.mxu0 0.0
  %890 = vmatprep.subr.mxu0 0.0
  %891 = vmatpush1.msra.mxu0 0.0
  %892 = vmatprep.subr.mxu0 0.0
  %893 = vmatpush1.msra.mxu0 0.0
  %894 = vmatprep.subr.mxu0 0.0
  %895 = vmatpush1.msra.mxu0 0.0
  %896 = vmatprep.subr.mxu0 0.0
  %897 = vmatpush1.msra.mxu0 0.0
  %898 = vmatprep.subr.mxu0 0.0
  %899 = vmatpush1.msra.mxu0 0.0
  %900 = vmatprep.subr.mxu0 0.0
  %901 = vmatpush1.msra.mxu0 0.0
  %902 = vmatprep.subr.mxu0 0.0
  %903 = vmatpush1.msra.mxu0 0.0
  %904 = vmatprep.subr.mxu0 0.0
  %905 = vmatpush1.msra.mxu0 0.0
  %906 = vmatprep.subr.mxu0 0.0
  %907 = vmatpush1.msra.mxu0 0.0
  %908 = vmatprep.subr.mxu0 0.0
  %909 = vmatpush1.msra.mxu0 0.0
  %910 = vmatprep.subr.mxu0 0.0
  %911 = vmatpush1.msra.mxu0 0.0
  %912 = vmatprep.subr.mxu0 0.0
  %913 = vmatpush1.msra.mxu0 0.0
  %914 = vmatprep.subr.mxu0 0.0
  %915 = vmatpush1.msra.mxu0 0.0
  %916 = vmatprep.subr.mxu0 0.0
  %917 = vmatpush1.msra.mxu0 0.0
  %918 = vmatprep.subr.mxu0 0.0
  %919 = vmatpush1.msra.mxu0 0.0
  %920 = vmatprep.mubr.f32.mxu0 0.0
  %921 = vmatmul.mubr.f32.gmra.mrb[0].mxu0 %v854
  %v922 = vpop.f32.mrb[0].mxu0
  %v923 = vadd.f32 0.0, %v922
  %v924 = vpop.f32.mrb[0].mxu0
  %925 = vdwg.mxu0
  %926 = vrot.lane.b32.xlu0 %v841, 32
  %v927 = vpop.permute.xlu0 %926
  %v928 = vsel %vm221, %v927, 0
  %930 = vmatprep.subr.mxu0 0.0
  %931 = vmatpush1.msra.mxu0 %v217
  %932 = vmatprep.subr.mxu0 0.0
  %933 = vmatpush1.msra.mxu0 %v218
  %934 = vmatprep.subr.mxu0 0.0
  %935 = vmatpush1.msra.mxu0 %v219
  %936 = vmatprep.subr.mxu0 0.0
  %937 = vmatpush1.msra.mxu0 %v220
  %938 = vmatprep.subr.mxu0 0.0
  %939 = vmatpush1.msra.mxu0 0.0
  %940 = vmatprep.subr.mxu0 0.0
  %941 = vmatpush1.msra.mxu0 0.0
  %942 = vmatprep.subr.mxu0 0.0
  %943 = vmatpush1.msra.mxu0 0.0
  %944 = vmatprep.subr.mxu0 0.0
  %945 = vmatpush1.msra.mxu0 0.0
  %946 = vmatprep.subr.mxu0 0.0
  %947 = vmatpush1.msra.mxu0 0.0
  %948 = vmatprep.subr.mxu0 0.0
  %949 = vmatpush1.msra.mxu0 0.0
  %950 = vmatprep.subr.mxu0 0.0
  %951 = vmatpush1.msra.mxu0 0.0
  %952 = vmatprep.subr.mxu0 0.0
  %953 = vmatpush1.msra.mxu0 0.0
  %954 = vmatprep.subr.mxu0 0.0
  %955 = vmatpush1.msra.mxu0 0.0
  %956 = vmatprep.subr.mxu0 0.0
  %957 = vmatpush1.msra.mxu0 0.0
  %958 = vmatprep.subr.mxu0 0.0
  %959 = vmatpush1.msra.mxu0 0.0
  %960 = vmatprep.subr.mxu0 0.0
  %961 = vmatpush1.msra.mxu0 0.0
  %962 = vmatprep.subr.mxu0 0.0
  %963 = vmatpush1.msra.mxu0 0.0
  %964 = vmatprep.subr.mxu0 0.0
  %965 = vmatpush1.msra.mxu0 0.0
  %966 = vmatprep.subr.mxu0 0.0
  %967 = vmatpush1.msra.mxu0 0.0
  %968 = vmatprep.subr.mxu0 0.0
  %969 = vmatpush1.msra.mxu0 0.0
  %970 = vmatprep.subr.mxu0 0.0
  %971 = vmatpush1.msra.mxu0 0.0
  %972 = vmatprep.subr.mxu0 0.0
  %973 = vmatpush1.msra.mxu0 0.0
  %974 = vmatprep.subr.mxu0 0.0
  %975 = vmatpush1.msra.mxu0 0.0
  %976 = vmatprep.subr.mxu0 0.0
  %977 = vmatpush1.msra.mxu0 0.0
  %978 = vmatprep.subr.mxu0 0.0
  %979 = vmatpush1.msra.mxu0 0.0
  %980 = vmatprep.subr.mxu0 0.0
  %981 = vmatpush1.msra.mxu0 0.0
  %982 = vmatprep.subr.mxu0 0.0
  %983 = vmatpush1.msra.mxu0 0.0
  %984 = vmatprep.subr.mxu0 0.0
  %985 = vmatpush1.msra.mxu0 0.0
  %986 = vmatprep.subr.mxu0 0.0
  %987 = vmatpush1.msra.mxu0 0.0
  %988 = vmatprep.subr.mxu0 0.0
  %989 = vmatpush1.msra.mxu0 0.0
  %990 = vmatprep.subr.mxu0 0.0
  %991 = vmatpush1.msra.mxu0 0.0
  %992 = vmatprep.subr.mxu0 0.0
  %993 = vmatpush1.msra.mxu0 0.0
  %994 = vmatprep.mubr.f32.mxu0 0.0
  %995 = vmatmul.mubr.f32.gmra.mrb[0].mxu0 %v928
  %v996 = vpop.f32.mrb[0].mxu0
  %v997 = vadd.f32 0.0, %v996
  %v998 = vpop.f32.mrb[0].mxu0
  %999 = vdwg.mxu0
  %s1000 = scalar_lea.vmem [#allocation2], 48
  %v1001 = vld [vmem:[%s1000] sm:$0xff]
  %s1002 = scalar_lea.vmem [#allocation2], 64
  %v1003 = vld [vmem:[%s1002 + $0x8] sm:$0xff]
  %v1004 = vadd.f32 %v1001, %v923
  %v1005 = vxor.u32 %v1004, 2147483648
  %v1006 = vmul.f32 %v1005, 1.442695
  %v1007 = vpow.pop %v1006
  %v1008 = vadd.f32 %v1007, 1.0
  %v1009 = vrcp.pop %v1008
  %v1010 = vmul.f32 1.0, %v1009
  %v1011 = vtanh.pop %v1004
  %v1012 = vmul.f32 %v1010, %v810
  %1014 = vrot.lane.b32.xlu0 %v1011, 64
  %v1015 = vpop.permute.xlu0 %1014
  %v1017 = vmul.f32 %v1010, %v1015
  %1019 = vrot.lane.b32.xlu0 %v1017, 32
  %v1020 = vpop.permute.xlu0 %1019
  %v1022 = vadd.f32 %v1012, %v1020
  %v1023 = vtanh.pop %v1022
  %1025 = vrot.lane.b32.xlu0 %v1023, 64
  %v1026 = vpop.permute.xlu0 %1025
  %v1028 = vmul.f32 %v1010, %v1026
  %v1029 = vadd.f32 %v1003, %v997
  %v1030 = vxor.u32 %v1029, 2147483648
  %v1031 = vmul.f32 %v1030, 1.442695
  %v1032 = vpow.pop %v1031
  %v1033 = vadd.f32 %v1032, 1.0
  %v1034 = vrcp.pop %v1033
  %v1035 = vmul.f32 1.0, %v1034
  %v1036 = vtanh.pop %v1029
  %v1037 = vmul.f32 %v1035, %v835
  %1039 = vrot.lane.b32.xlu0 %v1036, 64
  %v1040 = vpop.permute.xlu0 %1039
  %v1042 = vmul.f32 %v1035, %v1040
  %1044 = vrot.lane.b32.xlu0 %v1042, 32
  %v1045 = vpop.permute.xlu0 %1044
  %v1047 = vadd.f32 %v1037, %v1045
  %v1048 = vtanh.pop %v1047
  %1050 = vrot.lane.b32.xlu0 %v1048, 64
  %v1051 = vpop.permute.xlu0 %1050
  %v1053 = vmul.f32 %v1035, %v1051
  %1055 = vrot.lane.b32.xlu0 %v1028, 32
  %v1056 = vpop.permute.xlu0 %1055
  %s1058 = scalar_lea.vmem [#allocation3], 24
  %1059 = vst.msk [vmem:[%s1058] sm:$0xff] %vm221, %v1056
  %1061 = vrot.lane.b32.xlu0 %v1053, 64
  %v1062 = vpop.permute.xlu0 %1061
  %s1064 = scalar_lea.vmem [#allocation3], 32
  %1065 = vst.msk [vmem:[%s1064] sm:$0xff] %vm428, %v1062
  %v1066 = vsel %vm221, %v1056, 0
  %1068 = vmatprep.subr.mxu0 0.0
  %1069 = vmatpush1.msra.mxu0 %v213
  %1070 = vmatprep.subr.mxu0 0.0
  %1071 = vmatpush1.msra.mxu0 %v214
  %1072 = vmatprep.subr.mxu0 0.0
  %1073 = vmatpush1.msra.mxu0 %v215
  %1074 = vmatprep.subr.mxu0 0.0
  %1075 = vmatpush1.msra.mxu0 %v216
  %1076 = vmatprep.subr.mxu0 0.0
  %1077 = vmatpush1.msra.mxu0 0.0
  %1078 = vmatprep.subr.mxu0 0.0
  %1079 = vmatpush1.msra.mxu0 0.0
  %1080 = vmatprep.subr.mxu0 0.0
  %1081 = vmatpush1.msra.mxu0 0.0
  %1082 = vmatprep.subr.mxu0 0.0
  %1083 = vmatpush1.msra.mxu0 0.0
  %1084 = vmatprep.subr.mxu0 0.0
  %1085 = vmatpush1.msra.mxu0 0.0
  %1086 = vmatprep.subr.mxu0 0.0
  %1087 = vmatpush1.msra.mxu0 0.0
  %1088 = vmatprep.subr.mxu0 0.0
  %1089 = vmatpush1.msra.mxu0 0.0
  %1090 = vmatprep.subr.mxu0 0.0
  %1091 = vmatpush1.msra.mxu0 0.0
  %1092 = vmatprep.subr.mxu0 0.0
  %1093 = vmatpush1.msra.mxu0 0.0
  %1094 = vmatprep.subr.mxu0 0.0
  %1095 = vmatpush1.msra.mxu0 0.0
  %1096 = vmatprep.subr.mxu0 0.0
  %1097 = vmatpush1.msra.mxu0 0.0
  %1098 = vmatprep.subr.mxu0 0.0
  %1099 = vmatpush1.msra.mxu0 0.0
  %1100 = vmatprep.subr.mxu0 0.0
  %1101 = vmatpush1.msra.mxu0 0.0
  %1102 = vmatprep.subr.mxu0 0.0
  %1103 = vmatpush1.msra.mxu0 0.0
  %1104 = vmatprep.subr.mxu0 0.0
  %1105 = vmatpush1.msra.mxu0 0.0
  %1106 = vmatprep.subr.mxu0 0.0
  %1107 = vmatpush1.msra.mxu0 0.0
  %1108 = vmatprep.subr.mxu0 0.0
  %1109 = vmatpush1.msra.mxu0 0.0
  %1110 = vmatprep.subr.mxu0 0.0
  %1111 = vmatpush1.msra.mxu0 0.0
  %1112 = vmatprep.subr.mxu0 0.0
  %1113 = vmatpush1.msra.mxu0 0.0
  %1114 = vmatprep.subr.mxu0 0.0
  %1115 = vmatpush1.msra.mxu0 0.0
  %1116 = vmatprep.subr.mxu0 0.0
  %1117 = vmatpush1.msra.mxu0 0.0
  %1118 = vmatprep.subr.mxu0 0.0
  %1119 = vmatpush1.msra.mxu0 0.0
  %1120 = vmatprep.subr.mxu0 0.0
  %1121 = vmatpush1.msra.mxu0 0.0
  %1122 = vmatprep.subr.mxu0 0.0
  %1123 = vmatpush1.msra.mxu0 0.0
  %1124 = vmatprep.subr.mxu0 0.0
  %1125 = vmatpush1.msra.mxu0 0.0
  %1126 = vmatprep.subr.mxu0 0.0
  %1127 = vmatpush1.msra.mxu0 0.0
  %1128 = vmatprep.subr.mxu0 0.0
  %1129 = vmatpush1.msra.mxu0 0.0
  %1130 = vmatprep.subr.mxu0 0.0
  %1131 = vmatpush1.msra.mxu0 0.0
  %1132 = vmatprep.mubr.f32.mxu0 0.0
  %1133 = vmatmul.mubr.f32.gmra.mrb[0].mxu0 %v1066
  %v1134 = vpop.f32.mrb[0].mxu0
  %v1135 = vadd.f32 0.0, %v1134
  %v1136 = vpop.f32.mrb[0].mxu0
  %1137 = vdwg.mxu0
  %1138 = vrot.lane.b32.xlu0 %v1053, 32
  %v1139 = vpop.permute.xlu0 %1138
  %v1140 = vsel %vm221, %v1139, 0
  %1142 = vmatprep.subr.mxu0 0.0
  %1143 = vmatpush1.msra.mxu0 %v217
  %1144 = vmatprep.subr.mxu0 0.0
  %1145 = vmatpush1.msra.mxu0 %v218
  %1146 = vmatprep.subr.mxu0 0.0
  %1147 = vmatpush1.msra.mxu0 %v219
  %1148 = vmatprep.subr.mxu0 0.0
  %1149 = vmatpush1.msra.mxu0 %v220
  %1150 = vmatprep.subr.mxu0 0.0
  %1151 = vmatpush1.msra.mxu0 0.0
  %1152 = vmatprep.subr.mxu0 0.0
  %1153 = vmatpush1.msra.mxu0 0.0
  %1154 = vmatprep.subr.mxu0 0.0
  %1155 = vmatpush1.msra.mxu0 0.0
  %1156 = vmatprep.subr.mxu0 0.0
  %1157 = vmatpush1.msra.mxu0 0.0
  %1158 = vmatprep.subr.mxu0 0.0
  %1159 = vmatpush1.msra.mxu0 0.0
  %1160 = vmatprep.subr.mxu0 0.0
  %1161 = vmatpush1.msra.mxu0 0.0
  %1162 = vmatprep.subr.mxu0 0.0
  %1163 = vmatpush1.msra.mxu0 0.0
  %1164 = vmatprep.subr.mxu0 0.0
  %1165 = vmatpush1.msra.mxu0 0.0
  %1166 = vmatprep.subr.mxu0 0.0
  %1167 = vmatpush1.msra.mxu0 0.0
  %1168 = vmatprep.subr.mxu0 0.0
  %1169 = vmatpush1.msra.mxu0 0.0
  %1170 = vmatprep.subr.mxu0 0.0
  %1171 = vmatpush1.msra.mxu0 0.0
  %1172 = vmatprep.subr.mxu0 0.0
  %1173 = vmatpush1.msra.mxu0 0.0
  %1174 = vmatprep.subr.mxu0 0.0
  %1175 = vmatpush1.msra.mxu0 0.0
  %1176 = vmatprep.subr.mxu0 0.0
  %1177 = vmatpush1.msra.mxu0 0.0
  %1178 = vmatprep.subr.mxu0 0.0
  %1179 = vmatpush1.msra.mxu0 0.0
  %1180 = vmatprep.subr.mxu0 0.0
  %1181 = vmatpush1.msra.mxu0 0.0
  %1182 = vmatprep.subr.mxu0 0.0
  %1183 = vmatpush1.msra.mxu0 0.0
  %1184 = vmatprep.subr.mxu0 0.0
  %1185 = vmatpush1.msra.mxu0 0.0
  %1186 = vmatprep.subr.mxu0 0.0
  %1187 = vmatpush1.msra.mxu0 0.0
  %1188 = vmatprep.subr.mxu0 0.0
  %1189 = vmatpush1.msra.mxu0 0.0
  %1190 = vmatprep.subr.mxu0 0.0
  %1191 = vmatpush1.msra.mxu0 0.0
  %1192 = vmatprep.subr.mxu0 0.0
  %1193 = vmatpush1.msra.mxu0 0.0
  %1194 = vmatprep.subr.mxu0 0.0
  %1195 = vmatpush1.msra.mxu0 0.0
  %1196 = vmatprep.subr.mxu0 0.0
  %1197 = vmatpush1.msra.mxu0 0.0
  %1198 = vmatprep.subr.mxu0 0.0
  %1199 = vmatpush1.msra.mxu0 0.0
  %1200 = vmatprep.subr.mxu0 0.0
  %1201 = vmatpush1.msra.mxu0 0.0
  %1202 = vmatprep.subr.mxu0 0.0
  %1203 = vmatpush1.msra.mxu0 0.0
  %1204 = vmatprep.subr.mxu0 0.0
  %1205 = vmatpush1.msra.mxu0 0.0
  %1206 = vmatprep.mubr.f32.mxu0 0.0
  %1207 = vmatmul.mubr.f32.gmra.mrb[0].mxu0 %v1140
  %v1208 = vpop.f32.mrb[0].mxu0
  %v1209 = vadd.f32 0.0, %v1208
  %v1210 = vpop.f32.mrb[0].mxu0
  %1211 = vdwg.mxu0
  %v1212 = vld [vmem:[%s1002] sm:$0xff]
  %v1213 = vld [vmem:[%s1000 + $0x8] sm:$0xff]
  %v1214 = vadd.f32 %v1212, %v1135
  %v1215 = vxor.u32 %v1214, 2147483648
  %v1216 = vmul.f32 %v1215, 1.442695
  %v1217 = vpow.pop %v1216
  %v1218 = vadd.f32 %v1217, 1.0
  %v1219 = vrcp.pop %v1218
  %v1220 = vmul.f32 1.0, %v1219
  %v1221 = vtanh.pop %v1214
  %v1222 = vmul.f32 %v1220, %v1022
  %1224 = vrot.lane.b32.xlu0 %v1221, 64
  %v1225 = vpop.permute.xlu0 %1224
  %v1227 = vmul.f32 %v1220, %v1225
  %1229 = vrot.lane.b32.xlu0 %v1227, 32
  %v1230 = vpop.permute.xlu0 %1229
  %v1232 = vadd.f32 %v1222, %v1230
  %v1233 = vtanh.pop %v1232
  %1235 = vrot.lane.b32.xlu0 %v1233, 64
  %v1236 = vpop.permute.xlu0 %1235
  %v1238 = vmul.f32 %v1220, %v1236
  %v1239 = vadd.f32 %v1213, %v1209
  %v1240 = vxor.u32 %v1239, 2147483648
  %v1241 = vmul.f32 %v1240, 1.442695
  %v1242 = vpow.pop %v1241
  %v1243 = vadd.f32 %v1242, 1.0
  %v1244 = vrcp.pop %v1243
  %v1245 = vmul.f32 1.0, %v1244
  %v1246 = vtanh.pop %v1239
  %v1247 = vmul.f32 %v1245, %v1047
  %1249 = vrot.lane.b32.xlu0 %v1246, 64
  %v1250 = vpop.permute.xlu0 %1249
  %v1252 = vmul.f32 %v1245, %v1250
  %1254 = vrot.lane.b32.xlu0 %v1252, 32
  %v1255 = vpop.permute.xlu0 %1254
  %v1257 = vadd.f32 %v1247, %v1255
  %v1258 = vtanh.pop %v1257
  %1260 = vrot.lane.b32.xlu0 %v1258, 64
  %v1261 = vpop.permute.xlu0 %1260
  %v1263 = vmul.f32 %v1245, %v1261
  %1265 = vrot.lane.b32.xlu0 %v1238, 32
  %v1266 = vpop.permute.xlu0 %1265
  %1268 = vst.msk [vmem:[%s1064] sm:$0xff] %vm221, %v1266
  %1270 = vrot.lane.b32.xlu0 %v1263, 64
  %v1271 = vpop.permute.xlu0 %1270
  %1273 = vst.msk [vmem:[%s1058] sm:$0xff] %vm428, %v1271
  %v1274 = vsel %vm221, %v1266, 0
  %1276 = vmatprep.subr.mxu0 0.0
  %1277 = vmatpush1.msra.mxu0 %v213
  %1278 = vmatprep.subr.mxu0 0.0
  %1279 = vmatpush1.msra.mxu0 %v214
  %1280 = vmatprep.subr.mxu0 0.0
  %1281 = vmatpush1.msra.mxu0 %v215
  %1282 = vmatprep.subr.mxu0 0.0
  %1283 = vmatpush1.msra.mxu0 %v216
  %1284 = vmatprep.subr.mxu0 0.0
  %1285 = vmatpush1.msra.mxu0 0.0
  %1286 = vmatprep.subr.mxu0 0.0
  %1287 = vmatpush1.msra.mxu0 0.0
  %1288 = vmatprep.subr.mxu0 0.0
  %1289 = vmatpush1.msra.mxu0 0.0
  %1290 = vmatprep.subr.mxu0 0.0
  %1291 = vmatpush1.msra.mxu0 0.0
  %1292 = vmatprep.subr.mxu0 0.0
  %1293 = vmatpush1.msra.mxu0 0.0
  %1294 = vmatprep.subr.mxu0 0.0
  %1295 = vmatpush1.msra.mxu0 0.0
  %1296 = vmatprep.subr.mxu0 0.0
  %1297 = vmatpush1.msra.mxu0 0.0
  %1298 = vmatprep.subr.mxu0 0.0
  %1299 = vmatpush1.msra.mxu0 0.0
  %1300 = vmatprep.subr.mxu0 0.0
  %1301 = vmatpush1.msra.mxu0 0.0
  %1302 = vmatprep.subr.mxu0 0.0
  %1303 = vmatpush1.msra.mxu0 0.0
  %1304 = vmatprep.subr.mxu0 0.0
  %1305 = vmatpush1.msra.mxu0 0.0
  %1306 = vmatprep.subr.mxu0 0.0
  %1307 = vmatpush1.msra.mxu0 0.0
  %1308 = vmatprep.subr.mxu0 0.0
  %1309 = vmatpush1.msra.mxu0 0.0
  %1310 = vmatprep.subr.mxu0 0.0
  %1311 = vmatpush1.msra.mxu0 0.0
  %1312 = vmatprep.subr.mxu0 0.0
  %1313 = vmatpush1.msra.mxu0 0.0
  %1314 = vmatprep.subr.mxu0 0.0
  %1315 = vmatpush1.msra.mxu0 0.0
  %1316 = vmatprep.subr.mxu0 0.0
  %1317 = vmatpush1.msra.mxu0 0.0
  %1318 = vmatprep.subr.mxu0 0.0
  %1319 = vmatpush1.msra.mxu0 0.0
  %1320 = vmatprep.subr.mxu0 0.0
  %1321 = vmatpush1.msra.mxu0 0.0
  %1322 = vmatprep.subr.mxu0 0.0
  %1323 = vmatpush1.msra.mxu0 0.0
  %1324 = vmatprep.subr.mxu0 0.0
  %1325 = vmatpush1.msra.mxu0 0.0
  %1326 = vmatprep.subr.mxu0 0.0
  %1327 = vmatpush1.msra.mxu0 0.0
  %1328 = vmatprep.subr.mxu0 0.0
  %1329 = vmatpush1.msra.mxu0 0.0
  %1330 = vmatprep.subr.mxu0 0.0
  %1331 = vmatpush1.msra.mxu0 0.0
  %1332 = vmatprep.subr.mxu0 0.0
  %1333 = vmatpush1.msra.mxu0 0.0
  %1334 = vmatprep.subr.mxu0 0.0
  %1335 = vmatpush1.msra.mxu0 0.0
  %1336 = vmatprep.subr.mxu0 0.0
  %1337 = vmatpush1.msra.mxu0 0.0
  %1338 = vmatprep.subr.mxu0 0.0
  %1339 = vmatpush1.msra.mxu0 0.0
  %1340 = vmatprep.mubr.f32.mxu0 0.0
  %1341 = vmatmul.mubr.f32.gmra.mrb[0].mxu0 %v1274
  %v1342 = vpop.f32.mrb[0].mxu0
  %v1343 = vadd.f32 0.0, %v1342
  %v1344 = vpop.f32.mrb[0].mxu0
  %1345 = vdwg.mxu0
  %1346 = vrot.lane.b32.xlu0 %v1263, 32
  %v1347 = vpop.permute.xlu0 %1346
  %v1348 = vsel %vm221, %v1347, 0
  %1350 = vmatprep.subr.mxu0 0.0
  %1351 = vmatpush1.msra.mxu0 %v217
  %1352 = vmatprep.subr.mxu0 0.0
  %1353 = vmatpush1.msra.mxu0 %v218
  %1354 = vmatprep.subr.mxu0 0.0
  %1355 = vmatpush1.msra.mxu0 %v219
  %1356 = vmatprep.subr.mxu0 0.0
  %1357 = vmatpush1.msra.mxu0 %v220
  %1358 = vmatprep.subr.mxu0 0.0
  %1359 = vmatpush1.msra.mxu0 0.0
  %1360 = vmatprep.subr.mxu0 0.0
  %1361 = vmatpush1.msra.mxu0 0.0
  %1362 = vmatprep.subr.mxu0 0.0
  %1363 = vmatpush1.msra.mxu0 0.0
  %1364 = vmatprep.subr.mxu0 0.0
  %1365 = vmatpush1.msra.mxu0 0.0
  %1366 = vmatprep.subr.mxu0 0.0
  %1367 = vmatpush1.msra.mxu0 0.0
  %1368 = vmatprep.subr.mxu0 0.0
  %1369 = vmatpush1.msra.mxu0 0.0
  %1370 = vmatprep.subr.mxu0 0.0
  %1371 = vmatpush1.msra.mxu0 0.0
  %1372 = vmatprep.subr.mxu0 0.0
  %1373 = vmatpush1.msra.mxu0 0.0
  %1374 = vmatprep.subr.mxu0 0.0
  %1375 = vmatpush1.msra.mxu0 0.0
  %1376 = vmatprep.subr.mxu0 0.0
  %1377 = vmatpush1.msra.mxu0 0.0
  %1378 = vmatprep.subr.mxu0 0.0
  %1379 = vmatpush1.msra.mxu0 0.0
  %1380 = vmatprep.subr.mxu0 0.0
  %1381 = vmatpush1.msra.mxu0 0.0
  %1382 = vmatprep.subr.mxu0 0.0
  %1383 = vmatpush1.msra.mxu0 0.0
  %1384 = vmatprep.subr.mxu0 0.0
  %1385 = vmatpush1.msra.mxu0 0.0
  %1386 = vmatprep.subr.mxu0 0.0
  %1387 = vmatpush1.msra.mxu0 0.0
  %1388 = vmatprep.subr.mxu0 0.0
  %1389 = vmatpush1.msra.mxu0 0.0
  %1390 = vmatprep.subr.mxu0 0.0
  %1391 = vmatpush1.msra.mxu0 0.0
  %1392 = vmatprep.subr.mxu0 0.0
  %1393 = vmatpush1.msra.mxu0 0.0
  %1394 = vmatprep.subr.mxu0 0.0
  %1395 = vmatpush1.msra.mxu0 0.0
  %1396 = vmatprep.subr.mxu0 0.0
  %1397 = vmatpush1.msra.mxu0 0.0
  %1398 = vmatprep.subr.mxu0 0.0
  %1399 = vmatpush1.msra.mxu0 0.0
  %1400 = vmatprep.subr.mxu0 0.0
  %1401 = vmatpush1.msra.mxu0 0.0
  %1402 = vmatprep.subr.mxu0 0.0
  %1403 = vmatpush1.msra.mxu0 0.0
  %1404 = vmatprep.subr.mxu0 0.0
  %1405 = vmatpush1.msra.mxu0 0.0
  %1406 = vmatprep.subr.mxu0 0.0
  %1407 = vmatpush1.msra.mxu0 0.0
  %1408 = vmatprep.subr.mxu0 0.0
  %1409 = vmatpush1.msra.mxu0 0.0
  %1410 = vmatprep.subr.mxu0 0.0
  %1411 = vmatpush1.msra.mxu0 0.0
  %1412 = vmatprep.subr.mxu0 0.0
  %1413 = vmatpush1.msra.mxu0 0.0
  %1414 = vmatprep.mubr.f32.mxu0 0.0
  %1415 = vmatmul.mubr.f32.gmra.mrb[0].mxu0 %v1348
  %v1416 = vpop.f32.mrb[0].mxu0
  %v1417 = vadd.f32 0.0, %v1416
  %v1418 = vpop.f32.mrb[0].mxu0
  %1419 = vdwg.mxu0
  %v1420 = vld [vmem:[%s790] sm:$0xff]
  %v1421 = vld [vmem:[%s788 + $0x8] sm:$0xff]
  %v1422 = vadd.f32 %v1420, %v1343
  %v1423 = vxor.u32 %v1422, 2147483648
  %v1424 = vmul.f32 %v1423, 1.442695
  %v1425 = vpow.pop %v1424
  %v1426 = vadd.f32 %v1425, 1.0
  %v1427 = vrcp.pop %v1426
  %v1428 = vmul.f32 1.0, %v1427
  %v1429 = vtanh.pop %v1422
  %v1430 = vmul.f32 %v1428, %v1232
  %1432 = vrot.lane.b32.xlu0 %v1429, 64
  %v1433 = vpop.permute.xlu0 %1432
  %v1435 = vmul.f32 %v1428, %v1433
  %1437 = vrot.lane.b32.xlu0 %v1435, 32
  %v1438 = vpop.permute.xlu0 %1437
  %v1440 = vadd.f32 %v1430, %v1438
  %v1441 = vtanh.pop %v1440
  %1443 = vrot.lane.b32.xlu0 %v1441, 64
  %v1444 = vpop.permute.xlu0 %1443
  %v1446 = vmul.f32 %v1428, %v1444
  %v1447 = vadd.f32 %v1421, %v1417
  %v1448 = vxor.u32 %v1447, 2147483648
  %v1449 = vmul.f32 %v1448, 1.442695
  %v1450 = vpow.pop %v1449
  %v1451 = vadd.f32 %v1450, 1.0
  %v1452 = vrcp.pop %v1451
  %v1453 = vmul.f32 1.0, %v1452
  %v1454 = vtanh.pop %v1447
  %v1455 = vmul.f32 %v1453, %v1257
  %1457 = vrot.lane.b32.xlu0 %v1454, 64
  %v1458 = vpop.permute.xlu0 %1457
  %v1460 = vmul.f32 %v1453, %v1458
  %1462 = vrot.lane.b32.xlu0 %v1460, 32
  %v1463 = vpop.permute.xlu0 %1462
  %v1465 = vadd.f32 %v1455, %v1463
  %v1466 = vtanh.pop %v1465
  %1468 = vrot.lane.b32.xlu0 %v1466, 64
  %v1469 = vpop.permute.xlu0 %1468
  %v1471 = vmul.f32 %v1453, %v1469
  %1473 = vrot.lane.b32.xlu0 %v1446, 32
  %v1474 = vpop.permute.xlu0 %1473
  %1476 = vst.msk [vmem:[%s852] sm:$0xff] %vm221, %v1474
  %1478 = vrot.lane.b32.xlu0 %v1471, 64
  %v1479 = vpop.permute.xlu0 %1478
  %1481 = vst.msk [vmem:[%s846] sm:$0xff] %vm428, %v1479
  %v1482 = vsel %vm221, %v1474, 0
  %1484 = vmatprep.subr.mxu0 0.0
  %1485 = vmatpush1.msra.mxu0 %v213
  %1486 = vmatprep.subr.mxu0 0.0
  %1487 = vmatpush1.msra.mxu0 %v214
  %1488 = vmatprep.subr.mxu0 0.0
  %1489 = vmatpush1.msra.mxu0 %v215
  %1490 = vmatprep.subr.mxu0 0.0
  %1491 = vmatpush1.msra.mxu0 %v216
  %1492 = vmatprep.subr.mxu0 0.0
  %1493 = vmatpush1.msra.mxu0 0.0
  %1494 = vmatprep.subr.mxu0 0.0
  %1495 = vmatpush1.msra.mxu0 0.0
  %1496 = vmatprep.subr.mxu0 0.0
  %1497 = vmatpush1.msra.mxu0 0.0
  %1498 = vmatprep.subr.mxu0 0.0
  %1499 = vmatpush1.msra.mxu0 0.0
  %1500 = vmatprep.subr.mxu0 0.0
  %1501 = vmatpush1.msra.mxu0 0.0
  %1502 = vmatprep.subr.mxu0 0.0
  %1503 = vmatpush1.msra.mxu0 0.0
  %1504 = vmatprep.subr.mxu0 0.0
  %1505 = vmatpush1.msra.mxu0 0.0
  %1506 = vmatprep.subr.mxu0 0.0
  %1507 = vmatpush1.msra.mxu0 0.0
  %1508 = vmatprep.subr.mxu0 0.0
  %1509 = vmatpush1.msra.mxu0 0.0
  %1510 = vmatprep.subr.mxu0 0.0
  %1511 = vmatpush1.msra.mxu0 0.0
  %1512 = vmatprep.subr.mxu0 0.0
  %1513 = vmatpush1.msra.mxu0 0.0
  %1514 = vmatprep.subr.mxu0 0.0
  %1515 = vmatpush1.msra.mxu0 0.0
  %1516 = vmatprep.subr.mxu0 0.0
  %1517 = vmatpush1.msra.mxu0 0.0
  %1518 = vmatprep.subr.mxu0 0.0
  %1519 = vmatpush1.msra.mxu0 0.0
  %1520 = vmatprep.subr.mxu0 0.0
  %1521 = vmatpush1.msra.mxu0 0.0
  %1522 = vmatprep.subr.mxu0 0.0
  %1523 = vmatpush1.msra.mxu0 0.0
  %1524 = vmatprep.subr.mxu0 0.0
  %1525 = vmatpush1.msra.mxu0 0.0
  %1526 = vmatprep.subr.mxu0 0.0
  %1527 = vmatpush1.msra.mxu0 0.0
  %1528 = vmatprep.subr.mxu0 0.0
  %1529 = vmatpush1.msra.mxu0 0.0
  %1530 = vmatprep.subr.mxu0 0.0
  %1531 = vmatpush1.msra.mxu0 0.0
  %1532 = vmatprep.subr.mxu0 0.0
  %1533 = vmatpush1.msra.mxu0 0.0
  %1534 = vmatprep.subr.mxu0 0.0
  %1535 = vmatpush1.msra.mxu0 0.0
  %1536 = vmatprep.subr.mxu0 0.0
  %1537 = vmatpush1.msra.mxu0 0.0
  %1538 = vmatprep.subr.mxu0 0.0
  %1539 = vmatpush1.msra.mxu0 0.0
  %1540 = vmatprep.subr.mxu0 0.0
  %1541 = vmatpush1.msra.mxu0 0.0
  %1542 = vmatprep.subr.mxu0 0.0
  %1543 = vmatpush1.msra.mxu0 0.0
  %1544 = vmatprep.subr.mxu0 0.0
  %1545 = vmatpush1.msra.mxu0 0.0
  %1546 = vmatprep.subr.mxu0 0.0
  %1547 = vmatpush1.msra.mxu0 0.0
  %1548 = vmatprep.mubr.f32.mxu0 0.0
  %1549 = vmatmul.mubr.f32.gmra.mrb[0].mxu0 %v1482
  %v1550 = vpop.f32.mrb[0].mxu0
  %v1551 = vadd.f32 0.0, %v1550
  %v1552 = vpop.f32.mrb[0].mxu0
  %1553 = vdwg.mxu0
  %1554 = vrot.lane.b32.xlu0 %v1471, 32
  %v1555 = vpop.permute.xlu0 %1554
  %v1556 = vsel %vm221, %v1555, 0
  %1558 = vmatprep.subr.mxu0 0.0
  %1559 = vmatpush1.msra.mxu0 %v217
  %1560 = vmatprep.subr.mxu0 0.0
  %1561 = vmatpush1.msra.mxu0 %v218
  %1562 = vmatprep.subr.mxu0 0.0
  %1563 = vmatpush1.msra.mxu0 %v219
  %1564 = vmatprep.subr.mxu0 0.0
  %1565 = vmatpush1.msra.mxu0 %v220
  %1566 = vmatprep.subr.mxu0 0.0
  %1567 = vmatpush1.msra.mxu0 0.0
  %1568 = vmatprep.subr.mxu0 0.0
  %1569 = vmatpush1.msra.mxu0 0.0
  %1570 = vmatprep.subr.mxu0 0.0
  %1571 = vmatpush1.msra.mxu0 0.0
  %1572 = vmatprep.subr.mxu0 0.0
  %1573 = vmatpush1.msra.mxu0 0.0
  %1574 = vmatprep.subr.mxu0 0.0
  %1575 = vmatpush1.msra.mxu0 0.0
  %1576 = vmatprep.subr.mxu0 0.0
  %1577 = vmatpush1.msra.mxu0 0.0
  %1578 = vmatprep.subr.mxu0 0.0
  %1579 = vmatpush1.msra.mxu0 0.0
  %1580 = vmatprep.subr.mxu0 0.0
  %1581 = vmatpush1.msra.mxu0 0.0
  %1582 = vmatprep.subr.mxu0 0.0
  %1583 = vmatpush1.msra.mxu0 0.0
  %1584 = vmatprep.subr.mxu0 0.0
  %1585 = vmatpush1.msra.mxu0 0.0
  %1586 = vmatprep.subr.mxu0 0.0
  %1587 = vmatpush1.msra.mxu0 0.0
  %1588 = vmatprep.subr.mxu0 0.0
  %1589 = vmatpush1.msra.mxu0 0.0
  %1590 = vmatprep.subr.mxu0 0.0
  %1591 = vmatpush1.msra.mxu0 0.0
  %1592 = vmatprep.subr.mxu0 0.0
  %1593 = vmatpush1.msra.mxu0 0.0
  %1594 = vmatprep.subr.mxu0 0.0
  %1595 = vmatpush1.msra.mxu0 0.0
  %1596 = vmatprep.subr.mxu0 0.0
  %1597 = vmatpush1.msra.mxu0 0.0
  %1598 = vmatprep.subr.mxu0 0.0
  %1599 = vmatpush1.msra.mxu0 0.0
  %1600 = vmatprep.subr.mxu0 0.0
  %1601 = vmatpush1.msra.mxu0 0.0
  %1602 = vmatprep.subr.mxu0 0.0
  %1603 = vmatpush1.msra.mxu0 0.0
  %1604 = vmatprep.subr.mxu0 0.0
  %1605 = vmatpush1.msra.mxu0 0.0
  %1606 = vmatprep.subr.mxu0 0.0
  %1607 = vmatpush1.msra.mxu0 0.0
  %1608 = vmatprep.subr.mxu0 0.0
  %1609 = vmatpush1.msra.mxu0 0.0
  %1610 = vmatprep.subr.mxu0 0.0
  %1611 = vmatpush1.msra.mxu0 0.0
  %1612 = vmatprep.subr.mxu0 0.0
  %1613 = vmatpush1.msra.mxu0 0.0
  %1614 = vmatprep.subr.mxu0 0.0
  %1615 = vmatpush1.msra.mxu0 0.0
  %1616 = vmatprep.subr.mxu0 0.0
  %1617 = vmatpush1.msra.mxu0 0.0
  %1618 = vmatprep.subr.mxu0 0.0
  %1619 = vmatpush1.msra.mxu0 0.0
  %1620 = vmatprep.subr.mxu0 0.0
  %1621 = vmatpush1.msra.mxu0 0.0
  %1622 = vmatprep.mubr.f32.mxu0 0.0
  %1623 = vmatmul.mubr.f32.gmra.mrb[0].mxu0 %v1556
  %v1624 = vpop.f32.mrb[0].mxu0
  %v1625 = vadd.f32 0.0, %v1624
  %v1626 = vpop.f32.mrb[0].mxu0
  %1627 = vdwg.mxu0
  %v1628 = vld [vmem:[%s578] sm:$0xff]
  %v1629 = vld [vmem:[%s576 + $0x8] sm:$0xff]
  %v1630 = vadd.f32 %v1628, %v1551
  %v1631 = vxor.u32 %v1630, 2147483648
  %v1632 = vmul.f32 %v1631, 1.442695
  %v1633 = vpow.pop %v1632
  %v1634 = vadd.f32 %v1633, 1.0
  %v1635 = vrcp.pop %v1634
  %v1636 = vmul.f32 1.0, %v1635
  %v1637 = vtanh.pop %v1630
  %v1638 = vmul.f32 %v1636, %v1440
  %1640 = vrot.lane.b32.xlu0 %v1637, 64
  %v1641 = vpop.permute.xlu0 %1640
  %v1643 = vmul.f32 %v1636, %v1641
  %1645 = vrot.lane.b32.xlu0 %v1643, 32
  %v1646 = vpop.permute.xlu0 %1645
  %v1648 = vadd.f32 %v1638, %v1646
  %v1649 = vtanh.pop %v1648
  %1651 = vrot.lane.b32.xlu0 %v1649, 64
  %v1652 = vpop.permute.xlu0 %1651
  %v1654 = vmul.f32 %v1636, %v1652
  %v1655 = vadd.f32 %v1629, %v1625
  %v1656 = vxor.u32 %v1655, 2147483648
  %v1657 = vmul.f32 %v1656, 1.442695
  %v1658 = vpow.pop %v1657
  %v1659 = vadd.f32 %v1658, 1.0
  %v1660 = vrcp.pop %v1659
  %v1661 = vmul.f32 1.0, %v1660
  %v1662 = vtanh.pop %v1655
  %v1663 = vmul.f32 %v1661, %v1465
  %1665 = vrot.lane.b32.xlu0 %v1662, 64
  %v1666 = vpop.permute.xlu0 %1665
  %v1668 = vmul.f32 %v1661, %v1666
  %1670 = vrot.lane.b32.xlu0 %v1668, 32
  %v1671 = vpop.permute.xlu0 %1670
  %v1673 = vadd.f32 %v1663, %v1671
  %v1674 = vtanh.pop %v1673
  %1676 = vrot.lane.b32.xlu0 %v1674, 64
  %v1677 = vpop.permute.xlu0 %1676
  %v1679 = vmul.f32 %v1661, %v1677
  %1681 = vrot.lane.b32.xlu0 %v1654, 32
  %v1682 = vpop.permute.xlu0 %1681
  %1684 = vst.msk [vmem:[%s640] sm:$0xff] %vm221, %v1682
  %1686 = vrot.lane.b32.xlu0 %v1679, 64
  %v1687 = vpop.permute.xlu0 %1686
  %1689 = vst.msk [vmem:[%s634] sm:$0xff] %vm428, %v1687
  %v1690 = vsel %vm221, %v1682, 0
  %1692 = vmatprep.subr.mxu0 0.0
  %1693 = vmatpush1.msra.mxu0 %v213
  %1694 = vmatprep.subr.mxu0 0.0
  %1695 = vmatpush1.msra.mxu0 %v214
  %1696 = vmatprep.subr.mxu0 0.0
  %1697 = vmatpush1.msra.mxu0 %v215
  %1698 = vmatprep.subr.mxu0 0.0
  %1699 = vmatpush1.msra.mxu0 %v216
  %1700 = vmatprep.subr.mxu0 0.0
  %1701 = vmatpush1.msra.mxu0 0.0
  %1702 = vmatprep.subr.mxu0 0.0
  %1703 = vmatpush1.msra.mxu0 0.0
  %1704 = vmatprep.subr.mxu0 0.0
  %1705 = vmatpush1.msra.mxu0 0.0
  %1706 = vmatprep.subr.mxu0 0.0
  %1707 = vmatpush1.msra.mxu0 0.0
  %1708 = vmatprep.subr.mxu0 0.0
  %1709 = vmatpush1.msra.mxu0 0.0
  %1710 = vmatprep.subr.mxu0 0.0
  %1711 = vmatpush1.msra.mxu0 0.0
  %1712 = vmatprep.subr.mxu0 0.0
  %1713 = vmatpush1.msra.mxu0 0.0
  %1714 = vmatprep.subr.mxu0 0.0
  %1715 = vmatpush1.msra.mxu0 0.0
  %1716 = vmatprep.subr.mxu0 0.0
  %1717 = vmatpush1.msra.mxu0 0.0
  %1718 = vmatprep.subr.mxu0 0.0
  %1719 = vmatpush1.msra.mxu0 0.0
  %1720 = vmatprep.subr.mxu0 0.0
  %1721 = vmatpush1.msra.mxu0 0.0
  %1722 = vmatprep.subr.mxu0 0.0
  %1723 = vmatpush1.msra.mxu0 0.0
  %1724 = vmatprep.subr.mxu0 0.0
  %1725 = vmatpush1.msra.mxu0 0.0
  %1726 = vmatprep.subr.mxu0 0.0
  %1727 = vmatpush1.msra.mxu0 0.0
  %1728 = vmatprep.subr.mxu0 0.0
  %1729 = vmatpush1.msra.mxu0 0.0
  %1730 = vmatprep.subr.mxu0 0.0
  %1731 = vmatpush1.msra.mxu0 0.0
  %1732 = vmatprep.subr.mxu0 0.0
  %1733 = vmatpush1.msra.mxu0 0.0
  %1734 = vmatprep.subr.mxu0 0.0
  %1735 = vmatpush1.msra.mxu0 0.0
  %1736 = vmatprep.subr.mxu0 0.0
  %1737 = vmatpush1.msra.mxu0 0.0
  %1738 = vmatprep.subr.mxu0 0.0
  %1739 = vmatpush1.msra.mxu0 0.0
  %1740 = vmatprep.subr.mxu0 0.0
  %1741 = vmatpush1.msra.mxu0 0.0
  %1742 = vmatprep.subr.mxu0 0.0
  %1743 = vmatpush1.msra.mxu0 0.0
  %1744 = vmatprep.subr.mxu0 0.0
  %1745 = vmatpush1.msra.mxu0 0.0
  %1746 = vmatprep.subr.mxu0 0.0
  %1747 = vmatpush1.msra.mxu0 0.0
  %1748 = vmatprep.subr.mxu0 0.0
  %1749 = vmatpush1.msra.mxu0 0.0
  %1750 = vmatprep.subr.mxu0 0.0
  %1751 = vmatpush1.msra.mxu0 0.0
  %1752 = vmatprep.subr.mxu0 0.0
  %1753 = vmatpush1.msra.mxu0 0.0
  %1754 = vmatprep.subr.mxu0 0.0
  %1755 = vmatpush1.msra.mxu0 0.0
  %1756 = vmatprep.mubr.f32.mxu0 0.0
  %1757 = vmatmul.mubr.f32.gmra.mrb[0].mxu0 %v1690
  %v1758 = vpop.f32.mrb[0].mxu0
  %v1759 = vadd.f32 0.0, %v1758
  %v1760 = vpop.f32.mrb[0].mxu0
  %1761 = vdwg.mxu0
  %1762 = vrot.lane.b32.xlu0 %v1679, 32
  %v1763 = vpop.permute.xlu0 %1762
  %v1764 = vsel %vm221, %v1763, 0
  %1766 = vmatprep.subr.mxu0 0.0
  %1767 = vmatpush1.msra.mxu0 %v217
  %1768 = vmatprep.subr.mxu0 0.0
  %1769 = vmatpush1.msra.mxu0 %v218
  %1770 = vmatprep.subr.mxu0 0.0
  %1771 = vmatpush1.msra.mxu0 %v219
  %1772 = vmatprep.subr.mxu0 0.0
  %1773 = vmatpush1.msra.mxu0 %v220
  %1774 = vmatprep.subr.mxu0 0.0
  %1775 = vmatpush1.msra.mxu0 0.0
  %1776 = vmatprep.subr.mxu0 0.0
  %1777 = vmatpush1.msra.mxu0 0.0
  %1778 = vmatprep.subr.mxu0 0.0
  %1779 = vmatpush1.msra.mxu0 0.0
  %1780 = vmatprep.subr.mxu0 0.0
  %1781 = vmatpush1.msra.mxu0 0.0
  %1782 = vmatprep.subr.mxu0 0.0
  %1783 = vmatpush1.msra.mxu0 0.0
  %1784 = vmatprep.subr.mxu0 0.0
  %1785 = vmatpush1.msra.mxu0 0.0
  %1786 = vmatprep.subr.mxu0 0.0
  %1787 = vmatpush1.msra.mxu0 0.0
  %1788 = vmatprep.subr.mxu0 0.0
  %1789 = vmatpush1.msra.mxu0 0.0
  %1790 = vmatprep.subr.mxu0 0.0
  %1791 = vmatpush1.msra.mxu0 0.0
  %1792 = vmatprep.subr.mxu0 0.0
  %1793 = vmatpush1.msra.mxu0 0.0
  %1794 = vmatprep.subr.mxu0 0.0
  %1795 = vmatpush1.msra.mxu0 0.0
  %1796 = vmatprep.subr.mxu0 0.0
  %1797 = vmatpush1.msra.mxu0 0.0
  %1798 = vmatprep.subr.mxu0 0.0
  %1799 = vmatpush1.msra.mxu0 0.0
  %1800 = vmatprep.subr.mxu0 0.0
  %1801 = vmatpush1.msra.mxu0 0.0
  %1802 = vmatprep.subr.mxu0 0.0
  %1803 = vmatpush1.msra.mxu0 0.0
  %1804 = vmatprep.subr.mxu0 0.0
  %1805 = vmatpush1.msra.mxu0 0.0
  %1806 = vmatprep.subr.mxu0 0.0
  %1807 = vmatpush1.msra.mxu0 0.0
  %1808 = vmatprep.subr.mxu0 0.0
  %1809 = vmatpush1.msra.mxu0 0.0
  %1810 = vmatprep.subr.mxu0 0.0
  %1811 = vmatpush1.msra.mxu0 0.0
  %1812 = vmatprep.subr.mxu0 0.0
  %1813 = vmatpush1.msra.mxu0 0.0
  %1814 = vmatprep.subr.mxu0 0.0
  %1815 = vmatpush1.msra.mxu0 0.0
  %1816 = vmatprep.subr.mxu0 0.0
  %1817 = vmatpush1.msra.mxu0 0.0
  %1818 = vmatprep.subr.mxu0 0.0
  %1819 = vmatpush1.msra.mxu0 0.0
  %1820 = vmatprep.subr.mxu0 0.0
  %1821 = vmatpush1.msra.mxu0 0.0
  %1822 = vmatprep.subr.mxu0 0.0
  %1823 = vmatpush1.msra.mxu0 0.0
  %1824 = vmatprep.subr.mxu0 0.0
  %1825 = vmatpush1.msra.mxu0 0.0
  %1826 = vmatprep.subr.mxu0 0.0
  %1827 = vmatpush1.msra.mxu0 0.0
  %1828 = vmatprep.subr.mxu0 0.0
  %1829 = vmatpush1.msra.mxu0 0.0
  %1830 = vmatprep.mubr.f32.mxu0 0.0
  %1831 = vmatmul.mubr.f32.gmra.mrb[0].mxu0 %v1764
  %v1832 = vpop.f32.mrb[0].mxu0
  %v1833 = vadd.f32 0.0, %v1832
  %v1834 = vpop.f32.mrb[0].mxu0
  %1835 = vdwg.mxu0
  %v1836 = vld [vmem:[%s366] sm:$0xff]
  %v1837 = vld [vmem:[#allocation2 + $0x8] sm:$0xff]
  %v1838 = vadd.f32 %v1836, %v1759
  %v1839 = vxor.u32 %v1838, 2147483648
  %v1840 = vmul.f32 %v1839, 1.442695
  %v1841 = vpow.pop %v1840
  %v1842 = vadd.f32 %v1841, 1.0
  %v1843 = vrcp.pop %v1842
  %v1844 = vmul.f32 1.0, %v1843
  %v1845 = vtanh.pop %v1838
  %v1846 = vmul.f32 %v1844, %v1648
  %1848 = vrot.lane.b32.xlu0 %v1845, 64
  %v1849 = vpop.permute.xlu0 %1848
  %v1851 = vmul.f32 %v1844, %v1849
  %1853 = vrot.lane.b32.xlu0 %v1851, 32
  %v1854 = vpop.permute.xlu0 %1853
  %v1856 = vadd.f32 %v1846, %v1854
  %v1857 = vtanh.pop %v1856
  %1859 = vrot.lane.b32.xlu0 %v1857, 64
  %v1860 = vpop.permute.xlu0 %1859
  %v1862 = vmul.f32 %v1844, %v1860
  %v1863 = vadd.f32 %v1837, %v1833
  %v1864 = vxor.u32 %v1863, 2147483648
  %v1865 = vmul.f32 %v1864, 1.442695
  %v1866 = vpow.pop %v1865
  %v1867 = vadd.f32 %v1866, 1.0
  %v1868 = vrcp.pop %v1867
  %v1869 = vmul.f32 1.0, %v1868
  %v1870 = vtanh.pop %v1863
  %v1871 = vmul.f32 %v1869, %v1673
  %1873 = vrot.lane.b32.xlu0 %v1870, 64
  %v1874 = vpop.permute.xlu0 %1873
  %v1876 = vmul.f32 %v1869, %v1874
  %1878 = vrot.lane.b32.xlu0 %v1876, 32
  %v1879 = vpop.permute.xlu0 %1878
  %v1881 = vadd.f32 %v1871, %v1879
  %v1882 = vtanh.pop %v1881
  %1884 = vrot.lane.b32.xlu0 %v1882, 64
  %v1885 = vpop.permute.xlu0 %1884
  %v1887 = vmul.f32 %v1869, %v1885
  %1889 = vrot.lane.b32.xlu0 %v1862, 32
  %v1890 = vpop.permute.xlu0 %1889
  %1892 = vst.msk [vmem:[%s427] sm:$0xff] %vm221, %v1890
  %1894 = vrot.lane.b32.xlu0 %v1887, 64
  %v1895 = vpop.permute.xlu0 %1894
  %1897 = vst.msk [vmem:[#allocation3] sm:$0xff] %vm428, %v1895
  %v1898 = vld [vmem:[#allocation3] sm:$0xff]
  %v1899 = vld [vmem:[#allocation3 + $0x8] sm:$0xff]
  %v1900 = vld [vmem:[#allocation3 + $0x10] sm:$0xff]
  %v1901 = vld [vmem:[#allocation3 + $0x18] sm:$0xff]
  %v1902 = vld [vmem:[#allocation3 + $0x20] sm:$0xff]
  %v1903 = vld [vmem:[#allocation3 + $0x28] sm:$0xff]
  %v1904 = vld [vmem:[#allocation3 + $0x30] sm:$0xff]
  %v1905 = vld [vmem:[#allocation3 + $0x38] sm:$0xff]
  %v1906 = vld [vmem:[%s5] sm:$0xff]
  %v1907 = vld [vmem:[%s5 + $0x8] sm:$0xff]
  %v1908 = vld [vmem:[%s5 + $0x10] sm:$0xff]
  %v1909 = vld [vmem:[%s5 + $0x18] sm:$0xff]
  %v1910 = vld [vmem:[%s5 + $0x20] sm:$0xff]
  %v1911 = vld [vmem:[%s5 + $0x28] sm:$0xff]
  %v1912 = vld [vmem:[%s5 + $0x30] sm:$0xff]
  %v1913 = vld [vmem:[%s5 + $0x38] sm:$0xff]
  %vm1914 = vcmask 523264
  %v1916 = vsel %vm1914, %v1898, 0
  %v1919 = vsel %vm1914, %v1899, 0
  %v1922 = vsel %vm1914, %v1900, 0
  %v1925 = vsel %vm1914, %v1901, 0
  %v1928 = vsel %vm1914, %v1902, 0
  %v1931 = vsel %vm1914, %v1903, 0
  %v1934 = vsel %vm1914, %v1904, 0
  %v1937 = vsel %vm1914, %v1905, 0
  %1939 = vmatprep.subr.mxu0 0.0
  %1940 = vmatpush1.msra.mxu0 %v1906
  %1941 = vmatprep.subr.mxu0 0.0
  %1942 = vmatpush1.msra.mxu0 %v1907
  %1943 = vmatprep.subr.mxu0 0.0
  %1944 = vmatpush1.msra.mxu0 %v1908
  %1945 = vmatprep.subr.mxu0 0.0
  %1946 = vmatpush1.msra.mxu0 %v1909
  %1947 = vmatprep.subr.mxu0 0.0
  %1948 = vmatpush1.msra.mxu0 %v1910
  %1949 = vmatprep.subr.mxu0 0.0
  %1950 = vmatpush1.msra.mxu0 %v1911
  %1951 = vmatprep.subr.mxu0 0.0
  %1952 = vmatpush1.msra.mxu0 %v1912
  %1953 = vmatprep.subr.mxu0 0.0
  %1954 = vmatpush1.msra.mxu0 %v1913
  %1955 = vmatprep.subr.mxu0 0.0
  %1956 = vmatpush1.msra.mxu0 0.0
  %1957 = vmatprep.subr.mxu0 0.0
  %1958 = vmatpush1.msra.mxu0 0.0
  %1959 = vmatprep.subr.mxu0 0.0
  %1960 = vmatpush1.msra.mxu0 0.0
  %1961 = vmatprep.subr.mxu0 0.0
  %1962 = vmatpush1.msra.mxu0 0.0
  %1963 = vmatprep.subr.mxu0 0.0
  %1964 = vmatpush1.msra.mxu0 0.0
  %1965 = vmatprep.subr.mxu0 0.0
  %1966 = vmatpush1.msra.mxu0 0.0
  %1967 = vmatprep.subr.mxu0 0.0
  %1968 = vmatpush1.msra.mxu0 0.0
  %1969 = vmatprep.subr.mxu0 0.0
  %1970 = vmatpush1.msra.mxu0 0.0
  %1971 = vmatprep.subr.mxu0 0.0
  %1972 = vmatpush1.msra.mxu0 0.0
  %1973 = vmatprep.subr.mxu0 0.0
  %1974 = vmatpush1.msra.mxu0 0.0
  %1975 = vmatprep.subr.mxu0 0.0
  %1976 = vmatpush1.msra.mxu0 0.0
  %1977 = vmatprep.subr.mxu0 0.0
  %1978 = vmatpush1.msra.mxu0 0.0
  %1979 = vmatprep.subr.mxu0 0.0
  %1980 = vmatpush1.msra.mxu0 0.0
  %1981 = vmatprep.subr.mxu0 0.0
  %1982 = vmatpush1.msra.mxu0 0.0
  %1983 = vmatprep.subr.mxu0 0.0
  %1984 = vmatpush1.msra.mxu0 0.0
  %1985 = vmatprep.subr.mxu0 0.0
  %1986 = vmatpush1.msra.mxu0 0.0
  %1987 = vmatprep.subr.mxu0 0.0
  %1988 = vmatpush1.msra.mxu0 0.0
  %1989 = vmatprep.subr.mxu0 0.0
  %1990 = vmatpush1.msra.mxu0 0.0
  %1991 = vmatprep.subr.mxu0 0.0
  %1992 = vmatpush1.msra.mxu0 0.0
  %1993 = vmatprep.subr.mxu0 0.0
  %1994 = vmatpush1.msra.mxu0 0.0
  %1995 = vmatprep.subr.mxu0 0.0
  %1996 = vmatpush1.msra.mxu0 0.0
  %1997 = vmatprep.subr.mxu0 0.0
  %1998 = vmatpush1.msra.mxu0 0.0
  %1999 = vmatprep.subr.mxu0 0.0
  %2000 = vmatpush1.msra.mxu0 0.0
  %2001 = vmatprep.subr.mxu0 0.0
  %2002 = vmatpush1.msra.mxu0 0.0
  %2003 = vmatprep.mubr.f32.mxu0 0.0
  %2004 = vmatmul.mubr.f32.gmra.mrb[0].mxu0 %v1916
  %v2005 = vpop.f32.mrb[0].mxu0
  %v2006 = vadd.f32 0.0, %v2005
  %v2007 = vpop.f32.mrb[0].mxu0
  %2008 = vmatprep.mubr.f32.mxu0 0.0
  %2009 = vmatmul.mubr.f32.gmra.mrb[0].mxu0 %v1919
  %v2010 = vpop.f32.mrb[0].mxu0
  %v2011 = vadd.f32 0.0, %v2010
  %v2012 = vpop.f32.mrb[0].mxu0
  %2013 = vmatprep.mubr.f32.mxu0 0.0
  %2014 = vmatmul.mubr.f32.gmra.mrb[0].mxu0 %v1922
  %v2015 = vpop.f32.mrb[0].mxu0
  %v2016 = vadd.f32 0.0, %v2015
  %v2017 = vpop.f32.mrb[0].mxu0
  %2018 = vmatprep.mubr.f32.mxu0 0.0
  %2019 = vmatmul.mubr.f32.gmra.mrb[0].mxu0 %v1925
  %v2020 = vpop.f32.mrb[0].mxu0
  %v2021 = vadd.f32 0.0, %v2020
  %v2022 = vpop.f32.mrb[0].mxu0
  %2023 = vmatprep.mubr.f32.mxu0 0.0
  %2024 = vmatmul.mubr.f32.gmra.mrb[0].mxu0 %v1928
  %v2025 = vpop.f32.mrb[0].mxu0
  %v2026 = vadd.f32 0.0, %v2025
  %v2027 = vpop.f32.mrb[0].mxu0
  %2028 = vmatprep.mubr.f32.mxu0 0.0
  %2029 = vmatmul.mubr.f32.gmra.mrb[0].mxu0 %v1931
  %v2030 = vpop.f32.mrb[0].mxu0
  %v2031 = vadd.f32 0.0, %v2030
  %v2032 = vpop.f32.mrb[0].mxu0
  %2033 = vmatprep.mubr.f32.mxu0 0.0
  %2034 = vmatmul.mubr.f32.gmra.mrb[0].mxu0 %v1934
  %v2035 = vpop.f32.mrb[0].mxu0
  %v2036 = vadd.f32 0.0, %v2035
  %v2037 = vpop.f32.mrb[0].mxu0
  %2038 = vmatprep.mubr.f32.mxu0 0.0
  %2039 = vmatmul.mubr.f32.gmra.mrb[0].mxu0 %v1937
  %v2040 = vpop.f32.mrb[0].mxu0
  %v2041 = vadd.f32 0.0, %v2040
  %v2042 = vpop.f32.mrb[0].mxu0
  %2043 = vdwg.mxu0
  %vm2044 = vcmask 31744
  %v2045 = vsel %vm2044, %v2006, -inf
  %v2046 = vsel %vm2044, %v2011, -inf
  %v2047 = vsel %vm2044, %v2016, -inf
  %v2048 = vsel %vm2044, %v2021, -inf
  %v2049 = vsel %vm2044, %v2026, -inf
  %v2050 = vmax.f32 %v2045, %v2049
  %v2051 = vsel %vm2044, %v2031, -inf
  %v2052 = vmax.f32 %v2046, %v2051
  %v2053 = vsel %vm2044, %v2036, -inf
  %v2054 = vmax.f32 %v2047, %v2053
  %v2055 = vsel %vm2044, %v2041, -inf
  %v2056 = vmax.f32 %v2048, %v2055
  %v2057 = vmax.f32 %v2050, %v2052
  %v2058 = vmax.f32 %v2054, %v2056
  %v2059 = vmax.f32 %v2057, %v2058
  %v2060 = vsub.f32 %v2006, %v2059
  %v2061 = vsub.f32 %v2011, %v2059
  %v2062 = vsub.f32 %v2016, %v2059
  %v2063 = vsub.f32 %v2021, %v2059
  %v2064 = vsub.f32 %v2026, %v2059
  %v2065 = vsub.f32 %v2031, %v2059
  %v2066 = vsub.f32 %v2036, %v2059
  %v2067 = vsub.f32 %v2041, %v2059
  %v2068 = vmul.f32 %v2060, 1.442695
  %v2069 = vpow.pop %v2068
  %v2070 = vmul.f32 %v2061, 1.442695
  %v2071 = vpow.pop %v2070
  %v2072 = vmul.f32 %v2062, 1.442695
  %v2073 = vpow.pop %v2072
  %v2074 = vmul.f32 %v2063, 1.442695
  %v2075 = vpow.pop %v2074
  %v2076 = vmul.f32 %v2064, 1.442695
  %v2077 = vpow.pop %v2076
  %v2078 = vmul.f32 %v2065, 1.442695
  %v2079 = vpow.pop %v2078
  %v2080 = vmul.f32 %v2066, 1.442695
  %v2081 = vpow.pop %v2080
  %v2082 = vmul.f32 %v2067, 1.442695
  %v2083 = vpow.pop %v2082
  %v2084 = vsel %vm2044, %v2069, 0.0
  %v2085 = vsel %vm2044, %v2071, 0.0
  %v2086 = vadd.f32 %v2084, %v2085
  %v2087 = vsel %vm2044, %v2073, 0.0
  %v2088 = vadd.f32 %v2086, %v2087
  %v2089 = vsel %vm2044, %v2075, 0.0
  %v2090 = vadd.f32 %v2088, %v2089
  %v2091 = vsel %vm2044, %v2077, 0.0
  %v2092 = vadd.f32 %v2090, %v2091
  %v2093 = vsel %vm2044, %v2079, 0.0
  %v2094 = vadd.f32 %v2092, %v2093
  %v2095 = vsel %vm2044, %v2081, 0.0
  %v2096 = vadd.f32 %v2094, %v2095
  %v2097 = vsel %vm2044, %v2083, 0.0
  %v2098 = vadd.f32 %v2096, %v2097
  %v2099 = vrcp.pop %v2098
  %v2100 = vmul.f32 %v2069, %v2099
  %v2101 = vmul.f32 %v2071, %v2099
  %v2102 = vmul.f32 %v2073, %v2099
  %v2103 = vmul.f32 %v2075, %v2099
  %v2104 = vmul.f32 %v2077, %v2099
  %v2105 = vmul.f32 %v2079, %v2099
  %v2106 = vmul.f32 %v2081, %v2099
  %v2107 = vmul.f32 %v2083, %v2099
  %2109 = vset.pattern.permute.xlu0 0
  %2110 = vperm.xlu0 %2109, %v2100
  %v2111 = vpop.permute.xlu0 %2110
  %2114 = vset.pattern.permute.xlu0 0
  %2115 = vperm.xlu0 %2114, %v2101
  %v2116 = vpop.permute.xlu0 %2115
  %2119 = vset.pattern.permute.xlu0 0
  %2120 = vperm.xlu0 %2119, %v2102
  %v2121 = vpop.permute.xlu0 %2120
  %2124 = vset.pattern.permute.xlu0 0
  %2125 = vperm.xlu0 %2124, %v2103
  %v2126 = vpop.permute.xlu0 %2125
  %2129 = vset.pattern.permute.xlu0 0
  %2130 = vperm.xlu0 %2129, %v2104
  %v2131 = vpop.permute.xlu0 %2130
  %2134 = vset.pattern.permute.xlu0 0
  %2135 = vperm.xlu0 %2134, %v2105
  %v2136 = vpop.permute.xlu0 %2135
  %2139 = vset.pattern.permute.xlu0 0
  %2140 = vperm.xlu0 %2139, %v2106
  %v2141 = vpop.permute.xlu0 %2140
  %2144 = vset.pattern.permute.xlu0 0
  %2145 = vperm.xlu0 %2144, %v2107
  %v2146 = vpop.permute.xlu0 %2145
  %v2148 = vmul.f32 %v2111, %v1898
  %v2149 = vmul.f32 %v2116, %v1899
  %v2150 = vmul.f32 %v2121, %v1900
  %v2151 = vmul.f32 %v2126, %v1901
  %v2152 = vmul.f32 %v2131, %v1902
  %v2153 = vmul.f32 %v2136, %v1903
  %v2154 = vmul.f32 %v2141, %v1904
  %v2155 = vmul.f32 %v2146, %v1905
  %v2156 = vsel %vm1914, %v2148, 0.0
  %v2157 = vsel %vm1914, %v2149, 0.0
  %v2158 = vadd.f32 %v2156, %v2157
  %v2159 = vsel %vm1914, %v2150, 0.0
  %v2160 = vadd.f32 %v2158, %v2159
  %v2161 = vsel %vm1914, %v2151, 0.0
  %v2162 = vadd.f32 %v2160, %v2161
  %v2163 = vsel %vm1914, %v2152, 0.0
  %v2164 = vadd.f32 %v2162, %v2163
  %v2165 = vsel %vm1914, %v2153, 0.0
  %v2166 = vadd.f32 %v2164, %v2165
  %v2167 = vsel %vm1914, %v2154, 0.0
  %v2168 = vadd.f32 %v2166, %v2167
  %v2169 = vsel %vm1914, %v2155, 0.0
  %v2170 = vadd.f32 %v2168, %v2169
  %2171 = vset.pattern.permute.xlu0 1
  %2172 = vperm.xlu0 %2171, %v2100
  %v2173 = vpop.permute.xlu0 %2172
  %2175 = vset.pattern.permute.xlu0 1
  %2176 = vperm.xlu0 %2175, %v2101
  %v2177 = vpop.permute.xlu0 %2176
  %2179 = vset.pattern.permute.xlu0 1
  %2180 = vperm.xlu0 %2179, %v2102
  %v2181 = vpop.permute.xlu0 %2180
  %2183 = vset.pattern.permute.xlu0 1
  %2184 = vperm.xlu0 %2183, %v2103
  %v2185 = vpop.permute.xlu0 %2184
  %2187 = vset.pattern.permute.xlu0 1
  %2188 = vperm.xlu0 %2187, %v2104
  %v2189 = vpop.permute.xlu0 %2188
  %2191 = vset.pattern.permute.xlu0 1
  %2192 = vperm.xlu0 %2191, %v2105
  %v2193 = vpop.permute.xlu0 %2192
  %2195 = vset.pattern.permute.xlu0 1
  %2196 = vperm.xlu0 %2195, %v2106
  %v2197 = vpop.permute.xlu0 %2196
  %2199 = vset.pattern.permute.xlu0 1
  %2200 = vperm.xlu0 %2199, %v2107
  %v2201 = vpop.permute.xlu0 %2200
  %v2203 = vmul.f32 %v2173, %v1898
  %v2204 = vmul.f32 %v2177, %v1899
  %v2205 = vmul.f32 %v2181, %v1900
  %v2206 = vmul.f32 %v2185, %v1901
  %v2207 = vmul.f32 %v2189, %v1902
  %v2208 = vmul.f32 %v2193, %v1903
  %v2209 = vmul.f32 %v2197, %v1904
  %v2210 = vmul.f32 %v2201, %v1905
  %v2211 = vsel %vm1914, %v2203, 0.0
  %v2212 = vsel %vm1914, %v2204, 0.0
  %v2213 = vadd.f32 %v2211, %v2212
  %v2214 = vsel %vm1914, %v2205, 0.0
  %v2215 = vadd.f32 %v2213, %v2214
  %v2216 = vsel %vm1914, %v2206, 0.0
  %v2217 = vadd.f32 %v2215, %v2216
  %v2218 = vsel %vm1914, %v2207, 0.0
  %v2219 = vadd.f32 %v2217, %v2218
  %v2220 = vsel %vm1914, %v2208, 0.0
  %v2221 = vadd.f32 %v2219, %v2220
  %v2222 = vsel %vm1914, %v2209, 0.0
  %v2223 = vadd.f32 %v2221, %v2222
  %v2224 = vsel %vm1914, %v2210, 0.0
  %v2225 = vadd.f32 %v2223, %v2224
  %2226 = vset.pattern.permute.xlu0 2
  %2227 = vperm.xlu0 %2226, %v2100
  %v2228 = vpop.permute.xlu0 %2227
  %2230 = vset.pattern.permute.xlu0 2
  %2231 = vperm.xlu0 %2230, %v2101
  %v2232 = vpop.permute.xlu0 %2231
  %2234 = vset.pattern.permute.xlu0 2
  %2235 = vperm.xlu0 %2234, %v2102
  %v2236 = vpop.permute.xlu0 %2235
  %2238 = vset.pattern.permute.xlu0 2
  %2239 = vperm.xlu0 %2238, %v2103
  %v2240 = vpop.permute.xlu0 %2239
  %2242 = vset.pattern.permute.xlu0 2
  %2243 = vperm.xlu0 %2242, %v2104
  %v2244 = vpop.permute.xlu0 %2243
  %2246 = vset.pattern.permute.xlu0 2
  %2247 = vperm.xlu0 %2246, %v2105
  %v2248 = vpop.permute.xlu0 %2247
  %2250 = vset.pattern.permute.xlu0 2
  %2251 = vperm.xlu0 %2250, %v2106
  %v2252 = vpop.permute.xlu0 %2251
  %2254 = vset.pattern.permute.xlu0 2
  %2255 = vperm.xlu0 %2254, %v2107
  %v2256 = vpop.permute.xlu0 %2255
  %v2258 = vmul.f32 %v2228, %v1898
  %v2259 = vmul.f32 %v2232, %v1899
  %v2260 = vmul.f32 %v2236, %v1900
  %v2261 = vmul.f32 %v2240, %v1901
  %v2262 = vmul.f32 %v2244, %v1902
  %v2263 = vmul.f32 %v2248, %v1903
  %v2264 = vmul.f32 %v2252, %v1904
  %v2265 = vmul.f32 %v2256, %v1905
  %v2266 = vsel %vm1914, %v2258, 0.0
  %v2267 = vsel %vm1914, %v2259, 0.0
  %v2268 = vadd.f32 %v2266, %v2267
  %v2269 = vsel %vm1914, %v2260, 0.0
  %v2270 = vadd.f32 %v2268, %v2269
  %v2271 = vsel %vm1914, %v2261, 0.0
  %v2272 = vadd.f32 %v2270, %v2271
  %v2273 = vsel %vm1914, %v2262, 0.0
  %v2274 = vadd.f32 %v2272, %v2273
  %v2275 = vsel %vm1914, %v2263, 0.0
  %v2276 = vadd.f32 %v2274, %v2275
  %v2277 = vsel %vm1914, %v2264, 0.0
  %v2278 = vadd.f32 %v2276, %v2277
  %v2279 = vsel %vm1914, %v2265, 0.0
  %v2280 = vadd.f32 %v2278, %v2279
  %2281 = vset.pattern.permute.xlu0 3
  %2282 = vperm.xlu0 %2281, %v2100
  %v2283 = vpop.permute.xlu0 %2282
  %2285 = vset.pattern.permute.xlu0 3
  %2286 = vperm.xlu0 %2285, %v2101
  %v2287 = vpop.permute.xlu0 %2286
  %2289 = vset.pattern.permute.xlu0 3
  %2290 = vperm.xlu0 %2289, %v2102
  %v2291 = vpop.permute.xlu0 %2290
  %2293 = vset.pattern.permute.xlu0 3
  %2294 = vperm.xlu0 %2293, %v2103
  %v2295 = vpop.permute.xlu0 %2294
  %2297 = vset.pattern.permute.xlu0 3
  %2298 = vperm.xlu0 %2297, %v2104
  %v2299 = vpop.permute.xlu0 %2298
  %2301 = vset.pattern.permute.xlu0 3
  %2302 = vperm.xlu0 %2301, %v2105
  %v2303 = vpop.permute.xlu0 %2302
  %2305 = vset.pattern.permute.xlu0 3
  %2306 = vperm.xlu0 %2305, %v2106
  %v2307 = vpop.permute.xlu0 %2306
  %2309 = vset.pattern.permute.xlu0 3
  %2310 = vperm.xlu0 %2309, %v2107
  %v2311 = vpop.permute.xlu0 %2310
  %v2313 = vmul.f32 %v2283, %v1898
  %v2314 = vmul.f32 %v2287, %v1899
  %v2315 = vmul.f32 %v2291, %v1900
  %v2316 = vmul.f32 %v2295, %v1901
  %v2317 = vmul.f32 %v2299, %v1902
  %v2318 = vmul.f32 %v2303, %v1903
  %v2319 = vmul.f32 %v2307, %v1904
  %v2320 = vmul.f32 %v2311, %v1905
  %v2321 = vsel %vm1914, %v2313, 0.0
  %v2322 = vsel %vm1914, %v2314, 0.0
  %v2323 = vadd.f32 %v2321, %v2322
  %v2324 = vsel %vm1914, %v2315, 0.0
  %v2325 = vadd.f32 %v2323, %v2324
  %v2326 = vsel %vm1914, %v2316, 0.0
  %v2327 = vadd.f32 %v2325, %v2326
  %v2328 = vsel %vm1914, %v2317, 0.0
  %v2329 = vadd.f32 %v2327, %v2328
  %v2330 = vsel %vm1914, %v2318, 0.0
  %v2331 = vadd.f32 %v2329, %v2330
  %v2332 = vsel %vm1914, %v2319, 0.0
  %v2333 = vadd.f32 %v2331, %v2332
  %v2334 = vsel %vm1914, %v2320, 0.0
  %v2335 = vadd.f32 %v2333, %v2334
  %v2336 = vld [vmem:[%s6] sm:$0xff]
  %v2337 = vld [vmem:[%s6 + $0x8] sm:$0xff]
  %v2338 = vld [vmem:[%s6 + $0x10] sm:$0xff]
  %v2339 = vld [vmem:[%s6 + $0x18] sm:$0xff]
  %v2340 = vld [vmem:[%s6 + $0x20] sm:$0xff]
  %v2341 = vld [vmem:[%s6 + $0x28] sm:$0xff]
  %v2342 = vld [vmem:[%s6 + $0x30] sm:$0xff]
  %v2343 = vld [vmem:[%s6 + $0x38] sm:$0xff]
  %v2344 = vld [vmem:[%s7] sm:$0x1]
  %v2346 = vlaneseq
  %v2347 = vshrl.u32 %v2346, 7
  %v2348 = vsub.s32 0, %v2347
  %v2349 = vrot.slane %v2344, %v2348
  %v2352 = vsel %vm1914, %v2170, 0
  %v2355 = vsel %vm1914, %v2225, 0
  %v2358 = vsel %vm1914, %v2280, 0
  %v2361 = vsel %vm1914, %v2335, 0
  %2363 = vmatprep.subr.mxu0 0.0
  %2364 = vmatpush1.msra.mxu0 %v2336
  %2365 = vmatprep.subr.mxu0 0.0
  %2366 = vmatpush1.msra.mxu0 %v2337
  %2367 = vmatprep.subr.mxu0 0.0
  %2368 = vmatpush1.msra.mxu0 %v2338
  %2369 = vmatprep.subr.mxu0 0.0
  %2370 = vmatpush1.msra.mxu0 %v2339
  %2371 = vmatprep.subr.mxu0 0.0
  %2372 = vmatpush1.msra.mxu0 %v2340
  %2373 = vmatprep.subr.mxu0 0.0
  %2374 = vmatpush1.msra.mxu0 %v2341
  %2375 = vmatprep.subr.mxu0 0.0
  %2376 = vmatpush1.msra.mxu0 %v2342
  %2377 = vmatprep.subr.mxu0 0.0
  %2378 = vmatpush1.msra.mxu0 %v2343
  %2379 = vmatprep.subr.mxu0 0.0
  %2380 = vmatpush1.msra.mxu0 0.0
  %2381 = vmatprep.subr.mxu0 0.0
  %2382 = vmatpush1.msra.mxu0 0.0
  %2383 = vmatprep.subr.mxu0 0.0
  %2384 = vmatpush1.msra.mxu0 0.0
  %2385 = vmatprep.subr.mxu0 0.0
  %2386 = vmatpush1.msra.mxu0 0.0
  %2387 = vmatprep.subr.mxu0 0.0
  %2388 = vmatpush1.msra.mxu0 0.0
  %2389 = vmatprep.subr.mxu0 0.0
  %2390 = vmatpush1.msra.mxu0 0.0
  %2391 = vmatprep.subr.mxu0 0.0
  %2392 = vmatpush1.msra.mxu0 0.0
  %2393 = vmatprep.subr.mxu0 0.0
  %2394 = vmatpush1.msra.mxu0 0.0
  %2395 = vmatprep.subr.mxu0 0.0
  %2396 = vmatpush1.msra.mxu0 0.0
  %2397 = vmatprep.subr.mxu0 0.0
  %2398 = vmatpush1.msra.mxu0 0.0
  %2399 = vmatprep.subr.mxu0 0.0
  %2400 = vmatpush1.msra.mxu0 0.0
  %2401 = vmatprep.subr.mxu0 0.0
  %2402 = vmatpush1.msra.mxu0 0.0
  %2403 = vmatprep.subr.mxu0 0.0
  %2404 = vmatpush1.msra.mxu0 0.0
  %2405 = vmatprep.subr.mxu0 0.0
  %2406 = vmatpush1.msra.mxu0 0.0
  %2407 = vmatprep.subr.mxu0 0.0
  %2408 = vmatpush1.msra.mxu0 0.0
  %2409 = vmatprep.subr.mxu0 0.0
  %2410 = vmatpush1.msra.mxu0 0.0
  %2411 = vmatprep.subr.mxu0 0.0
  %2412 = vmatpush1.msra.mxu0 0.0
  %2413 = vmatprep.subr.mxu0 0.0
  %2414 = vmatpush1.msra.mxu0 0.0
  %2415 = vmatprep.subr.mxu0 0.0
  %2416 = vmatpush1.msra.mxu0 0.0
  %2417 = vmatprep.subr.mxu0 0.0
  %2418 = vmatpush1.msra.mxu0 0.0
  %2419 = vmatprep.subr.mxu0 0.0
  %2420 = vmatpush1.msra.mxu0 0.0
  %2421 = vmatprep.subr.mxu0 0.0
  %2422 = vmatpush1.msra.mxu0 0.0
  %2423 = vmatprep.subr.mxu0 0.0
  %2424 = vmatpush1.msra.mxu0 0.0
  %2425 = vmatprep.subr.mxu0 0.0
  %2426 = vmatpush1.msra.mxu0 0.0
  %2427 = vmatprep.mubr.f32.mxu0 0.0
  %2428 = vmatmul.mubr.f32.gmra.mrb[0].mxu0 %v2352
  %v2429 = vpop.f32.mrb[0].mxu0
  %v2430 = vadd.f32 %v2349, %v2429
  %v2431 = vpop.f32.mrb[0].mxu0
  %2432 = vmatprep.mubr.f32.mxu0 0.0
  %2433 = vmatmul.mubr.f32.gmra.mrb[0].mxu0 %v2355
  %v2434 = vpop.f32.mrb[0].mxu0
  %v2435 = vadd.f32 %v2349, %v2434
  %v2436 = vpop.f32.mrb[0].mxu0
  %2437 = vmatprep.mubr.f32.mxu0 0.0
  %2438 = vmatmul.mubr.f32.gmra.mrb[0].mxu0 %v2358
  %v2439 = vpop.f32.mrb[0].mxu0
  %v2440 = vadd.f32 %v2349, %v2439
  %v2441 = vpop.f32.mrb[0].mxu0
  %2442 = vmatprep.mubr.f32.mxu0 0.0
  %2443 = vmatmul.mubr.f32.gmra.mrb[0].mxu0 %v2361
  %v2444 = vpop.f32.mrb[0].mxu0
  %v2445 = vadd.f32 %v2349, %v2444
  %v2446 = vpop.f32.mrb[0].mxu0
  %2447 = vdwg.mxu0
  %v2448 = vld [vmem:[%s8] sm:$0xff]
  %v2449 = vld [vmem:[%s8 + $0x8] sm:$0xff]
  %v2450 = vld [vmem:[%s8 + $0x10] sm:$0xff]
  %v2451 = vld [vmem:[%s8 + $0x18] sm:$0xff]
  %v2452 = vld [vmem:[%s9] sm:$0x1]
  %v2454 = vlaneseq
  %v2455 = vshrl.u32 %v2454, 7
  %v2456 = vsub.s32 0, %v2455
  %v2457 = vrot.slane %v2452, %v2456
  %v2460 = vsel %vm221, %v2430, 0
  %v2463 = vsel %vm221, %v2435, 0
  %v2466 = vsel %vm221, %v2440, 0
  %v2469 = vsel %vm221, %v2445, 0
  %2471 = vmatprep.subr.mxu0 0.0
  %2472 = vmatpush1.msra.mxu0 %v2448
  %2473 = vmatprep.subr.mxu0 0.0
  %2474 = vmatpush1.msra.mxu0 %v2449
  %2475 = vmatprep.subr.mxu0 0.0
  %2476 = vmatpush1.msra.mxu0 %v2450
  %2477 = vmatprep.subr.mxu0 0.0
  %2478 = vmatpush1.msra.mxu0 %v2451
  %2479 = vmatprep.subr.mxu0 0.0
  %2480 = vmatpush1.msra.mxu0 0.0
  %2481 = vmatprep.subr.mxu0 0.0
  %2482 = vmatpush1.msra.mxu0 0.0
  %2483 = vmatprep.subr.mxu0 0.0
  %2484 = vmatpush1.msra.mxu0 0.0
  %2485 = vmatprep.subr.mxu0 0.0
  %2486 = vmatpush1.msra.mxu0 0.0
  %2487 = vmatprep.subr.mxu0 0.0
  %2488 = vmatpush1.msra.mxu0 0.0
  %2489 = vmatprep.subr.mxu0 0.0
  %2490 = vmatpush1.msra.mxu0 0.0
  %2491 = vmatprep.subr.mxu0 0.0
  %2492 = vmatpush1.msra.mxu0 0.0
  %2493 = vmatprep.subr.mxu0 0.0
  %2494 = vmatpush1.msra.mxu0 0.0
  %2495 = vmatprep.subr.mxu0 0.0
  %2496 = vmatpush1.msra.mxu0 0.0
  %2497 = vmatprep.subr.mxu0 0.0
  %2498 = vmatpush1.msra.mxu0 0.0
  %2499 = vmatprep.subr.mxu0 0.0
  %2500 = vmatpush1.msra.mxu0 0.0
  %2501 = vmatprep.subr.mxu0 0.0
  %2502 = vmatpush1.msra.mxu0 0.0
  %2503 = vmatprep.subr.mxu0 0.0
  %2504 = vmatpush1.msra.mxu0 0.0
  %2505 = vmatprep.subr.mxu0 0.0
  %2506 = vmatpush1.msra.mxu0 0.0
  %2507 = vmatprep.subr.mxu0 0.0
  %2508 = vmatpush1.msra.mxu0 0.0
  %2509 = vmatprep.subr.mxu0 0.0
  %2510 = vmatpush1.msra.mxu0 0.0
  %2511 = vmatprep.subr.mxu0 0.0
  %2512 = vmatpush1.msra.mxu0 0.0
  %2513 = vmatprep.subr.mxu0 0.0
  %2514 = vmatpush1.msra.mxu0 0.0
  %2515 = vmatprep.subr.mxu0 0.0
  %2516 = vmatpush1.msra.mxu0 0.0
  %2517 = vmatprep.subr.mxu0 0.0
  %2518 = vmatpush1.msra.mxu0 0.0
  %2519 = vmatprep.subr.mxu0 0.0
  %2520 = vmatpush1.msra.mxu0 0.0
  %2521 = vmatprep.subr.mxu0 0.0
  %2522 = vmatpush1.msra.mxu0 0.0
  %2523 = vmatprep.subr.mxu0 0.0
  %2524 = vmatpush1.msra.mxu0 0.0
  %2525 = vmatprep.subr.mxu0 0.0
  %2526 = vmatpush1.msra.mxu0 0.0
  %2527 = vmatprep.subr.mxu0 0.0
  %2528 = vmatpush1.msra.mxu0 0.0
  %2529 = vmatprep.subr.mxu0 0.0
  %2530 = vmatpush1.msra.mxu0 0.0
  %2531 = vmatprep.subr.mxu0 0.0
  %2532 = vmatpush1.msra.mxu0 0.0
  %2533 = vmatprep.subr.mxu0 0.0
  %2534 = vmatpush1.msra.mxu0 0.0
  %2535 = vmatprep.mubr.f32.mxu0 0.0
  %2536 = vmatmul.mubr.f32.gmra.mrb[0].mxu0 %v2460
  %v2537 = vpop.f32.mrb[0].mxu0
  %v2538 = vadd.f32 %v2457, %v2537
  %v2539 = vpop.f32.mrb[0].mxu0
  %2540 = vmatprep.mubr.f32.mxu0 0.0
  %2541 = vmatmul.mubr.f32.gmra.mrb[0].mxu0 %v2463
  %v2542 = vpop.f32.mrb[0].mxu0
  %v2543 = vadd.f32 %v2457, %v2542
  %v2544 = vpop.f32.mrb[0].mxu0
  %2545 = vmatprep.mubr.f32.mxu0 0.0
  %2546 = vmatmul.mubr.f32.gmra.mrb[0].mxu0 %v2466
  %v2547 = vpop.f32.mrb[0].mxu0
  %v2548 = vadd.f32 %v2457, %v2547
  %v2549 = vpop.f32.mrb[0].mxu0
  %2550 = vmatprep.mubr.f32.mxu0 0.0
  %2551 = vmatmul.mubr.f32.gmra.mrb[0].mxu0 %v2469
  %v2552 = vpop.f32.mrb[0].mxu0
  %v2553 = vadd.f32 %v2457, %v2552
  %v2554 = vpop.f32.mrb[0].mxu0
  %2555 = vdwg.mxu0
  %vm2556 = vcmask 23552
  %v2557 = vsel %vm2556, %v2538, -inf
  %2558 = vmax.xlane.f32.xlu0 %v2557
  %v2559 = vpop.xlane.xlu0 %2558
  %v2560 = vsel %vm2556, %v2543, -inf
  %2561 = vmax.xlane.f32.xlu0 %v2560
  %v2562 = vpop.xlane.xlu0 %2561
  %v2563 = vsel %vm2556, %v2548, -inf
  %2564 = vmax.xlane.f32.xlu0 %v2563
  %v2565 = vpop.xlane.xlu0 %2564
  %v2566 = vsel %vm2556, %v2553, -inf
  %2567 = vmax.xlane.f32.xlu0 %v2566
  %v2568 = vpop.xlane.xlu0 %2567
  %v2569 = vsub.f32 %v2538, %v2559
  %v2570 = vsub.f32 %v2543, %v2562
  %v2571 = vsub.f32 %v2548, %v2565
  %v2572 = vsub.f32 %v2553, %v2568
  %v2573 = vmul.f32 %v2569, 1.442695
  %v2574 = vpow.pop %v2573
  %v2575 = vmul.f32 %v2570, 1.442695
  %v2576 = vpow.pop %v2575
  %v2577 = vmul.f32 %v2571, 1.442695
  %v2578 = vpow.pop %v2577
  %v2579 = vmul.f32 %v2572, 1.442695
  %v2580 = vpow.pop %v2579
  %v2581 = vsel %vm2556, %v2574, 0.0
  %2582 = vadd.xlane.f32.xlu0 %v2581
  %v2583 = vpop.xlane.xlu0 %2582
  %v2584 = vsel %vm2556, %v2576, 0.0
  %2585 = vadd.xlane.f32.xlu0 %v2584
  %v2586 = vpop.xlane.xlu0 %2585
  %v2587 = vsel %vm2556, %v2578, 0.0
  %2588 = vadd.xlane.f32.xlu0 %v2587
  %v2589 = vpop.xlane.xlu0 %2588
  %v2590 = vsel %vm2556, %v2580, 0.0
  %2591 = vadd.xlane.f32.xlu0 %v2590
  %v2592 = vpop.xlane.xlu0 %2591
  %v2593 = vlog2.pop %v2583
  %v2594 = vmul.f32 %v2593, 0.6931472
  %v2595 = vlog2.pop %v2586
  %v2596 = vmul.f32 %v2595, 0.6931472
  %v2597 = vlog2.pop %v2589
  %v2598 = vmul.f32 %v2597, 0.6931472
  %v2599 = vlog2.pop %v2592
  %v2600 = vmul.f32 %v2599, 0.6931472
  %v2601 = vsub.f32 %v2569, %v2594
  %v2602 = vsub.f32 %v2570, %v2596
  %v2603 = vsub.f32 %v2571, %v2598
  %v2604 = vsub.f32 %v2572, %v2600
  %2605 = vst.msk [vmem:[%s10] sm:$0xff] %vm2556, %v2601
  %2606 = vst.msk [vmem:[%s10 + $0x8] sm:$0xff] %vm2556, %v2602
  %2607 = vst.msk [vmem:[%s10 + $0x10] sm:$0xff] %vm2556, %v2603
  %2608 = vst.msk [vmem:[%s10 + $0x18] sm:$0xff] %vm2556, %v2604
  // Predicated region
  $region42: #{tpu_custom_call.1} parent=0 // pred_check
    _
  $region43: #{tpu_custom_call.1} parent=0 // pred_check_branch
    %2610 = sbr.rel (0) target = $region45
  $region44: #{tpu_custom_call.1} parent=0 // pred_region
    _
  $region45: #{tpu_custom_call.1} parent=0 // pred_fallthru
    _
  // Predicated region
  $region46: #{tpu_custom_call.1} parent=0 // pred_check
    _
  $region47: #{tpu_custom_call.1} parent=0 // pred_check_branch
    %2612 = sbr.rel (0) target = $region49
  $region48: #{tpu_custom_call.1} parent=0 // pred_region
    _
  $region49: #{tpu_custom_call.1} parent=0 // pred_fallthru
    _

</llo_original>
